<compile_context>
chip_gen: v5e
topology: v5e:2x2
jax: 0.10.0
libtpu: 0.0.40
codegen_flags: <defaults>
</compile_context>

<pallas_src>
import math

import jax
import jax.numpy as jnp
import numpy as np
from jax import lax
from jax.experimental import pallas as pl
from jax.experimental.pallas import tpu as pltpu

# ----------------------- scaled-down BERT config ---------------------------
VOCAB = 100
VOCAB_PAD = 128          # vocab padded to one lane tile (one-hot gather matmul)
MAX_POS = 32
TYPE_VOCAB = 2
HIDDEN = 32
N_HEADS = 2
HEAD_DIM = HIDDEN // N_HEADS
N_LAYERS = 2
FFN = 64
NUM_TAGS = 5
TAG_PAD = 128            # tag axis padded to one lane tile
NEG = -1e9
LN_EPS = 1e-12
ATTN_SCALE = 1.0 / math.sqrt(HEAD_DIM)


# --------------------------- in-kernel helpers -------------------------------
def _ln(x, g, b):
    mu = jnp.mean(x, axis=-1, keepdims=True)
    var = jnp.mean(jnp.square(x - mu), axis=-1, keepdims=True)
    return (x - mu) * lax.rsqrt(var + LN_EPS) * g + b


def _mm_bf16(a, w_bf16):
    # bf16 operands on the MXU, f32 accumulation; elementwise math stays f32
    # (v5e-safe: no bf16 on VPU/EUP there).
    return jnp.dot(a.astype(jnp.bfloat16), w_bf16,
                   preferred_element_type=jnp.float32)


# --------------- single fused kernel: embeddings + BERT + head + CRF ---------
def _fused_kernel(meta_ref, maskf_ref, wemb_ref, pemb_ref, temb_ref,
                  elng_ref, elnb_ref,
                  wqkv_ref, bqkv_ref, wo_ref, bo_ref,
                  ln1g_ref, ln1b_ref, w1_ref, b1_ref, w2_ref, b2_ref,
                  ln2g_ref, ln2b_ref,
                  wh_ref, bh_ref, st_ref, en_ref, tr_ref, trexp_ref,
                  loss_ref, em_ref):
    B, L = maskf_ref.shape
    BL = B * L
    T = TAG_PAD
    D = HEAD_DIM

    # ---- packed per-token integers:  (BL, 8) int32 --------------------------
    meta = meta_ref[...]
    ids = meta[:, 0:1]                                  # word ids
    ttid = meta[:, 1:2].astype(jnp.float32)             # token type ids (0/1)
    tag = meta[:, 2:3]                                   # labels
    tagp = meta[:, 3:4]                                  # labels shifted (t-1)
    mrow = meta[:, 4:5].astype(jnp.float32)              # attention mask
    ilast = meta[:, 5:6].astype(jnp.float32)              # last valid step
    it0 = meta[:, 6:7].astype(jnp.float32)               # t == 0 indicator

    # ---- embeddings: one-hot gather on the MXU + embedding LayerNorm --------
    oh_id = (lax.broadcasted_iota(jnp.int32, (BL, VOCAB_PAD), 1)
             == ids).astype(jnp.float32)
    x = jnp.dot(oh_id, wemb_ref[...], preferred_element_type=jnp.float32)  # (BL,H)
    pos = pemb_ref[0:L, :]                                                 # (L,H)
    x = (x.reshape(B, L, HIDDEN) + pos[None, :, :]).reshape(BL, HIDDEN)
    # TODO(synk): token-type via linear interpolation is exact only for TYPE_VOCAB == 2.
    t0 = temb_ref[0:1, :]
    t1 = temb_ref[1:2, :]
    x = x + t0 + ttid * (t1 - t0)
    x = _ln(x, elng_ref[...], elnb_ref[...])

    # additive attention mask — broadcast ONCE, reused across layers & heads
    maskf = maskf_ref[...]                                                 # (B,L)
    am_b = jnp.broadcast_to(((1.0 - maskf) * -10000.0)[:, None, :], (B, L, L))

    # ------------------------------ encoder layers ---------------------------
    for layer in range(N_LAYERS):                     # static loop (grid=(1,))
        h0 = x                                        # (BL, H)
        attn = bo_ref[layer]                          # (1, H), broadcasts
        for h in range(N_HEADS):                      # per-head stacked weights
            base = (layer * N_HEADS + h) * 3
            q = _mm_bf16(h0, wqkv_ref[base + 0]) + bqkv_ref[base + 0]
            k = _mm_bf16(h0, wqkv_ref[base + 1]) + bqkv_ref[base + 1]
            v = _mm_bf16(h0, wqkv_ref[base + 2]) + bqkv_ref[base + 2]
            q = q.reshape(B, L, D)
            k = k.reshape(B, L, D)
            v = v.reshape(B, L, D)
            s = jnp.einsum('bqd,bkd->bqk',
                           q.astype(jnp.bfloat16), k.astype(jnp.bfloat16),
                           preferred_element_type=jnp.float32) * ATTN_SCALE + am_b
            m = jnp.max(s, axis=2, keepdims=True)
            p = jnp.exp(s - m)
            p = p / jnp.sum(p, axis=2, keepdims=True)          # exact softmax
            ctx = jnp.einsum('bqk,bkd->bqd',
                             p.astype(jnp.bfloat16), v.astype(jnp.bfloat16),
                             preferred_element_type=jnp.float32)
            attn = attn + _mm_bf16(ctx.reshape(BL, D), wo_ref[layer * N_HEADS + h])
        h1 = _ln(h0 + attn, ln1g_ref[layer], ln1b_ref[layer])
        # TODO(synk): HF BERT uses exact erf-GELU; tanh-approximate GELU is used here.
        ff = jax.nn.gelu(_mm_bf16(h1, w1_ref[layer]) + b1_ref[layer],
                         approximate=True)
        x = _ln(h1 + _mm_bf16(ff, w2_ref[layer]) + b2_ref[layer],
                ln2g_ref[layer], ln2b_ref[layer])

    # --------------------------- emission head (bf16 MXU) --------------------
    em = _mm_bf16(x, wh_ref[...]) + bh_ref[...]        # (BL, T); padded lanes ~= -1e9
    em3 = em.reshape(B, L, T)
    em_ref[...] = em3

    # --------------------------------- CRF -----------------------------------
    lane = lax.broadcasted_iota(jnp.int32, (BL, T), 1)
    oh_cur = (lane == tag).astype(jnp.float32)
    oh_prev = (lane == tagp).astype(jnp.float32)

    def tot(a):                                        # full reduce -> (1, 1)
        return jnp.sum(jnp.sum(a, axis=1, keepdims=True), axis=0, keepdims=True)

    # numerator (torchcrf): t=0 emission unconditional (requires mask[:,0]==1),
    # t>=1 terms weighted by the mask; CRF matmuls stay f32 for numerics.
    w_em = it0 + (1.0 - it0) * mrow
    w_tr = (1.0 - it0) * mrow
    tr_rows = jnp.dot(oh_prev, tr_ref[...], preferred_element_type=jnp.float32)
    numer = (tot(oh_cur * em * w_em)
             + tot(oh_cur * tr_rows * w_tr)
             + tot(oh_cur * it0 * st_ref[...])
             + tot(oh_cur * ilast * en_ref[...]))

    # denominator: forward algorithm, batched over B, static unroll over time.
    trexp = trexp_ref[...]                             # exp(transitions), precomputed
    score = st_ref[...] + em3[:, 0:1, :].reshape(B, T)
    for t in range(1, L):
        c = jnp.max(score, axis=1, keepdims=True)
        pexp = jnp.exp(score - c)
        qsum = jnp.dot(pexp, trexp, preferred_element_type=jnp.float32)
        # clamp so padded tag lanes give a large-negative value, never -inf
        nxt = c + jnp.log(jnp.maximum(qsum, 1e-30)) + em3[:, t:t + 1, :].reshape(B, T)
        mcol = maskf[:, t:t + 1]
        score = jnp.where(mcol > 0.5, nxt, score)
    score = score + en_ref[...]
    c2 = jnp.max(score, axis=1, keepdims=True)
    denom = c2 + jnp.log(jnp.sum(jnp.exp(score - c2), axis=1, keepdims=True))  # (B,1)

    # loss = -sum_b llh_b = sum_b denom_b - numer   (finished in-kernel, (1,1) out)
    loss_ref[...] = jnp.sum(denom, axis=0, keepdims=True) - numer


def _fused_call(pp, meta, maskf):
    B, L = maskf.shape

    def fs(a):
        return pl.BlockSpec(a.shape, lambda i, n=a.ndim: (0,) * n)

    args = (meta, maskf, pp["wemb_pad"], pp["pos_emb"], pp["type_emb"],
            pp["emb_ln_g"], pp["emb_ln_b"],
            pp["wqkv_h"], pp["bqkv_h"], pp["wo_h"], pp["bo"],
            pp["ln1_g"], pp["ln1_b"], pp["w1"], pp["b1"], pp["w2"], pp["b2"],
            pp["ln2_g"], pp["ln2_b"],
            pp["wh_pad"], pp["bh_pad"],
            pp["crf_st"], pp["crf_en"], pp["crf_tr"], pp["crf_tr_exp"])

    return pl.pallas_call(
        _fused_kernel,
        out_shape=(jax.ShapeDtypeStruct((1, 1), jnp.float32),
                   jax.ShapeDtypeStruct((B, L, TAG_PAD), jnp.float32)),
        grid=(1,),
        in_specs=[fs(a) for a in args],
        out_specs=(pl.BlockSpec((1, 1), lambda i: (0, 0)),
                   pl.BlockSpec((B, L, TAG_PAD), lambda i: (0, 0, 0))),
        compiler_params=pltpu.CompilerParams(
            dimension_semantics=("arbitrary",)),
    )(*args)


# ------------------------------ JAX glue -------------------------------------
def forward(pp, input_ids, attention_mask, token_type_ids, labels):
    B, L = input_ids.shape
    maskf = attention_mask.astype(jnp.float32)
    # pack every per-token integer into ONE (BL, 8) int32 input
    mask_next = jnp.concatenate(
        [attention_mask[:, 1:], jnp.zeros((B, 1), attention_mask.dtype)], axis=1)
    is_last = attention_mask * (1 - mask_next)
    is_t0 = jnp.zeros((B, L), jnp.int32).at[:, 0].set(1)
    labels_prev = jnp.concatenate([labels[:, :1], labels[:, :-1]], axis=1)
    meta = jnp.stack(
        [input_ids, token_type_ids, labels, labels_prev,
         attention_mask, is_last, is_t0, jnp.zeros_like(input_ids)],
        axis=-1).reshape(B * L, 8).astype(jnp.int32)

    loss_arr, em_pad = _fused_call(pp, meta, maskf)
    loss = loss_arr[0, 0]                  # torchcrf reduction='sum'; model returns -llh
    return loss, em_pad[:, :, :NUM_TAGS]


# ---------------------- deterministic parameter init ------------------------
def init_params(key):
    cnt = [0]

    def nxt():
        cnt[0] += 1
        return jax.random.fold_in(key, cnt[0])

    def nrm(shape, scale=0.02):
        return scale * jax.random.normal(nxt(), shape, dtype=jnp.float32)

    def uni(shape):
        return jax.random.uniform(nxt(), shape, jnp.float32, -0.1, 0.1)

    p = {
        "word_emb": nrm((VOCAB, HIDDEN)),
        "pos_emb": nrm((MAX_POS, HIDDEN)),
        "type_emb": nrm((TYPE_VOCAB, HIDDEN)),
        "emb_ln_g": jnp.ones((HIDDEN,), jnp.float32),
        "emb_ln_b": jnp.zeros((HIDDEN,), jnp.float32),
        "layers": [],
        "head_w": nrm((HIDDEN, NUM_TAGS)),
        "head_b": jnp.zeros((NUM_TAGS,), jnp.float32),
        "crf_start": uni((NUM_TAGS,)),
        "crf_end": uni((NUM_TAGS,)),
        "crf_trans": uni((NUM_TAGS, NUM_TAGS)),
    }
    for _ in range(N_LAYERS):
        p["layers"].append(dict(
            wq=nrm((HIDDEN, HIDDEN)), bq=jnp.zeros((HIDDEN,), jnp.float32),
            wk=nrm((HIDDEN, HIDDEN)), bk=jnp.zeros((HIDDEN,), jnp.float32),
            wv=nrm((HIDDEN, HIDDEN)), bv=jnp.zeros((HIDDEN,), jnp.float32),
            wo=nrm((HIDDEN, HIDDEN)), bo=jnp.zeros((HIDDEN,), jnp.float32),
            ln1_g=jnp.ones((HIDDEN,), jnp.float32), ln1_b=jnp.zeros((HIDDEN,), jnp.float32),
            w1=nrm((HIDDEN, FFN)), b1=jnp.zeros((FFN,), jnp.float32),
            w2=nrm((FFN, HIDDEN)), b2=jnp.zeros((HIDDEN,), jnp.float32),
            ln2_g=jnp.ones((HIDDEN,), jnp.float32), ln2_b=jnp.zeros((HIDDEN,), jnp.float32),
        ))
    return p


def prepare_params(p):
    """One-time preprocessing: per-head weight stacking (leading-dim indexed,
    no lane-offset slices in-kernel), bf16 cast of MXU operands, NEG-padded
    CRF / head constants, vocab padded to 128, and exp(transitions)."""
    Ls = p["layers"]
    D = HEAD_DIM

    wqkv_h, bqkv_h, wo_h = [], [], []
    for lp in Ls:
        for h in range(N_HEADS):
            for w, b in ((lp["wq"], lp["bq"]), (lp["wk"], lp["bk"]),
                         (lp["wv"], lp["bv"])):
                wqkv_h.append(w[:, h * D:(h + 1) * D])
                bqkv_h.append(b[None, h * D:(h + 1) * D])
            wo_h.append(lp["wo"][h * D:(h + 1) * D, :])
    wqkv_h = jnp.stack(wqkv_h).astype(jnp.bfloat16)        # (NL*3*NH, H, D)
    bqkv_h = jnp.stack(bqkv_h).astype(jnp.float32)         # (NL*3*NH, 1, D)
    wo_h = jnp.stack(wo_h).astype(jnp.bfloat16)            # (NL*NH, D, H)

    stack_w = lambda n: jnp.stack([lp[n] for lp in Ls]).astype(jnp.bfloat16)
    stack_v = lambda n: jnp.stack([lp[n][None, :] for lp in Ls]).astype(jnp.float32)

    wemb_pad = jnp.zeros((VOCAB_PAD, HIDDEN), jnp.float32).at[:VOCAB].set(p["word_emb"])
    wh = (jnp.zeros((HIDDEN, TAG_PAD), jnp.float32)
          .at[:, :NUM_TAGS].set(p["head_w"]).astype(jnp.bfloat16))
    bh = jnp.full((1, TAG_PAD), NEG, jnp.float32).at[0, :NUM_TAGS].set(p["head_b"])
    st = jnp.full((1, TAG_PAD), NEG, jnp.float32).at[0, :NUM_TAGS].set(p["crf_start"])
    en = jnp.full((1, TAG_PAD), NEG, jnp.float32).at[0, :NUM_TAGS].set(p["crf_end"])
    tr = jnp.full((TAG_PAD, TAG_PAD), NEG, jnp.float32).at[:NUM_TAGS, :NUM_TAGS].set(p["crf_trans"])

    return dict(
        wemb_pad=wemb_pad, pos_emb=p["pos_emb"], type_emb=p["type_emb"],
        emb_ln_g=p["emb_ln_g"][None, :], emb_ln_b=p["emb_ln_b"][None, :],
        wqkv_h=wqkv_h, bqkv_h=bqkv_h, wo_h=wo_h, bo=stack_v("bo"),
        ln1_g=stack_v("ln1_g"), ln1_b=stack_v("ln1_b"),
        w1=stack_w("w1"), b1=stack_v("b1"),
        w2=stack_w("w2"), b2=stack_v("b2"),
        ln2_g=stack_v("ln2_g"), ln2_b=stack_v("ln2_b"),
        wh_pad=wh, bh_pad=bh,
        crf_st=st, crf_en=en, crf_tr=tr, crf_tr_exp=jnp.exp(tr),
    )


# ------------------- pure-JAX CRF reference (torchcrf semantics) ------------
def crf_llh_ref(emissions, tags, mask, start, end, trans):
    B, L, _ = emissions.shape
    maskf = mask.astype(jnp.float32)
    ar = jnp.arange(B)
    num = start[tags[:, 0]] + emissions[ar, 0, tags[:, 0]]
    for t in range(1, L):
        step = trans[tags[:, t - 1], tags[:, t]] + emissions[ar, t, tags[:, t]]
        num = num + step * maskf[:, t]
    seq_len = mask.astype(jnp.int32).sum(axis=1)
    num = num + end[tags[ar, seq_len - 1]]
    alpha = start[None, :] + emissions[:, 0]
    for t in range(1, L):
        bcast = alpha[:, :, None] + trans[None, :, :] + emissions[:, t][:, None, :]
        nxt = jax.scipy.special.logsumexp(bcast, axis=1)
        alpha = jnp.where(maskf[:, t][:, None] > 0, nxt, alpha)
    alpha = alpha + end[None, :]
    return num - jax.scipy.special.logsumexp(alpha, axis=1)


# --------------------------------- main --------------------------------------
if __name__ == "__main__":
    key = jax.random.PRNGKey(0)
    params = init_params(key)
    pp = prepare_params(params)            # all padding / stacking hoisted out of forward

    B, L = 2, 8
    kid, klab = jax.random.split(jax.random.fold_in(key, 9999), 2)
    input_ids = jax.random.randint(kid, (B, L), 0, VOCAB, dtype=jnp.int32)
    token_type_ids = jnp.zeros((B, L), jnp.int32)
    lengths = jnp.array([L, 5], jnp.int32)                 # mask[:,0]==1 (torchcrf requirement)
    attention_mask = (jnp.arange(L)[None, :] < lengths[:, None]).astype(jnp.int32)
    labels = jax.random.randint(klab, (B, L), 0, NUM_TAGS, dtype=jnp.int32)

    loss, emissions = jax.jit(forward)(pp, input_ids, attention_mask,
                                       token_type_ids, labels)
    loss = jax.block_until_ready(loss)

    # sanity check the in-kernel CRF against a pure-JAX reference (same emissions)
    ref = -jnp.sum(crf_llh_ref(emissions, labels, attention_mask,
                               params["crf_start"], params["crf_end"],
                               params["crf_trans"]))
    if np.allclose(np.asarray(loss), np.asarray(ref), rtol=1e-3, atol=1e-3):
        print("KERNEL_OK")
    else:
        print("MISMATCH", float(loss), float(ref))
</pallas_src>

<mosaic_0001>
module attributes {stable_mosaic.version = 11 : i64} {
  func.func @_fused_kernel(%arg0: i32, %arg1: memref<16x8xi32, #tpu.memory_space<vmem>>, %arg2: memref<2x8xf32, #tpu.memory_space<vmem>>, %arg3: memref<128x32xf32, #tpu.memory_space<vmem>>, %arg4: memref<32x32xf32, #tpu.memory_space<vmem>>, %arg5: memref<2x32xf32, #tpu.memory_space<vmem>>, %arg6: memref<1x32xf32, #tpu.memory_space<vmem>>, %arg7: memref<1x32xf32, #tpu.memory_space<vmem>>, %arg8: memref<12x32x16xbf16, #tpu.memory_space<vmem>>, %arg9: memref<12x1x16xf32, #tpu.memory_space<vmem>>, %arg10: memref<4x16x32xbf16, #tpu.memory_space<vmem>>, %arg11: memref<2x1x32xf32, #tpu.memory_space<vmem>>, %arg12: memref<2x1x32xf32, #tpu.memory_space<vmem>>, %arg13: memref<2x1x32xf32, #tpu.memory_space<vmem>>, %arg14: memref<2x32x64xbf16, #tpu.memory_space<vmem>>, %arg15: memref<2x1x64xf32, #tpu.memory_space<vmem>>, %arg16: memref<2x64x32xbf16, #tpu.memory_space<vmem>>, %arg17: memref<2x1x32xf32, #tpu.memory_space<vmem>>, %arg18: memref<2x1x32xf32, #tpu.memory_space<vmem>>, %arg19: memref<2x1x32xf32, #tpu.memory_space<vmem>>, %arg20: memref<32x128xbf16, #tpu.memory_space<vmem>>, %arg21: memref<1x128xf32, #tpu.memory_space<vmem>>, %arg22: memref<1x128xf32, #tpu.memory_space<vmem>>, %arg23: memref<1x128xf32, #tpu.memory_space<vmem>>, %arg24: memref<128x128xf32, #tpu.memory_space<vmem>>, %arg25: memref<128x128xf32, #tpu.memory_space<vmem>>, %arg26: memref<1x1xf32, #tpu.memory_space<vmem>>, %arg27: memref<2x8x128xf32, #tpu.memory_space<vmem>>) attributes {dimension_semantics = [#tpu.dimension_semantics<arbitrary>], iteration_bounds = array<i64: 1>, scalar_prefetch = 0 : i64, scratch_operands = 0 : i64, tpu.core_type = #tpu.core_type<tc>, window_params = [{pipeline_mode = #tpu.pipeline_mode<synchronous>, transform_indices = @transform_0, window_bounds = array<i64: 16, 8>}, {pipeline_mode = #tpu.pipeline_mode<synchronous>, transform_indices = @transform_1, window_bounds = array<i64: 2, 8>}, {pipeline_mode = #tpu.pipeline_mode<synchronous>, transform_indices = @transform_2, window_bounds = array<i64: 128, 32>}, {pipeline_mode = #tpu.pipeline_mode<synchronous>, transform_indices = @transform_3, window_bounds = array<i64: 32, 32>}, {pipeline_mode = #tpu.pipeline_mode<synchronous>, transform_indices = @transform_4, window_bounds = array<i64: 2, 32>}, {pipeline_mode = #tpu.pipeline_mode<synchronous>, transform_indices = @transform_5, window_bounds = array<i64: 1, 32>}, {pipeline_mode = #tpu.pipeline_mode<synchronous>, transform_indices = @transform_6, window_bounds = array<i64: 1, 32>}, {pipeline_mode = #tpu.pipeline_mode<synchronous>, transform_indices = @transform_7, window_bounds = array<i64: 12, 32, 16>}, {pipeline_mode = #tpu.pipeline_mode<synchronous>, transform_indices = @transform_8, window_bounds = array<i64: 12, 1, 16>}, {pipeline_mode = #tpu.pipeline_mode<synchronous>, transform_indices = @transform_9, window_bounds = array<i64: 4, 16, 32>}, {pipeline_mode = #tpu.pipeline_mode<synchronous>, transform_indices = @transform_10, window_bounds = array<i64: 2, 1, 32>}, {pipeline_mode = #tpu.pipeline_mode<synchronous>, transform_indices = @transform_11, window_bounds = array<i64: 2, 1, 32>}, {pipeline_mode = #tpu.pipeline_mode<synchronous>, transform_indices = @transform_12, window_bounds = array<i64: 2, 1, 32>}, {pipeline_mode = #tpu.pipeline_mode<synchronous>, transform_indices = @transform_13, window_bounds = array<i64: 2, 32, 64>}, {pipeline_mode = #tpu.pipeline_mode<synchronous>, transform_indices = @transform_14, window_bounds = array<i64: 2, 1, 64>}, {pipeline_mode = #tpu.pipeline_mode<synchronous>, transform_indices = @transform_15, window_bounds = array<i64: 2, 64, 32>}, {pipeline_mode = #tpu.pipeline_mode<synchronous>, transform_indices = @transform_16, window_bounds = array<i64: 2, 1, 32>}, {pipeline_mode = #tpu.pipeline_mode<synchronous>, transform_indices = @transform_17, window_bounds = array<i64: 2, 1, 32>}, {pipeline_mode = #tpu.pipeline_mode<synchronous>, transform_indices = @transform_18, window_bounds = array<i64: 2, 1, 32>}, {pipeline_mode = #tpu.pipeline_mode<synchronous>, transform_indices = @transform_19, window_bounds = array<i64: 32, 128>}, {pipeline_mode = #tpu.pipeline_mode<synchronous>, transform_indices = @transform_20, window_bounds = array<i64: 1, 128>}, {pipeline_mode = #tpu.pipeline_mode<synchronous>, transform_indices = @transform_21, window_bounds = array<i64: 1, 128>}, {pipeline_mode = #tpu.pipeline_mode<synchronous>, transform_indices = @transform_22, window_bounds = array<i64: 1, 128>}, {pipeline_mode = #tpu.pipeline_mode<synchronous>, transform_indices = @transform_23, window_bounds = array<i64: 128, 128>}, {pipeline_mode = #tpu.pipeline_mode<synchronous>, transform_indices = @transform_24, window_bounds = array<i64: 128, 128>}, {pipeline_mode = #tpu.pipeline_mode<synchronous>, transform_indices = @transform_25, window_bounds = array<i64: 1, 1>}, {pipeline_mode = #tpu.pipeline_mode<synchronous>, transform_indices = @transform_26, window_bounds = array<i64: 2, 8, 128>}]} {
    %c0 = arith.constant 0 : index
    %c0_0 = arith.constant 0 : index
    %0 = vector.load %arg1[%c0, %c0_0] : memref<16x8xi32, #tpu.memory_space<vmem>>, vector<16x8xi32>
    %1 = vector.extract_strided_slice %0 {offsets = [0, 0], sizes = [16, 1], strides = [1, 1]} : vector<16x8xi32> to vector<16x1xi32>
    %2 = vector.extract_strided_slice %0 {offsets = [0, 1], sizes = [16, 1], strides = [1, 1]} : vector<16x8xi32> to vector<16x1xi32>
    %3 = arith.sitofp %2 : vector<16x1xi32> to vector<16x1xf32>
    %4 = vector.extract_strided_slice %0 {offsets = [0, 2], sizes = [16, 1], strides = [1, 1]} : vector<16x8xi32> to vector<16x1xi32>
    %5 = vector.extract_strided_slice %0 {offsets = [0, 3], sizes = [16, 1], strides = [1, 1]} : vector<16x8xi32> to vector<16x1xi32>
    %6 = vector.extract_strided_slice %0 {offsets = [0, 4], sizes = [16, 1], strides = [1, 1]} : vector<16x8xi32> to vector<16x1xi32>
    %7 = arith.sitofp %6 : vector<16x1xi32> to vector<16x1xf32>
    %8 = vector.extract_strided_slice %0 {offsets = [0, 5], sizes = [16, 1], strides = [1, 1]} : vector<16x8xi32> to vector<16x1xi32>
    %9 = arith.sitofp %8 : vector<16x1xi32> to vector<16x1xf32>
    %10 = vector.extract_strided_slice %0 {offsets = [0, 6], sizes = [16, 1], strides = [1, 1]} : vector<16x8xi32> to vector<16x1xi32>
    %11 = arith.sitofp %10 : vector<16x1xi32> to vector<16x1xf32>
    %12 = tpu.iota {dimensions = array<i32: 1>} : vector<16x128xi32>
    %13 = vector.broadcast %1 : vector<16x1xi32> to vector<16x128xi32>
    %14 = arith.cmpi eq, %12, %13 : vector<16x128xi32>
    %15 = arith.extui %14 : vector<16x128xi1> to vector<16x128xi32>
    %16 = arith.sitofp %15 : vector<16x128xi32> to vector<16x128xf32>
    %c0_1 = arith.constant 0 : index
    %c0_2 = arith.constant 0 : index
    %17 = vector.load %arg3[%c0_1, %c0_2] : memref<128x32xf32, #tpu.memory_space<vmem>>, vector<128x32xf32>
    %cst = arith.constant dense<0.000000e+00> : vector<16x32xf32>
    %18 = tpu.matmul %16, %17, %cst {dimension_numbers = #tpu.dot_dimension_numbers<[1], [0], [0], [1], [0, 0, 1, 1], [], []>} : vector<16x128xf32>, vector<128x32xf32>, vector<16x32xf32> -> vector<16x32xf32>
    %c0_3 = arith.constant 0 : index
    %c0_4 = arith.constant 0 : index
    %19 = vector.load %arg4[%c0_3, %c0_4] : memref<32x32xf32, #tpu.memory_space<vmem>>, vector<8x32xf32>
    %20 = vector.shape_cast %18 : vector<16x32xf32> to vector<2x8x32xf32>
    %21 = vector.shape_cast %19 : vector<8x32xf32> to vector<1x8x32xf32>
    %22 = vector.broadcast %21 : vector<1x8x32xf32> to vector<2x8x32xf32>
    %23 = arith.addf %20, %22 : vector<2x8x32xf32>
    %24 = vector.shape_cast %23 : vector<2x8x32xf32> to vector<16x32xf32>
    %c0_5 = arith.constant 0 : index
    %c0_6 = arith.constant 0 : index
    %25 = vector.load %arg5[%c0_5, %c0_6] : memref<2x32xf32, #tpu.memory_space<vmem>>, vector<1x32xf32>
    %c1 = arith.constant 1 : index
    %c0_7 = arith.constant 0 : index
    %26 = vector.load %arg5[%c1, %c0_7] : memref<2x32xf32, #tpu.memory_space<vmem>>, vector<1x32xf32>
    %27 = vector.broadcast %25 : vector<1x32xf32> to vector<16x32xf32>
    %28 = arith.addf %24, %27 : vector<16x32xf32>
    %29 = arith.subf %26, %25 : vector<1x32xf32>
    %30 = vector.broadcast %3 : vector<16x1xf32> to vector<16x32xf32>
    %31 = vector.broadcast %29 : vector<1x32xf32> to vector<16x32xf32>
    %32 = arith.mulf %30, %31 : vector<16x32xf32>
    %33 = arith.addf %28, %32 : vector<16x32xf32>
    %c0_8 = arith.constant 0 : index
    %c0_9 = arith.constant 0 : index
    %34 = vector.load %arg6[%c0_8, %c0_9] : memref<1x32xf32, #tpu.memory_space<vmem>>, vector<1x32xf32>
    %c0_10 = arith.constant 0 : index
    %c0_11 = arith.constant 0 : index
    %35 = vector.load %arg7[%c0_10, %c0_11] : memref<1x32xf32, #tpu.memory_space<vmem>>, vector<1x32xf32>
    %cst_12 = arith.constant dense<0.000000e+00> : vector<16xf32>
    %36 = vector.multi_reduction <add>, %33, %cst_12 [1] : vector<16x32xf32> to vector<16xf32>
    %37 = vector.shape_cast %36 : vector<16xf32> to vector<16x1xf32>
    %cst_13 = arith.constant 3.200000e+01 : f32
    %38 = vector.broadcast %cst_13 : f32 to vector<16x1xf32>
    %39 = arith.divf %37, %38 : vector<16x1xf32>
    %40 = vector.broadcast %39 : vector<16x1xf32> to vector<16x32xf32>
    %41 = arith.subf %33, %40 : vector<16x32xf32>
    %42 = arith.mulf %41, %41 : vector<16x32xf32>
    %cst_14 = arith.constant dense<0.000000e+00> : vector<16xf32>
    %43 = vector.multi_reduction <add>, %42, %cst_14 [1] : vector<16x32xf32> to vector<16xf32>
    %44 = vector.shape_cast %43 : vector<16xf32> to vector<16x1xf32>
    %cst_15 = arith.constant 3.200000e+01 : f32
    %45 = vector.broadcast %cst_15 : f32 to vector<16x1xf32>
    %46 = arith.divf %44, %45 : vector<16x1xf32>
    %47 = vector.broadcast %39 : vector<16x1xf32> to vector<16x32xf32>
    %48 = arith.subf %33, %47 : vector<16x32xf32>
    %cst_16 = arith.constant 9.99999996E-13 : f32
    %49 = vector.broadcast %cst_16 : f32 to vector<16x1xf32>
    %50 = arith.addf %46, %49 : vector<16x1xf32>
    %51 = math.rsqrt %50 : vector<16x1xf32>
    %52 = vector.broadcast %51 : vector<16x1xf32> to vector<16x32xf32>
    %53 = arith.mulf %48, %52 : vector<16x32xf32>
    %54 = vector.broadcast %34 : vector<1x32xf32> to vector<16x32xf32>
    %55 = arith.mulf %53, %54 : vector<16x32xf32>
    %56 = vector.broadcast %35 : vector<1x32xf32> to vector<16x32xf32>
    %57 = arith.addf %55, %56 : vector<16x32xf32>
    %c0_17 = arith.constant 0 : index
    %c0_18 = arith.constant 0 : index
    %58 = vector.load %arg2[%c0_17, %c0_18] : memref<2x8xf32, #tpu.memory_space<vmem>>, vector<2x8xf32>
    %cst_19 = arith.constant 1.000000e+00 : f32
    %59 = vector.broadcast %cst_19 : f32 to vector<2x8xf32>
    %60 = arith.subf %59, %58 : vector<2x8xf32>
    %cst_20 = arith.constant -1.000000e+04 : f32
    %61 = vector.broadcast %cst_20 : f32 to vector<2x8xf32>
    %62 = arith.mulf %60, %61 : vector<2x8xf32>
    %63 = vector.shape_cast %62 : vector<2x8xf32> to vector<2x1x8xf32>
    %64 = vector.shape_cast %63 : vector<2x1x8xf32> to vector<2x1x8xf32>
    %65 = vector.broadcast %64 : vector<2x1x8xf32> to vector<2x8x8xf32>
    %c0_21 = arith.constant 0 : index
    %c0_22 = arith.constant 0 : index
    %c0_23 = arith.constant 0 : index
    %66 = vector.load %arg11[%c0_21, %c0_22, %c0_23] : memref<2x1x32xf32, #tpu.memory_space<vmem>>, vector<1x1x32xf32>
    %67 = vector.shape_cast %66 : vector<1x1x32xf32> to vector<1x32xf32>
    %c0_24 = arith.constant 0 : index
    %c0_25 = arith.constant 0 : index
    %c0_26 = arith.constant 0 : index
    %68 = vector.load %arg8[%c0_24, %c0_25, %c0_26] : memref<12x32x16xbf16, #tpu.memory_space<vmem>>, vector<1x32x16xbf16>
    %69 = vector.shape_cast %68 : vector<1x32x16xbf16> to vector<32x16xbf16>
    %70 = arith.truncf %57 : vector<16x32xf32> to vector<16x32xbf16>
    %cst_27 = arith.constant dense<0.000000e+00> : vector<16x16xf32>
    %71 = tpu.matmul %70, %69, %cst_27 {dimension_numbers = #tpu.dot_dimension_numbers<[1], [0], [0], [1], [0, 0, 1, 1], [], []>} : vector<16x32xbf16>, vector<32x16xbf16>, vector<16x16xf32> -> vector<16x16xf32>
    %c0_28 = arith.constant 0 : index
    %c0_29 = arith.constant 0 : index
    %c0_30 = arith.constant 0 : index
    %72 = vector.load %arg9[%c0_28, %c0_29, %c0_30] : memref<12x1x16xf32, #tpu.memory_space<vmem>>, vector<1x1x16xf32>
    %73 = vector.shape_cast %72 : vector<1x1x16xf32> to vector<1x16xf32>
    %74 = vector.broadcast %73 : vector<1x16xf32> to vector<16x16xf32>
    %75 = arith.addf %71, %74 : vector<16x16xf32>
    %c1_31 = arith.constant 1 : index
    %c0_32 = arith.constant 0 : index
    %c0_33 = arith.constant 0 : index
    %76 = vector.load %arg8[%c1_31, %c0_32, %c0_33] : memref<12x32x16xbf16, #tpu.memory_space<vmem>>, vector<1x32x16xbf16>
    %77 = vector.shape_cast %76 : vector<1x32x16xbf16> to vector<32x16xbf16>
    %78 = arith.truncf %57 : vector<16x32xf32> to vector<16x32xbf16>
    %cst_34 = arith.constant dense<0.000000e+00> : vector<16x16xf32>
    %79 = tpu.matmul %78, %77, %cst_34 {dimension_numbers = #tpu.dot_dimension_numbers<[1], [0], [0], [1], [0, 0, 1, 1], [], []>} : vector<16x32xbf16>, vector<32x16xbf16>, vector<16x16xf32> -> vector<16x16xf32>
    %c1_35 = arith.constant 1 : index
    %c0_36 = arith.constant 0 : index
    %c0_37 = arith.constant 0 : index
    %80 = vector.load %arg9[%c1_35, %c0_36, %c0_37] : memref<12x1x16xf32, #tpu.memory_space<vmem>>, vector<1x1x16xf32>
    %81 = vector.shape_cast %80 : vector<1x1x16xf32> to vector<1x16xf32>
    %82 = vector.broadcast %81 : vector<1x16xf32> to vector<16x16xf32>
    %83 = arith.addf %79, %82 : vector<16x16xf32>
    %c2 = arith.constant 2 : index
    %c0_38 = arith.constant 0 : index
    %c0_39 = arith.constant 0 : index
    %84 = vector.load %arg8[%c2, %c0_38, %c0_39] : memref<12x32x16xbf16, #tpu.memory_space<vmem>>, vector<1x32x16xbf16>
    %85 = vector.shape_cast %84 : vector<1x32x16xbf16> to vector<32x16xbf16>
    %86 = arith.truncf %57 : vector<16x32xf32> to vector<16x32xbf16>
    %cst_40 = arith.constant dense<0.000000e+00> : vector<16x16xf32>
    %87 = tpu.matmul %86, %85, %cst_40 {dimension_numbers = #tpu.dot_dimension_numbers<[1], [0], [0], [1], [0, 0, 1, 1], [], []>} : vector<16x32xbf16>, vector<32x16xbf16>, vector<16x16xf32> -> vector<16x16xf32>
    %c2_41 = arith.constant 2 : index
    %c0_42 = arith.constant 0 : index
    %c0_43 = arith.constant 0 : index
    %88 = vector.load %arg9[%c2_41, %c0_42, %c0_43] : memref<12x1x16xf32, #tpu.memory_space<vmem>>, vector<1x1x16xf32>
    %89 = vector.shape_cast %88 : vector<1x1x16xf32> to vector<1x16xf32>
    %90 = vector.broadcast %89 : vector<1x16xf32> to vector<16x16xf32>
    %91 = arith.addf %87, %90 : vector<16x16xf32>
    %92 = vector.shape_cast %75 : vector<16x16xf32> to vector<2x8x16xf32>
    %93 = vector.shape_cast %83 : vector<16x16xf32> to vector<2x8x16xf32>
    %94 = vector.shape_cast %91 : vector<16x16xf32> to vector<2x8x16xf32>
    %95 = arith.truncf %92 : vector<2x8x16xf32> to vector<2x8x16xbf16>
    %96 = arith.truncf %93 : vector<2x8x16xf32> to vector<2x8x16xbf16>
    "tpu.trace_start"() <{level = 10 : i32, message = "bqd,bkd->bqk"}> : () -> ()
    %cst_44 = arith.constant dense<0.000000e+00> : vector<2x8x8xf32>
    %97 = tpu.matmul %95, %96, %cst_44 {dimension_numbers = #tpu.dot_dimension_numbers<[2], [2], [1], [1], [0, 0, 0, 1, 1, 1], [0], [0]>} : vector<2x8x16xbf16>, vector<2x8x16xbf16>, vector<2x8x8xf32> -> vector<2x8x8xf32>
    "tpu.trace_stop"() : () -> ()
    %cst_45 = arith.constant 2.500000e-01 : f32
    %98 = vector.broadcast %cst_45 : f32 to vector<2x8x8xf32>
    %99 = arith.mulf %97, %98 : vector<2x8x8xf32>
    %100 = arith.addf %99, %65 : vector<2x8x8xf32>
    %cst_46 = arith.constant dense<0xFF800000> : vector<2x8xf32>
    %101 = vector.multi_reduction <maximumf>, %100, %cst_46 [2] : vector<2x8x8xf32> to vector<2x8xf32>
    %102 = vector.shape_cast %101 : vector<2x8xf32> to vector<2x8x1xf32>
    %103 = vector.broadcast %102 : vector<2x8x1xf32> to vector<2x8x8xf32>
    %104 = arith.subf %100, %103 : vector<2x8x8xf32>
    %105 = math.exp %104 : vector<2x8x8xf32>
    %cst_47 = arith.constant dense<0.000000e+00> : vector<2x8xf32>
    %106 = vector.multi_reduction <add>, %105, %cst_47 [2] : vector<2x8x8xf32> to vector<2x8xf32>
    %107 = vector.shape_cast %106 : vector<2x8xf32> to vector<2x8x1xf32>
    %108 = vector.broadcast %107 : vector<2x8x1xf32> to vector<2x8x8xf32>
    %109 = arith.divf %105, %108 : vector<2x8x8xf32>
    %110 = arith.truncf %109 : vector<2x8x8xf32> to vector<2x8x8xbf16>
    %111 = arith.truncf %94 : vector<2x8x16xf32> to vector<2x8x16xbf16>
    "tpu.trace_start"() <{level = 10 : i32, message = "bqk,bkd->bqd"}> : () -> ()
    %cst_48 = arith.constant dense<0.000000e+00> : vector<2x8x16xf32>
    %112 = tpu.matmul %110, %111, %cst_48 {dimension_numbers = #tpu.dot_dimension_numbers<[2], [1], [1], [2], [0, 0, 0, 1, 1, 2], [0], [0]>} : vector<2x8x8xbf16>, vector<2x8x16xbf16>, vector<2x8x16xf32> -> vector<2x8x16xf32>
    "tpu.trace_stop"() : () -> ()
    %113 = vector.shape_cast %112 : vector<2x8x16xf32> to vector<16x16xf32>
    %c0_49 = arith.constant 0 : index
    %c0_50 = arith.constant 0 : index
    %c0_51 = arith.constant 0 : index
    %114 = vector.load %arg10[%c0_49, %c0_50, %c0_51] : memref<4x16x32xbf16, #tpu.memory_space<vmem>>, vector<1x16x32xbf16>
    %115 = vector.shape_cast %114 : vector<1x16x32xbf16> to vector<16x32xbf16>
    %116 = arith.truncf %113 : vector<16x16xf32> to vector<16x16xbf16>
    %cst_52 = arith.constant dense<0.000000e+00> : vector<16x32xf32>
    %117 = tpu.matmul %116, %115, %cst_52 {dimension_numbers = #tpu.dot_dimension_numbers<[1], [0], [0], [1], [0, 0, 1, 1], [], []>} : vector<16x16xbf16>, vector<16x32xbf16>, vector<16x32xf32> -> vector<16x32xf32>
    %118 = vector.broadcast %67 : vector<1x32xf32> to vector<16x32xf32>
    %119 = arith.addf %118, %117 : vector<16x32xf32>
    %c3 = arith.constant 3 : index
    %c0_53 = arith.constant 0 : index
    %c0_54 = arith.constant 0 : index
    %120 = vector.load %arg8[%c3, %c0_53, %c0_54] : memref<12x32x16xbf16, #tpu.memory_space<vmem>>, vector<1x32x16xbf16>
    %121 = vector.shape_cast %120 : vector<1x32x16xbf16> to vector<32x16xbf16>
    %122 = arith.truncf %57 : vector<16x32xf32> to vector<16x32xbf16>
    %cst_55 = arith.constant dense<0.000000e+00> : vector<16x16xf32>
    %123 = tpu.matmul %122, %121, %cst_55 {dimension_numbers = #tpu.dot_dimension_numbers<[1], [0], [0], [1], [0, 0, 1, 1], [], []>} : vector<16x32xbf16>, vector<32x16xbf16>, vector<16x16xf32> -> vector<16x16xf32>
    %c3_56 = arith.constant 3 : index
    %c0_57 = arith.constant 0 : index
    %c0_58 = arith.constant 0 : index
    %124 = vector.load %arg9[%c3_56, %c0_57, %c0_58] : memref<12x1x16xf32, #tpu.memory_space<vmem>>, vector<1x1x16xf32>
    %125 = vector.shape_cast %124 : vector<1x1x16xf32> to vector<1x16xf32>
    %126 = vector.broadcast %125 : vector<1x16xf32> to vector<16x16xf32>
    %127 = arith.addf %123, %126 : vector<16x16xf32>
    %c4 = arith.constant 4 : index
    %c0_59 = arith.constant 0 : index
    %c0_60 = arith.constant 0 : index
    %128 = vector.load %arg8[%c4, %c0_59, %c0_60] : memref<12x32x16xbf16, #tpu.memory_space<vmem>>, vector<1x32x16xbf16>
    %129 = vector.shape_cast %128 : vector<1x32x16xbf16> to vector<32x16xbf16>
    %130 = arith.truncf %57 : vector<16x32xf32> to vector<16x32xbf16>
    %cst_61 = arith.constant dense<0.000000e+00> : vector<16x16xf32>
    %131 = tpu.matmul %130, %129, %cst_61 {dimension_numbers = #tpu.dot_dimension_numbers<[1], [0], [0], [1], [0, 0, 1, 1], [], []>} : vector<16x32xbf16>, vector<32x16xbf16>, vector<16x16xf32> -> vector<16x16xf32>
    %c4_62 = arith.constant 4 : index
    %c0_63 = arith.constant 0 : index
    %c0_64 = arith.constant 0 : index
    %132 = vector.load %arg9[%c4_62, %c0_63, %c0_64] : memref<12x1x16xf32, #tpu.memory_space<vmem>>, vector<1x1x16xf32>
    %133 = vector.shape_cast %132 : vector<1x1x16xf32> to vector<1x16xf32>
    %134 = vector.broadcast %133 : vector<1x16xf32> to vector<16x16xf32>
    %135 = arith.addf %131, %134 : vector<16x16xf32>
    %c5 = arith.constant 5 : index
    %c0_65 = arith.constant 0 : index
    %c0_66 = arith.constant 0 : index
    %136 = vector.load %arg8[%c5, %c0_65, %c0_66] : memref<12x32x16xbf16, #tpu.memory_space<vmem>>, vector<1x32x16xbf16>
    %137 = vector.shape_cast %136 : vector<1x32x16xbf16> to vector<32x16xbf16>
    %138 = arith.truncf %57 : vector<16x32xf32> to vector<16x32xbf16>
    %cst_67 = arith.constant dense<0.000000e+00> : vector<16x16xf32>
    %139 = tpu.matmul %138, %137, %cst_67 {dimension_numbers = #tpu.dot_dimension_numbers<[1], [0], [0], [1], [0, 0, 1, 1], [], []>} : vector<16x32xbf16>, vector<32x16xbf16>, vector<16x16xf32> -> vector<16x16xf32>
    %c5_68 = arith.constant 5 : index
    %c0_69 = arith.constant 0 : index
    %c0_70 = arith.constant 0 : index
    %140 = vector.load %arg9[%c5_68, %c0_69, %c0_70] : memref<12x1x16xf32, #tpu.memory_space<vmem>>, vector<1x1x16xf32>
    %141 = vector.shape_cast %140 : vector<1x1x16xf32> to vector<1x16xf32>
    %142 = vector.broadcast %141 : vector<1x16xf32> to vector<16x16xf32>
    %143 = arith.addf %139, %142 : vector<16x16xf32>
    %144 = vector.shape_cast %127 : vector<16x16xf32> to vector<2x8x16xf32>
    %145 = vector.shape_cast %135 : vector<16x16xf32> to vector<2x8x16xf32>
    %146 = vector.shape_cast %143 : vector<16x16xf32> to vector<2x8x16xf32>
    %147 = arith.truncf %144 : vector<2x8x16xf32> to vector<2x8x16xbf16>
    %148 = arith.truncf %145 : vector<2x8x16xf32> to vector<2x8x16xbf16>
    "tpu.trace_start"() <{level = 10 : i32, message = "bqd,bkd->bqk"}> : () -> ()
    %cst_71 = arith.constant dense<0.000000e+00> : vector<2x8x8xf32>
    %149 = tpu.matmul %147, %148, %cst_71 {dimension_numbers = #tpu.dot_dimension_numbers<[2], [2], [1], [1], [0, 0, 0, 1, 1, 1], [0], [0]>} : vector<2x8x16xbf16>, vector<2x8x16xbf16>, vector<2x8x8xf32> -> vector<2x8x8xf32>
    "tpu.trace_stop"() : () -> ()
    %cst_72 = arith.constant 2.500000e-01 : f32
    %150 = vector.broadcast %cst_72 : f32 to vector<2x8x8xf32>
    %151 = arith.mulf %149, %150 : vector<2x8x8xf32>
    %152 = arith.addf %151, %65 : vector<2x8x8xf32>
    %cst_73 = arith.constant dense<0xFF800000> : vector<2x8xf32>
    %153 = vector.multi_reduction <maximumf>, %152, %cst_73 [2] : vector<2x8x8xf32> to vector<2x8xf32>
    %154 = vector.shape_cast %153 : vector<2x8xf32> to vector<2x8x1xf32>
    %155 = vector.broadcast %154 : vector<2x8x1xf32> to vector<2x8x8xf32>
    %156 = arith.subf %152, %155 : vector<2x8x8xf32>
    %157 = math.exp %156 : vector<2x8x8xf32>
    %cst_74 = arith.constant dense<0.000000e+00> : vector<2x8xf32>
    %158 = vector.multi_reduction <add>, %157, %cst_74 [2] : vector<2x8x8xf32> to vector<2x8xf32>
    %159 = vector.shape_cast %158 : vector<2x8xf32> to vector<2x8x1xf32>
    %160 = vector.broadcast %159 : vector<2x8x1xf32> to vector<2x8x8xf32>
    %161 = arith.divf %157, %160 : vector<2x8x8xf32>
    %162 = arith.truncf %161 : vector<2x8x8xf32> to vector<2x8x8xbf16>
    %163 = arith.truncf %146 : vector<2x8x16xf32> to vector<2x8x16xbf16>
    "tpu.trace_start"() <{level = 10 : i32, message = "bqk,bkd->bqd"}> : () -> ()
    %cst_75 = arith.constant dense<0.000000e+00> : vector<2x8x16xf32>
    %164 = tpu.matmul %162, %163, %cst_75 {dimension_numbers = #tpu.dot_dimension_numbers<[2], [1], [1], [2], [0, 0, 0, 1, 1, 2], [0], [0]>} : vector<2x8x8xbf16>, vector<2x8x16xbf16>, vector<2x8x16xf32> -> vector<2x8x16xf32>
    "tpu.trace_stop"() : () -> ()
    %165 = vector.shape_cast %164 : vector<2x8x16xf32> to vector<16x16xf32>
    %c1_76 = arith.constant 1 : index
    %c0_77 = arith.constant 0 : index
    %c0_78 = arith.constant 0 : index
    %166 = vector.load %arg10[%c1_76, %c0_77, %c0_78] : memref<4x16x32xbf16, #tpu.memory_space<vmem>>, vector<1x16x32xbf16>
    %167 = vector.shape_cast %166 : vector<1x16x32xbf16> to vector<16x32xbf16>
    %168 = arith.truncf %165 : vector<16x16xf32> to vector<16x16xbf16>
    %cst_79 = arith.constant dense<0.000000e+00> : vector<16x32xf32>
    %169 = tpu.matmul %168, %167, %cst_79 {dimension_numbers = #tpu.dot_dimension_numbers<[1], [0], [0], [1], [0, 0, 1, 1], [], []>} : vector<16x16xbf16>, vector<16x32xbf16>, vector<16x32xf32> -> vector<16x32xf32>
    %170 = arith.addf %119, %169 : vector<16x32xf32>
    %171 = arith.addf %57, %170 : vector<16x32xf32>
    %c0_80 = arith.constant 0 : index
    %c0_81 = arith.constant 0 : index
    %c0_82 = arith.constant 0 : index
    %172 = vector.load %arg12[%c0_80, %c0_81, %c0_82] : memref<2x1x32xf32, #tpu.memory_space<vmem>>, vector<1x1x32xf32>
    %173 = vector.shape_cast %172 : vector<1x1x32xf32> to vector<1x32xf32>
    %c0_83 = arith.constant 0 : index
    %c0_84 = arith.constant 0 : index
    %c0_85 = arith.constant 0 : index
    %174 = vector.load %arg13[%c0_83, %c0_84, %c0_85] : memref<2x1x32xf32, #tpu.memory_space<vmem>>, vector<1x1x32xf32>
    %175 = vector.shape_cast %174 : vector<1x1x32xf32> to vector<1x32xf32>
    %cst_86 = arith.constant dense<0.000000e+00> : vector<16xf32>
    %176 = vector.multi_reduction <add>, %171, %cst_86 [1] : vector<16x32xf32> to vector<16xf32>
    %177 = vector.shape_cast %176 : vector<16xf32> to vector<16x1xf32>
    %cst_87 = arith.constant 3.200000e+01 : f32
    %178 = vector.broadcast %cst_87 : f32 to vector<16x1xf32>
    %179 = arith.divf %177, %178 : vector<16x1xf32>
    %180 = vector.broadcast %179 : vector<16x1xf32> to vector<16x32xf32>
    %181 = arith.subf %171, %180 : vector<16x32xf32>
    %182 = arith.mulf %181, %181 : vector<16x32xf32>
    %cst_88 = arith.constant dense<0.000000e+00> : vector<16xf32>
    %183 = vector.multi_reduction <add>, %182, %cst_88 [1] : vector<16x32xf32> to vector<16xf32>
    %184 = vector.shape_cast %183 : vector<16xf32> to vector<16x1xf32>
    %cst_89 = arith.constant 3.200000e+01 : f32
    %185 = vector.broadcast %cst_89 : f32 to vector<16x1xf32>
    %186 = arith.divf %184, %185 : vector<16x1xf32>
    %187 = vector.broadcast %179 : vector<16x1xf32> to vector<16x32xf32>
    %188 = arith.subf %171, %187 : vector<16x32xf32>
    %cst_90 = arith.constant 9.99999996E-13 : f32
    %189 = vector.broadcast %cst_90 : f32 to vector<16x1xf32>
    %190 = arith.addf %186, %189 : vector<16x1xf32>
    %191 = math.rsqrt %190 : vector<16x1xf32>
    %192 = vector.broadcast %191 : vector<16x1xf32> to vector<16x32xf32>
    %193 = arith.mulf %188, %192 : vector<16x32xf32>
    %194 = vector.broadcast %173 : vector<1x32xf32> to vector<16x32xf32>
    %195 = arith.mulf %193, %194 : vector<16x32xf32>
    %196 = vector.broadcast %175 : vector<1x32xf32> to vector<16x32xf32>
    %197 = arith.addf %195, %196 : vector<16x32xf32>
    %c0_91 = arith.constant 0 : index
    %c0_92 = arith.constant 0 : index
    %c0_93 = arith.constant 0 : index
    %198 = vector.load %arg14[%c0_91, %c0_92, %c0_93] : memref<2x32x64xbf16, #tpu.memory_space<vmem>>, vector<1x32x64xbf16>
    %199 = vector.shape_cast %198 : vector<1x32x64xbf16> to vector<32x64xbf16>
    %200 = arith.truncf %197 : vector<16x32xf32> to vector<16x32xbf16>
    %cst_94 = arith.constant dense<0.000000e+00> : vector<16x64xf32>
    %201 = tpu.matmul %200, %199, %cst_94 {dimension_numbers = #tpu.dot_dimension_numbers<[1], [0], [0], [1], [0, 0, 1, 1], [], []>} : vector<16x32xbf16>, vector<32x64xbf16>, vector<16x64xf32> -> vector<16x64xf32>
    %c0_95 = arith.constant 0 : index
    %c0_96 = arith.constant 0 : index
    %c0_97 = arith.constant 0 : index
    %202 = vector.load %arg15[%c0_95, %c0_96, %c0_97] : memref<2x1x64xf32, #tpu.memory_space<vmem>>, vector<1x1x64xf32>
    %203 = vector.shape_cast %202 : vector<1x1x64xf32> to vector<1x64xf32>
    %204 = vector.broadcast %203 : vector<1x64xf32> to vector<16x64xf32>
    %205 = arith.addf %201, %204 : vector<16x64xf32>
    %206 = arith.mulf %205, %205 : vector<16x64xf32>
    %207 = arith.mulf %205, %206 : vector<16x64xf32>
    %cst_98 = arith.constant 4.471500e-02 : f32
    %208 = vector.broadcast %cst_98 : f32 to vector<16x64xf32>
    %209 = arith.mulf %208, %207 : vector<16x64xf32>
    %210 = arith.addf %205, %209 : vector<16x64xf32>
    %cst_99 = arith.constant 0.797884583 : f32
    %211 = vector.broadcast %cst_99 : f32 to vector<16x64xf32>
    %212 = arith.mulf %211, %210 : vector<16x64xf32>
    %213 = math.tanh %212 : vector<16x64xf32>
    %cst_100 = arith.constant 1.000000e+00 : f32
    %214 = vector.broadcast %cst_100 : f32 to vector<16x64xf32>
    %215 = arith.addf %214, %213 : vector<16x64xf32>
    %cst_101 = arith.constant 5.000000e-01 : f32
    %216 = vector.broadcast %cst_101 : f32 to vector<16x64xf32>
    %217 = arith.mulf %216, %215 : vector<16x64xf32>
    %218 = arith.mulf %205, %217 : vector<16x64xf32>
    %c0_102 = arith.constant 0 : index
    %c0_103 = arith.constant 0 : index
    %c0_104 = arith.constant 0 : index
    %219 = vector.load %arg16[%c0_102, %c0_103, %c0_104] : memref<2x64x32xbf16, #tpu.memory_space<vmem>>, vector<1x64x32xbf16>
    %220 = vector.shape_cast %219 : vector<1x64x32xbf16> to vector<64x32xbf16>
    %221 = arith.truncf %218 : vector<16x64xf32> to vector<16x64xbf16>
    %cst_105 = arith.constant dense<0.000000e+00> : vector<16x32xf32>
    %222 = tpu.matmul %221, %220, %cst_105 {dimension_numbers = #tpu.dot_dimension_numbers<[1], [0], [0], [1], [0, 0, 1, 1], [], []>} : vector<16x64xbf16>, vector<64x32xbf16>, vector<16x32xf32> -> vector<16x32xf32>
    %223 = arith.addf %197, %222 : vector<16x32xf32>
    %c0_106 = arith.constant 0 : index
    %c0_107 = arith.constant 0 : index
    %c0_108 = arith.constant 0 : index
    %224 = vector.load %arg17[%c0_106, %c0_107, %c0_108] : memref<2x1x32xf32, #tpu.memory_space<vmem>>, vector<1x1x32xf32>
    %225 = vector.shape_cast %224 : vector<1x1x32xf32> to vector<1x32xf32>
    %226 = vector.broadcast %225 : vector<1x32xf32> to vector<16x32xf32>
    %227 = arith.addf %223, %226 : vector<16x32xf32>
    %c0_109 = arith.constant 0 : index
    %c0_110 = arith.constant 0 : index
    %c0_111 = arith.constant 0 : index
    %228 = vector.load %arg18[%c0_109, %c0_110, %c0_111] : memref<2x1x32xf32, #tpu.memory_space<vmem>>, vector<1x1x32xf32>
    %229 = vector.shape_cast %228 : vector<1x1x32xf32> to vector<1x32xf32>
    %c0_112 = arith.constant 0 : index
    %c0_113 = arith.constant 0 : index
    %c0_114 = arith.constant 0 : index
    %230 = vector.load %arg19[%c0_112, %c0_113, %c0_114] : memref<2x1x32xf32, #tpu.memory_space<vmem>>, vector<1x1x32xf32>
    %231 = vector.shape_cast %230 : vector<1x1x32xf32> to vector<1x32xf32>
    %cst_115 = arith.constant dense<0.000000e+00> : vector<16xf32>
    %232 = vector.multi_reduction <add>, %227, %cst_115 [1] : vector<16x32xf32> to vector<16xf32>
    %233 = vector.shape_cast %232 : vector<16xf32> to vector<16x1xf32>
    %cst_116 = arith.constant 3.200000e+01 : f32
    %234 = vector.broadcast %cst_116 : f32 to vector<16x1xf32>
    %235 = arith.divf %233, %234 : vector<16x1xf32>
    %236 = vector.broadcast %235 : vector<16x1xf32> to vector<16x32xf32>
    %237 = arith.subf %227, %236 : vector<16x32xf32>
    %238 = arith.mulf %237, %237 : vector<16x32xf32>
    %cst_117 = arith.constant dense<0.000000e+00> : vector<16xf32>
    %239 = vector.multi_reduction <add>, %238, %cst_117 [1] : vector<16x32xf32> to vector<16xf32>
    %240 = vector.shape_cast %239 : vector<16xf32> to vector<16x1xf32>
    %cst_118 = arith.constant 3.200000e+01 : f32
    %241 = vector.broadcast %cst_118 : f32 to vector<16x1xf32>
    %242 = arith.divf %240, %241 : vector<16x1xf32>
    %243 = vector.broadcast %235 : vector<16x1xf32> to vector<16x32xf32>
    %244 = arith.subf %227, %243 : vector<16x32xf32>
    %cst_119 = arith.constant 9.99999996E-13 : f32
    %245 = vector.broadcast %cst_119 : f32 to vector<16x1xf32>
    %246 = arith.addf %242, %245 : vector<16x1xf32>
    %247 = math.rsqrt %246 : vector<16x1xf32>
    %248 = vector.broadcast %247 : vector<16x1xf32> to vector<16x32xf32>
    %249 = arith.mulf %244, %248 : vector<16x32xf32>
    %250 = vector.broadcast %229 : vector<1x32xf32> to vector<16x32xf32>
    %251 = arith.mulf %249, %250 : vector<16x32xf32>
    %252 = vector.broadcast %231 : vector<1x32xf32> to vector<16x32xf32>
    %253 = arith.addf %251, %252 : vector<16x32xf32>
    %c1_120 = arith.constant 1 : index
    %c0_121 = arith.constant 0 : index
    %c0_122 = arith.constant 0 : index
    %254 = vector.load %arg11[%c1_120, %c0_121, %c0_122] : memref<2x1x32xf32, #tpu.memory_space<vmem>>, vector<1x1x32xf32>
    %255 = vector.shape_cast %254 : vector<1x1x32xf32> to vector<1x32xf32>
    %c6 = arith.constant 6 : index
    %c0_123 = arith.constant 0 : index
    %c0_124 = arith.constant 0 : index
    %256 = vector.load %arg8[%c6, %c0_123, %c0_124] : memref<12x32x16xbf16, #tpu.memory_space<vmem>>, vector<1x32x16xbf16>
    %257 = vector.shape_cast %256 : vector<1x32x16xbf16> to vector<32x16xbf16>
    %258 = arith.truncf %253 : vector<16x32xf32> to vector<16x32xbf16>
    %cst_125 = arith.constant dense<0.000000e+00> : vector<16x16xf32>
    %259 = tpu.matmul %258, %257, %cst_125 {dimension_numbers = #tpu.dot_dimension_numbers<[1], [0], [0], [1], [0, 0, 1, 1], [], []>} : vector<16x32xbf16>, vector<32x16xbf16>, vector<16x16xf32> -> vector<16x16xf32>
    %c6_126 = arith.constant 6 : index
    %c0_127 = arith.constant 0 : index
    %c0_128 = arith.constant 0 : index
    %260 = vector.load %arg9[%c6_126, %c0_127, %c0_128] : memref<12x1x16xf32, #tpu.memory_space<vmem>>, vector<1x1x16xf32>
    %261 = vector.shape_cast %260 : vector<1x1x16xf32> to vector<1x16xf32>
    %262 = vector.broadcast %261 : vector<1x16xf32> to vector<16x16xf32>
    %263 = arith.addf %259, %262 : vector<16x16xf32>
    %c7 = arith.constant 7 : index
    %c0_129 = arith.constant 0 : index
    %c0_130 = arith.constant 0 : index
    %264 = vector.load %arg8[%c7, %c0_129, %c0_130] : memref<12x32x16xbf16, #tpu.memory_space<vmem>>, vector<1x32x16xbf16>
    %265 = vector.shape_cast %264 : vector<1x32x16xbf16> to vector<32x16xbf16>
    %266 = arith.truncf %253 : vector<16x32xf32> to vector<16x32xbf16>
    %cst_131 = arith.constant dense<0.000000e+00> : vector<16x16xf32>
    %267 = tpu.matmul %266, %265, %cst_131 {dimension_numbers = #tpu.dot_dimension_numbers<[1], [0], [0], [1], [0, 0, 1, 1], [], []>} : vector<16x32xbf16>, vector<32x16xbf16>, vector<16x16xf32> -> vector<16x16xf32>
    %c7_132 = arith.constant 7 : index
    %c0_133 = arith.constant 0 : index
    %c0_134 = arith.constant 0 : index
    %268 = vector.load %arg9[%c7_132, %c0_133, %c0_134] : memref<12x1x16xf32, #tpu.memory_space<vmem>>, vector<1x1x16xf32>
    %269 = vector.shape_cast %268 : vector<1x1x16xf32> to vector<1x16xf32>
    %270 = vector.broadcast %269 : vector<1x16xf32> to vector<16x16xf32>
    %271 = arith.addf %267, %270 : vector<16x16xf32>
    %c8 = arith.constant 8 : index
    %c0_135 = arith.constant 0 : index
    %c0_136 = arith.constant 0 : index
    %272 = vector.load %arg8[%c8, %c0_135, %c0_136] : memref<12x32x16xbf16, #tpu.memory_space<vmem>>, vector<1x32x16xbf16>
    %273 = vector.shape_cast %272 : vector<1x32x16xbf16> to vector<32x16xbf16>
    %274 = arith.truncf %253 : vector<16x32xf32> to vector<16x32xbf16>
    %cst_137 = arith.constant dense<0.000000e+00> : vector<16x16xf32>
    %275 = tpu.matmul %274, %273, %cst_137 {dimension_numbers = #tpu.dot_dimension_numbers<[1], [0], [0], [1], [0, 0, 1, 1], [], []>} : vector<16x32xbf16>, vector<32x16xbf16>, vector<16x16xf32> -> vector<16x16xf32>
    %c8_138 = arith.constant 8 : index
    %c0_139 = arith.constant 0 : index
    %c0_140 = arith.constant 0 : index
    %276 = vector.load %arg9[%c8_138, %c0_139, %c0_140] : memref<12x1x16xf32, #tpu.memory_space<vmem>>, vector<1x1x16xf32>
    %277 = vector.shape_cast %276 : vector<1x1x16xf32> to vector<1x16xf32>
    %278 = vector.broadcast %277 : vector<1x16xf32> to vector<16x16xf32>
    %279 = arith.addf %275, %278 : vector<16x16xf32>
    %280 = vector.shape_cast %263 : vector<16x16xf32> to vector<2x8x16xf32>
    %281 = vector.shape_cast %271 : vector<16x16xf32> to vector<2x8x16xf32>
    %282 = vector.shape_cast %279 : vector<16x16xf32> to vector<2x8x16xf32>
    %283 = arith.truncf %280 : vector<2x8x16xf32> to vector<2x8x16xbf16>
    %284 = arith.truncf %281 : vector<2x8x16xf32> to vector<2x8x16xbf16>
    "tpu.trace_start"() <{level = 10 : i32, message = "bqd,bkd->bqk"}> : () -> ()
    %cst_141 = arith.constant dense<0.000000e+00> : vector<2x8x8xf32>
    %285 = tpu.matmul %283, %284, %cst_141 {dimension_numbers = #tpu.dot_dimension_numbers<[2], [2], [1], [1], [0, 0, 0, 1, 1, 1], [0], [0]>} : vector<2x8x16xbf16>, vector<2x8x16xbf16>, vector<2x8x8xf32> -> vector<2x8x8xf32>
    "tpu.trace_stop"() : () -> ()
    %cst_142 = arith.constant 2.500000e-01 : f32
    %286 = vector.broadcast %cst_142 : f32 to vector<2x8x8xf32>
    %287 = arith.mulf %285, %286 : vector<2x8x8xf32>
    %288 = arith.addf %287, %65 : vector<2x8x8xf32>
    %cst_143 = arith.constant dense<0xFF800000> : vector<2x8xf32>
    %289 = vector.multi_reduction <maximumf>, %288, %cst_143 [2] : vector<2x8x8xf32> to vector<2x8xf32>
    %290 = vector.shape_cast %289 : vector<2x8xf32> to vector<2x8x1xf32>
    %291 = vector.broadcast %290 : vector<2x8x1xf32> to vector<2x8x8xf32>
    %292 = arith.subf %288, %291 : vector<2x8x8xf32>
    %293 = math.exp %292 : vector<2x8x8xf32>
    %cst_144 = arith.constant dense<0.000000e+00> : vector<2x8xf32>
    %294 = vector.multi_reduction <add>, %293, %cst_144 [2] : vector<2x8x8xf32> to vector<2x8xf32>
    %295 = vector.shape_cast %294 : vector<2x8xf32> to vector<2x8x1xf32>
    %296 = vector.broadcast %295 : vector<2x8x1xf32> to vector<2x8x8xf32>
    %297 = arith.divf %293, %296 : vector<2x8x8xf32>
    %298 = arith.truncf %297 : vector<2x8x8xf32> to vector<2x8x8xbf16>
    %299 = arith.truncf %282 : vector<2x8x16xf32> to vector<2x8x16xbf16>
    "tpu.trace_start"() <{level = 10 : i32, message = "bqk,bkd->bqd"}> : () -> ()
    %cst_145 = arith.constant dense<0.000000e+00> : vector<2x8x16xf32>
    %300 = tpu.matmul %298, %299, %cst_145 {dimension_numbers = #tpu.dot_dimension_numbers<[2], [1], [1], [2], [0, 0, 0, 1, 1, 2], [0], [0]>} : vector<2x8x8xbf16>, vector<2x8x16xbf16>, vector<2x8x16xf32> -> vector<2x8x16xf32>
    "tpu.trace_stop"() : () -> ()
    %301 = vector.shape_cast %300 : vector<2x8x16xf32> to vector<16x16xf32>
    %c2_146 = arith.constant 2 : index
    %c0_147 = arith.constant 0 : index
    %c0_148 = arith.constant 0 : index
    %302 = vector.load %arg10[%c2_146, %c0_147, %c0_148] : memref<4x16x32xbf16, #tpu.memory_space<vmem>>, vector<1x16x32xbf16>
    %303 = vector.shape_cast %302 : vector<1x16x32xbf16> to vector<16x32xbf16>
    %304 = arith.truncf %301 : vector<16x16xf32> to vector<16x16xbf16>
    %cst_149 = arith.constant dense<0.000000e+00> : vector<16x32xf32>
    %305 = tpu.matmul %304, %303, %cst_149 {dimension_numbers = #tpu.dot_dimension_numbers<[1], [0], [0], [1], [0, 0, 1, 1], [], []>} : vector<16x16xbf16>, vector<16x32xbf16>, vector<16x32xf32> -> vector<16x32xf32>
    %306 = vector.broadcast %255 : vector<1x32xf32> to vector<16x32xf32>
    %307 = arith.addf %306, %305 : vector<16x32xf32>
    %c9 = arith.constant 9 : index
    %c0_150 = arith.constant 0 : index
    %c0_151 = arith.constant 0 : index
    %308 = vector.load %arg8[%c9, %c0_150, %c0_151] : memref<12x32x16xbf16, #tpu.memory_space<vmem>>, vector<1x32x16xbf16>
    %309 = vector.shape_cast %308 : vector<1x32x16xbf16> to vector<32x16xbf16>
    %310 = arith.truncf %253 : vector<16x32xf32> to vector<16x32xbf16>
    %cst_152 = arith.constant dense<0.000000e+00> : vector<16x16xf32>
    %311 = tpu.matmul %310, %309, %cst_152 {dimension_numbers = #tpu.dot_dimension_numbers<[1], [0], [0], [1], [0, 0, 1, 1], [], []>} : vector<16x32xbf16>, vector<32x16xbf16>, vector<16x16xf32> -> vector<16x16xf32>
    %c9_153 = arith.constant 9 : index
    %c0_154 = arith.constant 0 : index
    %c0_155 = arith.constant 0 : index
    %312 = vector.load %arg9[%c9_153, %c0_154, %c0_155] : memref<12x1x16xf32, #tpu.memory_space<vmem>>, vector<1x1x16xf32>
    %313 = vector.shape_cast %312 : vector<1x1x16xf32> to vector<1x16xf32>
    %314 = vector.broadcast %313 : vector<1x16xf32> to vector<16x16xf32>
    %315 = arith.addf %311, %314 : vector<16x16xf32>
    %c10 = arith.constant 10 : index
    %c0_156 = arith.constant 0 : index
    %c0_157 = arith.constant 0 : index
    %316 = vector.load %arg8[%c10, %c0_156, %c0_157] : memref<12x32x16xbf16, #tpu.memory_space<vmem>>, vector<1x32x16xbf16>
    %317 = vector.shape_cast %316 : vector<1x32x16xbf16> to vector<32x16xbf16>
    %318 = arith.truncf %253 : vector<16x32xf32> to vector<16x32xbf16>
    %cst_158 = arith.constant dense<0.000000e+00> : vector<16x16xf32>
    %319 = tpu.matmul %318, %317, %cst_158 {dimension_numbers = #tpu.dot_dimension_numbers<[1], [0], [0], [1], [0, 0, 1, 1], [], []>} : vector<16x32xbf16>, vector<32x16xbf16>, vector<16x16xf32> -> vector<16x16xf32>
    %c10_159 = arith.constant 10 : index
    %c0_160 = arith.constant 0 : index
    %c0_161 = arith.constant 0 : index
    %320 = vector.load %arg9[%c10_159, %c0_160, %c0_161] : memref<12x1x16xf32, #tpu.memory_space<vmem>>, vector<1x1x16xf32>
    %321 = vector.shape_cast %320 : vector<1x1x16xf32> to vector<1x16xf32>
    %322 = vector.broadcast %321 : vector<1x16xf32> to vector<16x16xf32>
    %323 = arith.addf %319, %322 : vector<16x16xf32>
    %c11 = arith.constant 11 : index
    %c0_162 = arith.constant 0 : index
    %c0_163 = arith.constant 0 : index
    %324 = vector.load %arg8[%c11, %c0_162, %c0_163] : memref<12x32x16xbf16, #tpu.memory_space<vmem>>, vector<1x32x16xbf16>
    %325 = vector.shape_cast %324 : vector<1x32x16xbf16> to vector<32x16xbf16>
    %326 = arith.truncf %253 : vector<16x32xf32> to vector<16x32xbf16>
    %cst_164 = arith.constant dense<0.000000e+00> : vector<16x16xf32>
    %327 = tpu.matmul %326, %325, %cst_164 {dimension_numbers = #tpu.dot_dimension_numbers<[1], [0], [0], [1], [0, 0, 1, 1], [], []>} : vector<16x32xbf16>, vector<32x16xbf16>, vector<16x16xf32> -> vector<16x16xf32>
    %c11_165 = arith.constant 11 : index
    %c0_166 = arith.constant 0 : index
    %c0_167 = arith.constant 0 : index
    %328 = vector.load %arg9[%c11_165, %c0_166, %c0_167] : memref<12x1x16xf32, #tpu.memory_space<vmem>>, vector<1x1x16xf32>
    %329 = vector.shape_cast %328 : vector<1x1x16xf32> to vector<1x16xf32>
    %330 = vector.broadcast %329 : vector<1x16xf32> to vector<16x16xf32>
    %331 = arith.addf %327, %330 : vector<16x16xf32>
    %332 = vector.shape_cast %315 : vector<16x16xf32> to vector<2x8x16xf32>
    %333 = vector.shape_cast %323 : vector<16x16xf32> to vector<2x8x16xf32>
    %334 = vector.shape_cast %331 : vector<16x16xf32> to vector<2x8x16xf32>
    %335 = arith.truncf %332 : vector<2x8x16xf32> to vector<2x8x16xbf16>
    %336 = arith.truncf %333 : vector<2x8x16xf32> to vector<2x8x16xbf16>
    "tpu.trace_start"() <{level = 10 : i32, message = "bqd,bkd->bqk"}> : () -> ()
    %cst_168 = arith.constant dense<0.000000e+00> : vector<2x8x8xf32>
    %337 = tpu.matmul %335, %336, %cst_168 {dimension_numbers = #tpu.dot_dimension_numbers<[2], [2], [1], [1], [0, 0, 0, 1, 1, 1], [0], [0]>} : vector<2x8x16xbf16>, vector<2x8x16xbf16>, vector<2x8x8xf32> -> vector<2x8x8xf32>
    "tpu.trace_stop"() : () -> ()
    %cst_169 = arith.constant 2.500000e-01 : f32
    %338 = vector.broadcast %cst_169 : f32 to vector<2x8x8xf32>
    %339 = arith.mulf %337, %338 : vector<2x8x8xf32>
    %340 = arith.addf %339, %65 : vector<2x8x8xf32>
    %cst_170 = arith.constant dense<0xFF800000> : vector<2x8xf32>
    %341 = vector.multi_reduction <maximumf>, %340, %cst_170 [2] : vector<2x8x8xf32> to vector<2x8xf32>
    %342 = vector.shape_cast %341 : vector<2x8xf32> to vector<2x8x1xf32>
    %343 = vector.broadcast %342 : vector<2x8x1xf32> to vector<2x8x8xf32>
    %344 = arith.subf %340, %343 : vector<2x8x8xf32>
    %345 = math.exp %344 : vector<2x8x8xf32>
    %cst_171 = arith.constant dense<0.000000e+00> : vector<2x8xf32>
    %346 = vector.multi_reduction <add>, %345, %cst_171 [2] : vector<2x8x8xf32> to vector<2x8xf32>
    %347 = vector.shape_cast %346 : vector<2x8xf32> to vector<2x8x1xf32>
    %348 = vector.broadcast %347 : vector<2x8x1xf32> to vector<2x8x8xf32>
    %349 = arith.divf %345, %348 : vector<2x8x8xf32>
    %350 = arith.truncf %349 : vector<2x8x8xf32> to vector<2x8x8xbf16>
    %351 = arith.truncf %334 : vector<2x8x16xf32> to vector<2x8x16xbf16>
    "tpu.trace_start"() <{level = 10 : i32, message = "bqk,bkd->bqd"}> : () -> ()
    %cst_172 = arith.constant dense<0.000000e+00> : vector<2x8x16xf32>
    %352 = tpu.matmul %350, %351, %cst_172 {dimension_numbers = #tpu.dot_dimension_numbers<[2], [1], [1], [2], [0, 0, 0, 1, 1, 2], [0], [0]>} : vector<2x8x8xbf16>, vector<2x8x16xbf16>, vector<2x8x16xf32> -> vector<2x8x16xf32>
    "tpu.trace_stop"() : () -> ()
    %353 = vector.shape_cast %352 : vector<2x8x16xf32> to vector<16x16xf32>
    %c3_173 = arith.constant 3 : index
    %c0_174 = arith.constant 0 : index
    %c0_175 = arith.constant 0 : index
    %354 = vector.load %arg10[%c3_173, %c0_174, %c0_175] : memref<4x16x32xbf16, #tpu.memory_space<vmem>>, vector<1x16x32xbf16>
    %355 = vector.shape_cast %354 : vector<1x16x32xbf16> to vector<16x32xbf16>
    %356 = arith.truncf %353 : vector<16x16xf32> to vector<16x16xbf16>
    %cst_176 = arith.constant dense<0.000000e+00> : vector<16x32xf32>
    %357 = tpu.matmul %356, %355, %cst_176 {dimension_numbers = #tpu.dot_dimension_numbers<[1], [0], [0], [1], [0, 0, 1, 1], [], []>} : vector<16x16xbf16>, vector<16x32xbf16>, vector<16x32xf32> -> vector<16x32xf32>
    %358 = arith.addf %307, %357 : vector<16x32xf32>
    %359 = arith.addf %253, %358 : vector<16x32xf32>
    %c1_177 = arith.constant 1 : index
    %c0_178 = arith.constant 0 : index
    %c0_179 = arith.constant 0 : index
    %360 = vector.load %arg12[%c1_177, %c0_178, %c0_179] : memref<2x1x32xf32, #tpu.memory_space<vmem>>, vector<1x1x32xf32>
    %361 = vector.shape_cast %360 : vector<1x1x32xf32> to vector<1x32xf32>
    %c1_180 = arith.constant 1 : index
    %c0_181 = arith.constant 0 : index
    %c0_182 = arith.constant 0 : index
    %362 = vector.load %arg13[%c1_180, %c0_181, %c0_182] : memref<2x1x32xf32, #tpu.memory_space<vmem>>, vector<1x1x32xf32>
    %363 = vector.shape_cast %362 : vector<1x1x32xf32> to vector<1x32xf32>
    %cst_183 = arith.constant dense<0.000000e+00> : vector<16xf32>
    %364 = vector.multi_reduction <add>, %359, %cst_183 [1] : vector<16x32xf32> to vector<16xf32>
    %365 = vector.shape_cast %364 : vector<16xf32> to vector<16x1xf32>
    %cst_184 = arith.constant 3.200000e+01 : f32
    %366 = vector.broadcast %cst_184 : f32 to vector<16x1xf32>
    %367 = arith.divf %365, %366 : vector<16x1xf32>
    %368 = vector.broadcast %367 : vector<16x1xf32> to vector<16x32xf32>
    %369 = arith.subf %359, %368 : vector<16x32xf32>
    %370 = arith.mulf %369, %369 : vector<16x32xf32>
    %cst_185 = arith.constant dense<0.000000e+00> : vector<16xf32>
    %371 = vector.multi_reduction <add>, %370, %cst_185 [1] : vector<16x32xf32> to vector<16xf32>
    %372 = vector.shape_cast %371 : vector<16xf32> to vector<16x1xf32>
    %cst_186 = arith.constant 3.200000e+01 : f32
    %373 = vector.broadcast %cst_186 : f32 to vector<16x1xf32>
    %374 = arith.divf %372, %373 : vector<16x1xf32>
    %375 = vector.broadcast %367 : vector<16x1xf32> to vector<16x32xf32>
    %376 = arith.subf %359, %375 : vector<16x32xf32>
    %cst_187 = arith.constant 9.99999996E-13 : f32
    %377 = vector.broadcast %cst_187 : f32 to vector<16x1xf32>
    %378 = arith.addf %374, %377 : vector<16x1xf32>
    %379 = math.rsqrt %378 : vector<16x1xf32>
    %380 = vector.broadcast %379 : vector<16x1xf32> to vector<16x32xf32>
    %381 = arith.mulf %376, %380 : vector<16x32xf32>
    %382 = vector.broadcast %361 : vector<1x32xf32> to vector<16x32xf32>
    %383 = arith.mulf %381, %382 : vector<16x32xf32>
    %384 = vector.broadcast %363 : vector<1x32xf32> to vector<16x32xf32>
    %385 = arith.addf %383, %384 : vector<16x32xf32>
    %c1_188 = arith.constant 1 : index
    %c0_189 = arith.constant 0 : index
    %c0_190 = arith.constant 0 : index
    %386 = vector.load %arg14[%c1_188, %c0_189, %c0_190] : memref<2x32x64xbf16, #tpu.memory_space<vmem>>, vector<1x32x64xbf16>
    %387 = vector.shape_cast %386 : vector<1x32x64xbf16> to vector<32x64xbf16>
    %388 = arith.truncf %385 : vector<16x32xf32> to vector<16x32xbf16>
    %cst_191 = arith.constant dense<0.000000e+00> : vector<16x64xf32>
    %389 = tpu.matmul %388, %387, %cst_191 {dimension_numbers = #tpu.dot_dimension_numbers<[1], [0], [0], [1], [0, 0, 1, 1], [], []>} : vector<16x32xbf16>, vector<32x64xbf16>, vector<16x64xf32> -> vector<16x64xf32>
    %c1_192 = arith.constant 1 : index
    %c0_193 = arith.constant 0 : index
    %c0_194 = arith.constant 0 : index
    %390 = vector.load %arg15[%c1_192, %c0_193, %c0_194] : memref<2x1x64xf32, #tpu.memory_space<vmem>>, vector<1x1x64xf32>
    %391 = vector.shape_cast %390 : vector<1x1x64xf32> to vector<1x64xf32>
    %392 = vector.broadcast %391 : vector<1x64xf32> to vector<16x64xf32>
    %393 = arith.addf %389, %392 : vector<16x64xf32>
    %394 = arith.mulf %393, %393 : vector<16x64xf32>
    %395 = arith.mulf %393, %394 : vector<16x64xf32>
    %cst_195 = arith.constant 4.471500e-02 : f32
    %396 = vector.broadcast %cst_195 : f32 to vector<16x64xf32>
    %397 = arith.mulf %396, %395 : vector<16x64xf32>
    %398 = arith.addf %393, %397 : vector<16x64xf32>
    %cst_196 = arith.constant 0.797884583 : f32
    %399 = vector.broadcast %cst_196 : f32 to vector<16x64xf32>
    %400 = arith.mulf %399, %398 : vector<16x64xf32>
    %401 = math.tanh %400 : vector<16x64xf32>
    %cst_197 = arith.constant 1.000000e+00 : f32
    %402 = vector.broadcast %cst_197 : f32 to vector<16x64xf32>
    %403 = arith.addf %402, %401 : vector<16x64xf32>
    %cst_198 = arith.constant 5.000000e-01 : f32
    %404 = vector.broadcast %cst_198 : f32 to vector<16x64xf32>
    %405 = arith.mulf %404, %403 : vector<16x64xf32>
    %406 = arith.mulf %393, %405 : vector<16x64xf32>
    %c1_199 = arith.constant 1 : index
    %c0_200 = arith.constant 0 : index
    %c0_201 = arith.constant 0 : index
    %407 = vector.load %arg16[%c1_199, %c0_200, %c0_201] : memref<2x64x32xbf16, #tpu.memory_space<vmem>>, vector<1x64x32xbf16>
    %408 = vector.shape_cast %407 : vector<1x64x32xbf16> to vector<64x32xbf16>
    %409 = arith.truncf %406 : vector<16x64xf32> to vector<16x64xbf16>
    %cst_202 = arith.constant dense<0.000000e+00> : vector<16x32xf32>
    %410 = tpu.matmul %409, %408, %cst_202 {dimension_numbers = #tpu.dot_dimension_numbers<[1], [0], [0], [1], [0, 0, 1, 1], [], []>} : vector<16x64xbf16>, vector<64x32xbf16>, vector<16x32xf32> -> vector<16x32xf32>
    %411 = arith.addf %385, %410 : vector<16x32xf32>
    %c1_203 = arith.constant 1 : index
    %c0_204 = arith.constant 0 : index
    %c0_205 = arith.constant 0 : index
    %412 = vector.load %arg17[%c1_203, %c0_204, %c0_205] : memref<2x1x32xf32, #tpu.memory_space<vmem>>, vector<1x1x32xf32>
    %413 = vector.shape_cast %412 : vector<1x1x32xf32> to vector<1x32xf32>
    %414 = vector.broadcast %413 : vector<1x32xf32> to vector<16x32xf32>
    %415 = arith.addf %411, %414 : vector<16x32xf32>
    %c1_206 = arith.constant 1 : index
    %c0_207 = arith.constant 0 : index
    %c0_208 = arith.constant 0 : index
    %416 = vector.load %arg18[%c1_206, %c0_207, %c0_208] : memref<2x1x32xf32, #tpu.memory_space<vmem>>, vector<1x1x32xf32>
    %417 = vector.shape_cast %416 : vector<1x1x32xf32> to vector<1x32xf32>
    %c1_209 = arith.constant 1 : index
    %c0_210 = arith.constant 0 : index
    %c0_211 = arith.constant 0 : index
    %418 = vector.load %arg19[%c1_209, %c0_210, %c0_211] : memref<2x1x32xf32, #tpu.memory_space<vmem>>, vector<1x1x32xf32>
    %419 = vector.shape_cast %418 : vector<1x1x32xf32> to vector<1x32xf32>
    %cst_212 = arith.constant dense<0.000000e+00> : vector<16xf32>
    %420 = vector.multi_reduction <add>, %415, %cst_212 [1] : vector<16x32xf32> to vector<16xf32>
    %421 = vector.shape_cast %420 : vector<16xf32> to vector<16x1xf32>
    %cst_213 = arith.constant 3.200000e+01 : f32
    %422 = vector.broadcast %cst_213 : f32 to vector<16x1xf32>
    %423 = arith.divf %421, %422 : vector<16x1xf32>
    %424 = vector.broadcast %423 : vector<16x1xf32> to vector<16x32xf32>
    %425 = arith.subf %415, %424 : vector<16x32xf32>
    %426 = arith.mulf %425, %425 : vector<16x32xf32>
    %cst_214 = arith.constant dense<0.000000e+00> : vector<16xf32>
    %427 = vector.multi_reduction <add>, %426, %cst_214 [1] : vector<16x32xf32> to vector<16xf32>
    %428 = vector.shape_cast %427 : vector<16xf32> to vector<16x1xf32>
    %cst_215 = arith.constant 3.200000e+01 : f32
    %429 = vector.broadcast %cst_215 : f32 to vector<16x1xf32>
    %430 = arith.divf %428, %429 : vector<16x1xf32>
    %431 = vector.broadcast %423 : vector<16x1xf32> to vector<16x32xf32>
    %432 = arith.subf %415, %431 : vector<16x32xf32>
    %cst_216 = arith.constant 9.99999996E-13 : f32
    %433 = vector.broadcast %cst_216 : f32 to vector<16x1xf32>
    %434 = arith.addf %430, %433 : vector<16x1xf32>
    %435 = math.rsqrt %434 : vector<16x1xf32>
    %436 = vector.broadcast %435 : vector<16x1xf32> to vector<16x32xf32>
    %437 = arith.mulf %432, %436 : vector<16x32xf32>
    %438 = vector.broadcast %417 : vector<1x32xf32> to vector<16x32xf32>
    %439 = arith.mulf %437, %438 : vector<16x32xf32>
    %440 = vector.broadcast %419 : vector<1x32xf32> to vector<16x32xf32>
    %441 = arith.addf %439, %440 : vector<16x32xf32>
    %c0_217 = arith.constant 0 : index
    %c0_218 = arith.constant 0 : index
    %442 = vector.load %arg20[%c0_217, %c0_218] : memref<32x128xbf16, #tpu.memory_space<vmem>>, vector<32x128xbf16>
    %443 = arith.truncf %441 : vector<16x32xf32> to vector<16x32xbf16>
    %cst_219 = arith.constant dense<0.000000e+00> : vector<16x128xf32>
    %444 = tpu.matmul %443, %442, %cst_219 {dimension_numbers = #tpu.dot_dimension_numbers<[1], [0], [0], [1], [0, 0, 1, 1], [], []>} : vector<16x32xbf16>, vector<32x128xbf16>, vector<16x128xf32> -> vector<16x128xf32>
    %c0_220 = arith.constant 0 : index
    %c0_221 = arith.constant 0 : index
    %445 = vector.load %arg21[%c0_220, %c0_221] : memref<1x128xf32, #tpu.memory_space<vmem>>, vector<1x128xf32>
    %446 = vector.broadcast %445 : vector<1x128xf32> to vector<16x128xf32>
    %447 = arith.addf %444, %446 : vector<16x128xf32>
    %448 = vector.shape_cast %447 : vector<16x128xf32> to vector<2x8x128xf32>
    %c0_222 = arith.constant 0 : index
    %c0_223 = arith.constant 0 : index
    %c0_224 = arith.constant 0 : index
    %449 = vector.load %arg27[%c0_222, %c0_223, %c0_224] : memref<2x8x128xf32, #tpu.memory_space<vmem>>, vector<2x8x128xf32>
    tpu.vector_store %arg27[%c0_222, %c0_223, %c0_224], %448 {strides = array<i32>} : memref<2x8x128xf32, #tpu.memory_space<vmem>>, vector<2x8x128xf32>,
    %450 = tpu.iota {dimensions = array<i32: 1>} : vector<16x128xi32>
    %451 = vector.broadcast %4 : vector<16x1xi32> to vector<16x128xi32>
    %452 = arith.cmpi eq, %450, %451 : vector<16x128xi32>
    %453 = arith.extui %452 : vector<16x128xi1> to vector<16x128xi32>
    %454 = arith.sitofp %453 : vector<16x128xi32> to vector<16x128xf32>
    %455 = vector.broadcast %5 : vector<16x1xi32> to vector<16x128xi32>
    %456 = arith.cmpi eq, %450, %455 : vector<16x128xi32>
    %457 = arith.extui %456 : vector<16x128xi1> to vector<16x128xi32>
    %458 = arith.sitofp %457 : vector<16x128xi32> to vector<16x128xf32>
    %cst_225 = arith.constant 1.000000e+00 : f32
    %459 = vector.broadcast %cst_225 : f32 to vector<16x1xf32>
    %460 = arith.subf %459, %11 : vector<16x1xf32>
    %461 = arith.mulf %460, %7 : vector<16x1xf32>
    %462 = arith.addf %11, %461 : vector<16x1xf32>
    %cst_226 = arith.constant 1.000000e+00 : f32
    %463 = vector.broadcast %cst_226 : f32 to vector<16x1xf32>
    %464 = arith.subf %463, %11 : vector<16x1xf32>
    %465 = arith.mulf %464, %7 : vector<16x1xf32>
    %c0_227 = arith.constant 0 : index
    %c0_228 = arith.constant 0 : index
    %466 = vector.load %arg24[%c0_227, %c0_228] : memref<128x128xf32, #tpu.memory_space<vmem>>, vector<128x128xf32>
    %cst_229 = arith.constant dense<0.000000e+00> : vector<16x128xf32>
    %467 = tpu.matmul %458, %466, %cst_229 {dimension_numbers = #tpu.dot_dimension_numbers<[1], [0], [0], [1], [0, 0, 1, 1], [], []>} : vector<16x128xf32>, vector<128x128xf32>, vector<16x128xf32> -> vector<16x128xf32>
    %468 = arith.mulf %454, %447 : vector<16x128xf32>
    %469 = vector.broadcast %462 : vector<16x1xf32> to vector<16x128xf32>
    %470 = arith.mulf %468, %469 : vector<16x128xf32>
    %cst_230 = arith.constant dense<0.000000e+00> : vector<16xf32>
    %471 = vector.multi_reduction <add>, %470, %cst_230 [1] : vector<16x128xf32> to vector<16xf32>
    %472 = vector.shape_cast %471 : vector<16xf32> to vector<16x1xf32>
    %cst_231 = arith.constant dense<0.000000e+00> : vector<1xf32>
    %473 = vector.multi_reduction <add>, %472, %cst_231 [0] : vector<16x1xf32> to vector<1xf32>
    %474 = vector.shape_cast %473 : vector<1xf32> to vector<1x1xf32>
    %475 = arith.mulf %454, %467 : vector<16x128xf32>
    %476 = vector.broadcast %465 : vector<16x1xf32> to vector<16x128xf32>
    %477 = arith.mulf %475, %476 : vector<16x128xf32>
    %cst_232 = arith.constant dense<0.000000e+00> : vector<16xf32>
    %478 = vector.multi_reduction <add>, %477, %cst_232 [1] : vector<16x128xf32> to vector<16xf32>
    %479 = vector.shape_cast %478 : vector<16xf32> to vector<16x1xf32>
    %cst_233 = arith.constant dense<0.000000e+00> : vector<1xf32>
    %480 = vector.multi_reduction <add>, %479, %cst_233 [0] : vector<16x1xf32> to vector<1xf32>
    %481 = vector.shape_cast %480 : vector<1xf32> to vector<1x1xf32>
    %482 = arith.addf %474, %481 : vector<1x1xf32>
    %483 = vector.broadcast %11 : vector<16x1xf32> to vector<16x128xf32>
    %484 = arith.mulf %454, %483 : vector<16x128xf32>
    %c0_234 = arith.constant 0 : index
    %c0_235 = arith.constant 0 : index
    %485 = vector.load %arg22[%c0_234, %c0_235] : memref<1x128xf32, #tpu.memory_space<vmem>>, vector<1x128xf32>
    %486 = vector.broadcast %485 : vector<1x128xf32> to vector<16x128xf32>
    %487 = arith.mulf %484, %486 : vector<16x128xf32>
    %cst_236 = arith.constant dense<0.000000e+00> : vector<16xf32>
    %488 = vector.multi_reduction <add>, %487, %cst_236 [1] : vector<16x128xf32> to vector<16xf32>
    %489 = vector.shape_cast %488 : vector<16xf32> to vector<16x1xf32>
    %cst_237 = arith.constant dense<0.000000e+00> : vector<1xf32>
    %490 = vector.multi_reduction <add>, %489, %cst_237 [0] : vector<16x1xf32> to vector<1xf32>
    %491 = vector.shape_cast %490 : vector<1xf32> to vector<1x1xf32>
    %492 = arith.addf %482, %491 : vector<1x1xf32>
    %493 = vector.broadcast %9 : vector<16x1xf32> to vector<16x128xf32>
    %494 = arith.mulf %454, %493 : vector<16x128xf32>
    %c0_238 = arith.constant 0 : index
    %c0_239 = arith.constant 0 : index
    %495 = vector.load %arg23[%c0_238, %c0_239] : memref<1x128xf32, #tpu.memory_space<vmem>>, vector<1x128xf32>
    %496 = vector.broadcast %495 : vector<1x128xf32> to vector<16x128xf32>
    %497 = arith.mulf %494, %496 : vector<16x128xf32>
    %cst_240 = arith.constant dense<0.000000e+00> : vector<16xf32>
    %498 = vector.multi_reduction <add>, %497, %cst_240 [1] : vector<16x128xf32> to vector<16xf32>
    %499 = vector.shape_cast %498 : vector<16xf32> to vector<16x1xf32>
    %cst_241 = arith.constant dense<0.000000e+00> : vector<1xf32>
    %500 = vector.multi_reduction <add>, %499, %cst_241 [0] : vector<16x1xf32> to vector<1xf32>
    %501 = vector.shape_cast %500 : vector<1xf32> to vector<1x1xf32>
    %502 = arith.addf %492, %501 : vector<1x1xf32>
    %c0_242 = arith.constant 0 : index
    %c0_243 = arith.constant 0 : index
    %503 = vector.load %arg25[%c0_242, %c0_243] : memref<128x128xf32, #tpu.memory_space<vmem>>, vector<128x128xf32>
    %c0_244 = arith.constant 0 : index
    %c0_245 = arith.constant 0 : index
    %504 = vector.load %arg22[%c0_244, %c0_245] : memref<1x128xf32, #tpu.memory_space<vmem>>, vector<1x128xf32>
    %505 = vector.extract_strided_slice %448 {offsets = [0, 0, 0], sizes = [2, 1, 128], strides = [1, 1, 1]} : vector<2x8x128xf32> to vector<2x1x128xf32>
    %506 = vector.shape_cast %505 : vector<2x1x128xf32> to vector<2x128xf32>
    %507 = vector.broadcast %504 : vector<1x128xf32> to vector<2x128xf32>
    %508 = arith.addf %507, %506 : vector<2x128xf32>
    %cst_246 = arith.constant dense<0xFF800000> : vector<2xf32>
    %509 = vector.multi_reduction <maximumf>, %508, %cst_246 [1] : vector<2x128xf32> to vector<2xf32>
    %510 = vector.shape_cast %509 : vector<2xf32> to vector<2x1xf32>
    %511 = vector.broadcast %510 : vector<2x1xf32> to vector<2x128xf32>
    %512 = arith.subf %508, %511 : vector<2x128xf32>
    %513 = math.exp %512 : vector<2x128xf32>
    %cst_247 = arith.constant dense<0.000000e+00> : vector<2x128xf32>
    %514 = tpu.matmul %513, %503, %cst_247 {dimension_numbers = #tpu.dot_dimension_numbers<[1], [0], [0], [1], [0, 0, 1, 1], [], []>} : vector<2x128xf32>, vector<128x128xf32>, vector<2x128xf32> -> vector<2x128xf32>
    %cst_248 = arith.constant 1.000000e-30 : f32
    %515 = vector.broadcast %cst_248 : f32 to vector<2x128xf32>
    %516 = arith.maximumf %514, %515 : vector<2x128xf32>
    %517 = math.log %516 : vector<2x128xf32>
    %518 = vector.broadcast %510 : vector<2x1xf32> to vector<2x128xf32>
    %519 = arith.addf %518, %517 : vector<2x128xf32>
    %520 = vector.extract_strided_slice %448 {offsets = [0, 1, 0], sizes = [2, 1, 128], strides = [1, 1, 1]} : vector<2x8x128xf32> to vector<2x1x128xf32>
    %521 = vector.shape_cast %520 : vector<2x1x128xf32> to vector<2x128xf32>
    %522 = arith.addf %519, %521 : vector<2x128xf32>
    %523 = vector.extract_strided_slice %58 {offsets = [0, 1], sizes = [2, 1], strides = [1, 1]} : vector<2x8xf32> to vector<2x1xf32>
    %cst_249 = arith.constant 5.000000e-01 : f32
    %524 = vector.broadcast %cst_249 : f32 to vector<2x1xf32>
    %525 = arith.cmpf ogt, %523, %524 : vector<2x1xf32>
    %526 = vector.shape_cast %525 : vector<2x1xi1> to vector<2x1xi1>
    %527 = vector.broadcast %526 : vector<2x1xi1> to vector<2x128xi1>
    %528 = arith.select %527, %522, %508 : vector<2x128xi1>, vector<2x128xf32>
    %cst_250 = arith.constant dense<0xFF800000> : vector<2xf32>
    %529 = vector.multi_reduction <maximumf>, %528, %cst_250 [1] : vector<2x128xf32> to vector<2xf32>
    %530 = vector.shape_cast %529 : vector<2xf32> to vector<2x1xf32>
    %531 = vector.broadcast %530 : vector<2x1xf32> to vector<2x128xf32>
    %532 = arith.subf %528, %531 : vector<2x128xf32>
    %533 = math.exp %532 : vector<2x128xf32>
    %cst_251 = arith.constant dense<0.000000e+00> : vector<2x128xf32>
    %534 = tpu.matmul %533, %503, %cst_251 {dimension_numbers = #tpu.dot_dimension_numbers<[1], [0], [0], [1], [0, 0, 1, 1], [], []>} : vector<2x128xf32>, vector<128x128xf32>, vector<2x128xf32> -> vector<2x128xf32>
    %cst_252 = arith.constant 1.000000e-30 : f32
    %535 = vector.broadcast %cst_252 : f32 to vector<2x128xf32>
    %536 = arith.maximumf %534, %535 : vector<2x128xf32>
    %537 = math.log %536 : vector<2x128xf32>
    %538 = vector.broadcast %530 : vector<2x1xf32> to vector<2x128xf32>
    %539 = arith.addf %538, %537 : vector<2x128xf32>
    %540 = vector.extract_strided_slice %448 {offsets = [0, 2, 0], sizes = [2, 1, 128], strides = [1, 1, 1]} : vector<2x8x128xf32> to vector<2x1x128xf32>
    %541 = vector.shape_cast %540 : vector<2x1x128xf32> to vector<2x128xf32>
    %542 = arith.addf %539, %541 : vector<2x128xf32>
    %543 = vector.extract_strided_slice %58 {offsets = [0, 2], sizes = [2, 1], strides = [1, 1]} : vector<2x8xf32> to vector<2x1xf32>
    %cst_253 = arith.constant 5.000000e-01 : f32
    %544 = vector.broadcast %cst_253 : f32 to vector<2x1xf32>
    %545 = arith.cmpf ogt, %543, %544 : vector<2x1xf32>
    %546 = vector.shape_cast %545 : vector<2x1xi1> to vector<2x1xi1>
    %547 = vector.broadcast %546 : vector<2x1xi1> to vector<2x128xi1>
    %548 = arith.select %547, %542, %528 : vector<2x128xi1>, vector<2x128xf32>
    %cst_254 = arith.constant dense<0xFF800000> : vector<2xf32>
    %549 = vector.multi_reduction <maximumf>, %548, %cst_254 [1] : vector<2x128xf32> to vector<2xf32>
    %550 = vector.shape_cast %549 : vector<2xf32> to vector<2x1xf32>
    %551 = vector.broadcast %550 : vector<2x1xf32> to vector<2x128xf32>
    %552 = arith.subf %548, %551 : vector<2x128xf32>
    %553 = math.exp %552 : vector<2x128xf32>
    %cst_255 = arith.constant dense<0.000000e+00> : vector<2x128xf32>
    %554 = tpu.matmul %553, %503, %cst_255 {dimension_numbers = #tpu.dot_dimension_numbers<[1], [0], [0], [1], [0, 0, 1, 1], [], []>} : vector<2x128xf32>, vector<128x128xf32>, vector<2x128xf32> -> vector<2x128xf32>
    %cst_256 = arith.constant 1.000000e-30 : f32
    %555 = vector.broadcast %cst_256 : f32 to vector<2x128xf32>
    %556 = arith.maximumf %554, %555 : vector<2x128xf32>
    %557 = math.log %556 : vector<2x128xf32>
    %558 = vector.broadcast %550 : vector<2x1xf32> to vector<2x128xf32>
    %559 = arith.addf %558, %557 : vector<2x128xf32>
    %560 = vector.extract_strided_slice %448 {offsets = [0, 3, 0], sizes = [2, 1, 128], strides = [1, 1, 1]} : vector<2x8x128xf32> to vector<2x1x128xf32>
    %561 = vector.shape_cast %560 : vector<2x1x128xf32> to vector<2x128xf32>
    %562 = arith.addf %559, %561 : vector<2x128xf32>
    %563 = vector.extract_strided_slice %58 {offsets = [0, 3], sizes = [2, 1], strides = [1, 1]} : vector<2x8xf32> to vector<2x1xf32>
    %cst_257 = arith.constant 5.000000e-01 : f32
    %564 = vector.broadcast %cst_257 : f32 to vector<2x1xf32>
    %565 = arith.cmpf ogt, %563, %564 : vector<2x1xf32>
    %566 = vector.shape_cast %565 : vector<2x1xi1> to vector<2x1xi1>
    %567 = vector.broadcast %566 : vector<2x1xi1> to vector<2x128xi1>
    %568 = arith.select %567, %562, %548 : vector<2x128xi1>, vector<2x128xf32>
    %cst_258 = arith.constant dense<0xFF800000> : vector<2xf32>
    %569 = vector.multi_reduction <maximumf>, %568, %cst_258 [1] : vector<2x128xf32> to vector<2xf32>
    %570 = vector.shape_cast %569 : vector<2xf32> to vector<2x1xf32>
    %571 = vector.broadcast %570 : vector<2x1xf32> to vector<2x128xf32>
    %572 = arith.subf %568, %571 : vector<2x128xf32>
    %573 = math.exp %572 : vector<2x128xf32>
    %cst_259 = arith.constant dense<0.000000e+00> : vector<2x128xf32>
    %574 = tpu.matmul %573, %503, %cst_259 {dimension_numbers = #tpu.dot_dimension_numbers<[1], [0], [0], [1], [0, 0, 1, 1], [], []>} : vector<2x128xf32>, vector<128x128xf32>, vector<2x128xf32> -> vector<2x128xf32>
    %cst_260 = arith.constant 1.000000e-30 : f32
    %575 = vector.broadcast %cst_260 : f32 to vector<2x128xf32>
    %576 = arith.maximumf %574, %575 : vector<2x128xf32>
    %577 = math.log %576 : vector<2x128xf32>
    %578 = vector.broadcast %570 : vector<2x1xf32> to vector<2x128xf32>
    %579 = arith.addf %578, %577 : vector<2x128xf32>
    %580 = vector.extract_strided_slice %448 {offsets = [0, 4, 0], sizes = [2, 1, 128], strides = [1, 1, 1]} : vector<2x8x128xf32> to vector<2x1x128xf32>
    %581 = vector.shape_cast %580 : vector<2x1x128xf32> to vector<2x128xf32>
    %582 = arith.addf %579, %581 : vector<2x128xf32>
    %583 = vector.extract_strided_slice %58 {offsets = [0, 4], sizes = [2, 1], strides = [1, 1]} : vector<2x8xf32> to vector<2x1xf32>
    %cst_261 = arith.constant 5.000000e-01 : f32
    %584 = vector.broadcast %cst_261 : f32 to vector<2x1xf32>
    %585 = arith.cmpf ogt, %583, %584 : vector<2x1xf32>
    %586 = vector.shape_cast %585 : vector<2x1xi1> to vector<2x1xi1>
    %587 = vector.broadcast %586 : vector<2x1xi1> to vector<2x128xi1>
    %588 = arith.select %587, %582, %568 : vector<2x128xi1>, vector<2x128xf32>
    %cst_262 = arith.constant dense<0xFF800000> : vector<2xf32>
    %589 = vector.multi_reduction <maximumf>, %588, %cst_262 [1] : vector<2x128xf32> to vector<2xf32>
    %590 = vector.shape_cast %589 : vector<2xf32> to vector<2x1xf32>
    %591 = vector.broadcast %590 : vector<2x1xf32> to vector<2x128xf32>
    %592 = arith.subf %588, %591 : vector<2x128xf32>
    %593 = math.exp %592 : vector<2x128xf32>
    %cst_263 = arith.constant dense<0.000000e+00> : vector<2x128xf32>
    %594 = tpu.matmul %593, %503, %cst_263 {dimension_numbers = #tpu.dot_dimension_numbers<[1], [0], [0], [1], [0, 0, 1, 1], [], []>} : vector<2x128xf32>, vector<128x128xf32>, vector<2x128xf32> -> vector<2x128xf32>
    %cst_264 = arith.constant 1.000000e-30 : f32
    %595 = vector.broadcast %cst_264 : f32 to vector<2x128xf32>
    %596 = arith.maximumf %594, %595 : vector<2x128xf32>
    %597 = math.log %596 : vector<2x128xf32>
    %598 = vector.broadcast %590 : vector<2x1xf32> to vector<2x128xf32>
    %599 = arith.addf %598, %597 : vector<2x128xf32>
    %600 = vector.extract_strided_slice %448 {offsets = [0, 5, 0], sizes = [2, 1, 128], strides = [1, 1, 1]} : vector<2x8x128xf32> to vector<2x1x128xf32>
    %601 = vector.shape_cast %600 : vector<2x1x128xf32> to vector<2x128xf32>
    %602 = arith.addf %599, %601 : vector<2x128xf32>
    %603 = vector.extract_strided_slice %58 {offsets = [0, 5], sizes = [2, 1], strides = [1, 1]} : vector<2x8xf32> to vector<2x1xf32>
    %cst_265 = arith.constant 5.000000e-01 : f32
    %604 = vector.broadcast %cst_265 : f32 to vector<2x1xf32>
    %605 = arith.cmpf ogt, %603, %604 : vector<2x1xf32>
    %606 = vector.shape_cast %605 : vector<2x1xi1> to vector<2x1xi1>
    %607 = vector.broadcast %606 : vector<2x1xi1> to vector<2x128xi1>
    %608 = arith.select %607, %602, %588 : vector<2x128xi1>, vector<2x128xf32>
    %cst_266 = arith.constant dense<0xFF800000> : vector<2xf32>
    %609 = vector.multi_reduction <maximumf>, %608, %cst_266 [1] : vector<2x128xf32> to vector<2xf32>
    %610 = vector.shape_cast %609 : vector<2xf32> to vector<2x1xf32>
    %611 = vector.broadcast %610 : vector<2x1xf32> to vector<2x128xf32>
    %612 = arith.subf %608, %611 : vector<2x128xf32>
    %613 = math.exp %612 : vector<2x128xf32>
    %cst_267 = arith.constant dense<0.000000e+00> : vector<2x128xf32>
    %614 = tpu.matmul %613, %503, %cst_267 {dimension_numbers = #tpu.dot_dimension_numbers<[1], [0], [0], [1], [0, 0, 1, 1], [], []>} : vector<2x128xf32>, vector<128x128xf32>, vector<2x128xf32> -> vector<2x128xf32>
    %cst_268 = arith.constant 1.000000e-30 : f32
    %615 = vector.broadcast %cst_268 : f32 to vector<2x128xf32>
    %616 = arith.maximumf %614, %615 : vector<2x128xf32>
    %617 = math.log %616 : vector<2x128xf32>
    %618 = vector.broadcast %610 : vector<2x1xf32> to vector<2x128xf32>
    %619 = arith.addf %618, %617 : vector<2x128xf32>
    %620 = vector.extract_strided_slice %448 {offsets = [0, 6, 0], sizes = [2, 1, 128], strides = [1, 1, 1]} : vector<2x8x128xf32> to vector<2x1x128xf32>
    %621 = vector.shape_cast %620 : vector<2x1x128xf32> to vector<2x128xf32>
    %622 = arith.addf %619, %621 : vector<2x128xf32>
    %623 = vector.extract_strided_slice %58 {offsets = [0, 6], sizes = [2, 1], strides = [1, 1]} : vector<2x8xf32> to vector<2x1xf32>
    %cst_269 = arith.constant 5.000000e-01 : f32
    %624 = vector.broadcast %cst_269 : f32 to vector<2x1xf32>
    %625 = arith.cmpf ogt, %623, %624 : vector<2x1xf32>
    %626 = vector.shape_cast %625 : vector<2x1xi1> to vector<2x1xi1>
    %627 = vector.broadcast %626 : vector<2x1xi1> to vector<2x128xi1>
    %628 = arith.select %627, %622, %608 : vector<2x128xi1>, vector<2x128xf32>
    %cst_270 = arith.constant dense<0xFF800000> : vector<2xf32>
    %629 = vector.multi_reduction <maximumf>, %628, %cst_270 [1] : vector<2x128xf32> to vector<2xf32>
    %630 = vector.shape_cast %629 : vector<2xf32> to vector<2x1xf32>
    %631 = vector.broadcast %630 : vector<2x1xf32> to vector<2x128xf32>
    %632 = arith.subf %628, %631 : vector<2x128xf32>
    %633 = math.exp %632 : vector<2x128xf32>
    %cst_271 = arith.constant dense<0.000000e+00> : vector<2x128xf32>
    %634 = tpu.matmul %633, %503, %cst_271 {dimension_numbers = #tpu.dot_dimension_numbers<[1], [0], [0], [1], [0, 0, 1, 1], [], []>} : vector<2x128xf32>, vector<128x128xf32>, vector<2x128xf32> -> vector<2x128xf32>
    %cst_272 = arith.constant 1.000000e-30 : f32
    %635 = vector.broadcast %cst_272 : f32 to vector<2x128xf32>
    %636 = arith.maximumf %634, %635 : vector<2x128xf32>
    %637 = math.log %636 : vector<2x128xf32>
    %638 = vector.broadcast %630 : vector<2x1xf32> to vector<2x128xf32>
    %639 = arith.addf %638, %637 : vector<2x128xf32>
    %640 = vector.extract_strided_slice %448 {offsets = [0, 7, 0], sizes = [2, 1, 128], strides = [1, 1, 1]} : vector<2x8x128xf32> to vector<2x1x128xf32>
    %641 = vector.shape_cast %640 : vector<2x1x128xf32> to vector<2x128xf32>
    %642 = arith.addf %639, %641 : vector<2x128xf32>
    %643 = vector.extract_strided_slice %58 {offsets = [0, 7], sizes = [2, 1], strides = [1, 1]} : vector<2x8xf32> to vector<2x1xf32>
    %cst_273 = arith.constant 5.000000e-01 : f32
    %644 = vector.broadcast %cst_273 : f32 to vector<2x1xf32>
    %645 = arith.cmpf ogt, %643, %644 : vector<2x1xf32>
    %646 = vector.shape_cast %645 : vector<2x1xi1> to vector<2x1xi1>
    %647 = vector.broadcast %646 : vector<2x1xi1> to vector<2x128xi1>
    %648 = arith.select %647, %642, %628 : vector<2x128xi1>, vector<2x128xf32>
    %c0_274 = arith.constant 0 : index
    %c0_275 = arith.constant 0 : index
    %649 = vector.load %arg23[%c0_274, %c0_275] : memref<1x128xf32, #tpu.memory_space<vmem>>, vector<1x128xf32>
    %650 = vector.broadcast %649 : vector<1x128xf32> to vector<2x128xf32>
    %651 = arith.addf %648, %650 : vector<2x128xf32>
    %cst_276 = arith.constant dense<0xFF800000> : vector<2xf32>
    %652 = vector.multi_reduction <maximumf>, %651, %cst_276 [1] : vector<2x128xf32> to vector<2xf32>
    %653 = vector.shape_cast %652 : vector<2xf32> to vector<2x1xf32>
    %654 = vector.broadcast %653 : vector<2x1xf32> to vector<2x128xf32>
    %655 = arith.subf %651, %654 : vector<2x128xf32>
    %656 = math.exp %655 : vector<2x128xf32>
    %cst_277 = arith.constant dense<0.000000e+00> : vector<2xf32>
    %657 = vector.multi_reduction <add>, %656, %cst_277 [1] : vector<2x128xf32> to vector<2xf32>
    %658 = vector.shape_cast %657 : vector<2xf32> to vector<2x1xf32>
    %659 = math.log %658 : vector<2x1xf32>
    %660 = arith.addf %653, %659 : vector<2x1xf32>
    %cst_278 = arith.constant dense<0.000000e+00> : vector<1xf32>
    %661 = vector.multi_reduction <add>, %660, %cst_278 [0] : vector<2x1xf32> to vector<1xf32>
    %662 = vector.shape_cast %661 : vector<1xf32> to vector<1x1xf32>
    %663 = arith.subf %662, %502 : vector<1x1xf32>
    %c0_279 = arith.constant 0 : index
    %c0_280 = arith.constant 0 : index
    %664 = vector.load %arg26[%c0_279, %c0_280] : memref<1x1xf32, #tpu.memory_space<vmem>>, vector<1x1xf32>
    tpu.vector_store %arg26[%c0_279, %c0_280], %663 {strides = array<i32>} : memref<1x1xf32, #tpu.memory_space<vmem>>, vector<1x1xf32>,
    return
  }
  func.func @transform_0(%arg0: i32) -> (i32, i32) {
    %c0_i32 = arith.constant 0 : i32
    %c0_i32_0 = arith.constant 0 : i32
    %c0_i32_1 = arith.constant 0 : i32
    return %c0_i32, %c0_i32_0 : i32, i32
  }
  func.func @transform_1(%arg0: i32) -> (i32, i32) {
    %c0_i32 = arith.constant 0 : i32
    %c0_i32_0 = arith.constant 0 : i32
    %c0_i32_1 = arith.constant 0 : i32
    return %c0_i32, %c0_i32_0 : i32, i32
  }
  func.func @transform_2(%arg0: i32) -> (i32, i32) {
    %c0_i32 = arith.constant 0 : i32
    %c0_i32_0 = arith.constant 0 : i32
    %c0_i32_1 = arith.constant 0 : i32
    return %c0_i32, %c0_i32_0 : i32, i32
  }
  func.func @transform_3(%arg0: i32) -> (i32, i32) {
    %c0_i32 = arith.constant 0 : i32
    %c0_i32_0 = arith.constant 0 : i32
    %c0_i32_1 = arith.constant 0 : i32
    return %c0_i32, %c0_i32_0 : i32, i32
  }
  func.func @transform_4(%arg0: i32) -> (i32, i32) {
    %c0_i32 = arith.constant 0 : i32
    %c0_i32_0 = arith.constant 0 : i32
    %c0_i32_1 = arith.constant 0 : i32
    return %c0_i32, %c0_i32_0 : i32, i32
  }
  func.func @transform_5(%arg0: i32) -> (i32, i32) {
    %c0_i32 = arith.constant 0 : i32
    %c0_i32_0 = arith.constant 0 : i32
    %c0_i32_1 = arith.constant 0 : i32
    return %c0_i32, %c0_i32_0 : i32, i32
  }
  func.func @transform_6(%arg0: i32) -> (i32, i32) {
    %c0_i32 = arith.constant 0 : i32
    %c0_i32_0 = arith.constant 0 : i32
    %c0_i32_1 = arith.constant 0 : i32
    return %c0_i32, %c0_i32_0 : i32, i32
  }
  func.func @transform_7(%arg0: i32) -> (i32, i32, i32) {
    %c0_i32 = arith.constant 0 : i32
    %c0_i32_0 = arith.constant 0 : i32
    %c0_i32_1 = arith.constant 0 : i32
    %c0_i32_2 = arith.constant 0 : i32
    return %c0_i32, %c0_i32_0, %c0_i32_1 : i32, i32, i32
  }
  func.func @transform_8(%arg0: i32) -> (i32, i32, i32) {
    %c0_i32 = arith.constant 0 : i32
    %c0_i32_0 = arith.constant 0 : i32
    %c0_i32_1 = arith.constant 0 : i32
    %c0_i32_2 = arith.constant 0 : i32
    return %c0_i32, %c0_i32_0, %c0_i32_1 : i32, i32, i32
  }
  func.func @transform_9(%arg0: i32) -> (i32, i32, i32) {
    %c0_i32 = arith.constant 0 : i32
    %c0_i32_0 = arith.constant 0 : i32
    %c0_i32_1 = arith.constant 0 : i32
    %c0_i32_2 = arith.constant 0 : i32
    return %c0_i32, %c0_i32_0, %c0_i32_1 : i32, i32, i32
  }
  func.func @transform_10(%arg0: i32) -> (i32, i32, i32) {
    %c0_i32 = arith.constant 0 : i32
    %c0_i32_0 = arith.constant 0 : i32
    %c0_i32_1 = arith.constant 0 : i32
    %c0_i32_2 = arith.constant 0 : i32
    return %c0_i32, %c0_i32_0, %c0_i32_1 : i32, i32, i32
  }
  func.func @transform_11(%arg0: i32) -> (i32, i32, i32) {
    %c0_i32 = arith.constant 0 : i32
    %c0_i32_0 = arith.constant 0 : i32
    %c0_i32_1 = arith.constant 0 : i32
    %c0_i32_2 = arith.constant 0 : i32
    return %c0_i32, %c0_i32_0, %c0_i32_1 : i32, i32, i32
  }
  func.func @transform_12(%arg0: i32) -> (i32, i32, i32) {
    %c0_i32 = arith.constant 0 : i32
    %c0_i32_0 = arith.constant 0 : i32
    %c0_i32_1 = arith.constant 0 : i32
    %c0_i32_2 = arith.constant 0 : i32
    return %c0_i32, %c0_i32_0, %c0_i32_1 : i32, i32, i32
  }
  func.func @transform_13(%arg0: i32) -> (i32, i32, i32) {
    %c0_i32 = arith.constant 0 : i32
    %c0_i32_0 = arith.constant 0 : i32
    %c0_i32_1 = arith.constant 0 : i32
    %c0_i32_2 = arith.constant 0 : i32
    return %c0_i32, %c0_i32_0, %c0_i32_1 : i32, i32, i32
  }
  func.func @transform_14(%arg0: i32) -> (i32, i32, i32) {
    %c0_i32 = arith.constant 0 : i32
    %c0_i32_0 = arith.constant 0 : i32
    %c0_i32_1 = arith.constant 0 : i32
    %c0_i32_2 = arith.constant 0 : i32
    return %c0_i32, %c0_i32_0, %c0_i32_1 : i32, i32, i32
  }
  func.func @transform_15(%arg0: i32) -> (i32, i32, i32) {
    %c0_i32 = arith.constant 0 : i32
    %c0_i32_0 = arith.constant 0 : i32
    %c0_i32_1 = arith.constant 0 : i32
    %c0_i32_2 = arith.constant 0 : i32
    return %c0_i32, %c0_i32_0, %c0_i32_1 : i32, i32, i32
  }
  func.func @transform_16(%arg0: i32) -> (i32, i32, i32) {
    %c0_i32 = arith.constant 0 : i32
    %c0_i32_0 = arith.constant 0 : i32
    %c0_i32_1 = arith.constant 0 : i32
    %c0_i32_2 = arith.constant 0 : i32
    return %c0_i32, %c0_i32_0, %c0_i32_1 : i32, i32, i32
  }
  func.func @transform_17(%arg0: i32) -> (i32, i32, i32) {
    %c0_i32 = arith.constant 0 : i32
    %c0_i32_0 = arith.constant 0 : i32
    %c0_i32_1 = arith.constant 0 : i32
    %c0_i32_2 = arith.constant 0 : i32
    return %c0_i32, %c0_i32_0, %c0_i32_1 : i32, i32, i32
  }
  func.func @transform_18(%arg0: i32) -> (i32, i32, i32) {
    %c0_i32 = arith.constant 0 : i32
    %c0_i32_0 = arith.constant 0 : i32
    %c0_i32_1 = arith.constant 0 : i32
    %c0_i32_2 = arith.constant 0 : i32
    return %c0_i32, %c0_i32_0, %c0_i32_1 : i32, i32, i32
  }
  func.func @transform_19(%arg0: i32) -> (i32, i32) {
    %c0_i32 = arith.constant 0 : i32
    %c0_i32_0 = arith.constant 0 : i32
    %c0_i32_1 = arith.constant 0 : i32
    return %c0_i32, %c0_i32_0 : i32, i32
  }
  func.func @transform_20(%arg0: i32) -> (i32, i32) {
    %c0_i32 = arith.constant 0 : i32
    %c0_i32_0 = arith.constant 0 : i32
    %c0_i32_1 = arith.constant 0 : i32
    return %c0_i32, %c0_i32_0 : i32, i32
  }
  func.func @transform_21(%arg0: i32) -> (i32, i32) {
    %c0_i32 = arith.constant 0 : i32
    %c0_i32_0 = arith.constant 0 : i32
    %c0_i32_1 = arith.constant 0 : i32
    return %c0_i32, %c0_i32_0 : i32, i32
  }
  func.func @transform_22(%arg0: i32) -> (i32, i32) {
    %c0_i32 = arith.constant 0 : i32
    %c0_i32_0 = arith.constant 0 : i32
    %c0_i32_1 = arith.constant 0 : i32
    return %c0_i32, %c0_i32_0 : i32, i32
  }
  func.func @transform_23(%arg0: i32) -> (i32, i32) {
    %c0_i32 = arith.constant 0 : i32
    %c0_i32_0 = arith.constant 0 : i32
    %c0_i32_1 = arith.constant 0 : i32
    return %c0_i32, %c0_i32_0 : i32, i32
  }
  func.func @transform_24(%arg0: i32) -> (i32, i32) {
    %c0_i32 = arith.constant 0 : i32
    %c0_i32_0 = arith.constant 0 : i32
    %c0_i32_1 = arith.constant 0 : i32
    return %c0_i32, %c0_i32_0 : i32, i32
  }
  func.func @transform_25(%arg0: i32) -> (i32, i32) {
    %c0_i32 = arith.constant 0 : i32
    %c0_i32_0 = arith.constant 0 : i32
    %c0_i32_1 = arith.constant 0 : i32
    return %c0_i32, %c0_i32_0 : i32, i32
  }
  func.func @transform_26(%arg0: i32) -> (i32, i32, i32) {
    %c0_i32 = arith.constant 0 : i32
    %c0_i32_0 = arith.constant 0 : i32
    %c0_i32_1 = arith.constant 0 : i32
    %c0_i32_2 = arith.constant 0 : i32
    return %c0_i32, %c0_i32_0, %c0_i32_1 : i32, i32, i32
  }
}

</mosaic_0001>

<llo_original>
// kernel: forward.1
$region0: #{forward.1}
  #allocation0 [shape = 'u32[]', space=smem, size = 0x4, offset = 0x4, fixed_abs, tag = 'smem constant byte address 0x4 - core index']
  #allocation1 [shape = 'u32[72,128]{1,0:T(1,128)}', space=vmem, size = 0x9000, scoped, tag = 'internal scratch']
  %s0 = inlined_call_operand.vmem [shape: s32[16,8], index: 0, kind: input, shape index: {}]
  %s1 = inlined_call_operand.vmem [shape: f32[2,8], index: 1, kind: input, shape index: {}]
  %s2 = inlined_call_operand.vmem [shape: f32[128,32], index: 2, kind: input, shape index: {}]
  %s3 = inlined_call_operand.vmem [shape: f32[32,32], index: 3, kind: input, shape index: {}]
  %s4 = inlined_call_operand.vmem [shape: f32[2,32], index: 4, kind: input, shape index: {}]
  %s5 = inlined_call_operand.vmem [shape: f32[1,32], index: 5, kind: input, shape index: {}]
  %s6 = inlined_call_operand.vmem [shape: f32[1,32], index: 6, kind: input, shape index: {}]
  %s7 = inlined_call_operand.vmem [shape: bf16[12,32,16], index: 7, kind: input, shape index: {}]
  %s8 = inlined_call_operand.vmem [shape: f32[12,1,16], index: 8, kind: input, shape index: {}]
  %s9 = inlined_call_operand.vmem [shape: bf16[4,16,32], index: 9, kind: input, shape index: {}]
  %s10 = inlined_call_operand.vmem [shape: f32[2,1,32], index: 10, kind: input, shape index: {}]
  %s11 = inlined_call_operand.vmem [shape: f32[2,1,32], index: 11, kind: input, shape index: {}]
  %s12 = inlined_call_operand.vmem [shape: f32[2,1,32], index: 12, kind: input, shape index: {}]
  %s13 = inlined_call_operand.vmem [shape: bf16[2,32,64], index: 13, kind: input, shape index: {}]
  %s14 = inlined_call_operand.vmem [shape: f32[2,1,64], index: 14, kind: input, shape index: {}]
  %s15 = inlined_call_operand.vmem [shape: bf16[2,64,32], index: 15, kind: input, shape index: {}]
  %s16 = inlined_call_operand.vmem [shape: f32[2,1,32], index: 16, kind: input, shape index: {}]
  %s17 = inlined_call_operand.vmem [shape: f32[2,1,32], index: 17, kind: input, shape index: {}]
  %s18 = inlined_call_operand.vmem [shape: f32[2,1,32], index: 18, kind: input, shape index: {}]
  %s19 = inlined_call_operand.vmem [shape: bf16[32,128], index: 19, kind: input, shape index: {}]
  %s20 = inlined_call_operand.vmem [shape: f32[1,128], index: 20, kind: input, shape index: {}]
  %s21 = inlined_call_operand.vmem [shape: f32[1,128], index: 21, kind: input, shape index: {}]
  %s22 = inlined_call_operand.vmem [shape: f32[1,128], index: 22, kind: input, shape index: {}]
  %s23 = inlined_call_operand.vmem [shape: f32[128,128], index: 23, kind: input, shape index: {}]
  %s24 = inlined_call_operand.vmem [shape: f32[128,128], index: 24, kind: input, shape index: {}]
  %s25 = inlined_call_operand.hbm [shape: f32[1,1], index: 25, kind: output, shape index: {0}]
  %s26 = inlined_call_operand.vmem [shape: f32[2,8,128], index: 26, kind: output, shape index: {1}]
  %27 = xla_tuple %s25, %s26
  %s28 = sld [smem:[#allocation0]]
  $region118: #{forward.1} parent=0
    _
  %s30 = ssub.s32 1, %s28
  %s31 = scalar_select 0, %s30, %s28
  $region1: #{forward.1} parent=0
    #allocation2 [shape = 'u8[512]{0}', space=vmem, size = 0x400, scoped, tag = 'output window, operand 0, single buffered']
    #allocation3 [shape = 's32[1]{0}', space=sflag, size = 0x4, scoped, tag = 'scoped memory for forward.1']
    %32 = vsyncpa [#allocation3], 0
    // Predicated region
    $region2: #{forward.1} parent=1 // pred_check
      _
    $region3: #{forward.1} parent=1 // pred_check_branch
      %34 = sbr.rel (0) target = $region5
    $region4: #{forward.1} parent=1 // pred_region
      _
    $region5: #{forward.1} parent=1 // pred_fallthru
      _
    // Predicated region
    $region6: #{forward.1} parent=1 // pred_check
      _
    $region7: #{forward.1} parent=1 // pred_check_branch
      %36 = sbr.rel (0) target = $region9
    $region8: #{forward.1} parent=1 // pred_region
      _
    $region9: #{forward.1} parent=1 // pred_fallthru
      _
    // Predicated region
    $region10: #{forward.1} parent=1 // pred_check
      _
    $region11: #{forward.1} parent=1 // pred_check_branch
      %38 = sbr.rel (0) target = $region13
    $region12: #{forward.1} parent=1 // pred_region
      _
    $region13: #{forward.1} parent=1 // pred_fallthru
      _
    // Predicated region
    $region14: #{forward.1} parent=1 // pred_check
      _
    $region15: #{forward.1} parent=1 // pred_check_branch
      %40 = sbr.rel (0) target = $region17
    $region16: #{forward.1} parent=1 // pred_region
      _
    $region17: #{forward.1} parent=1 // pred_fallthru
      _
    // Predicated region
    $region18: #{forward.1} parent=1 // pred_check
      _
    $region19: #{forward.1} parent=1 // pred_check_branch
      %42 = sbr.rel (0) target = $region21
    $region20: #{forward.1} parent=1 // pred_region
      _
    $region21: #{forward.1} parent=1 // pred_fallthru
      _
    // Predicated region
    $region22: #{forward.1} parent=1 // pred_check
      _
    $region23: #{forward.1} parent=1 // pred_check_branch
      %44 = sbr.rel (0) target = $region25
    $region24: #{forward.1} parent=1 // pred_region
      _
    $region25: #{forward.1} parent=1 // pred_fallthru
      _
    // Predicated region
    $region26: #{forward.1} parent=1 // pred_check
      _
    $region27: #{forward.1} parent=1 // pred_check_branch
      %46 = sbr.rel (0) target = $region29
    $region28: #{forward.1} parent=1 // pred_region
      _
    $region29: #{forward.1} parent=1 // pred_fallthru
      _
    // Predicated region
    $region30: #{forward.1} parent=1 // pred_check
      _
    $region31: #{forward.1} parent=1 // pred_check_branch
      %48 = sbr.rel (0) target = $region33
    $region32: #{forward.1} parent=1 // pred_region
      _
    $region33: #{forward.1} parent=1 // pred_fallthru
      _
    // Predicated region
    $region34: #{forward.1} parent=1 // pred_check
      _
    $region35: #{forward.1} parent=1 // pred_check_branch
      %50 = sbr.rel (0) target = $region37
    $region36: #{forward.1} parent=1 // pred_region
      _
    $region37: #{forward.1} parent=1 // pred_fallthru
      _
    // Predicated region
    $region38: #{forward.1} parent=1 // pred_check
      _
    $region39: #{forward.1} parent=1 // pred_check_branch
      %52 = sbr.rel (0) target = $region41
    $region40: #{forward.1} parent=1 // pred_region
      _
    $region41: #{forward.1} parent=1 // pred_fallthru
      _
    // Predicated region
    $region42: #{forward.1} parent=1 // pred_check
      _
    $region43: #{forward.1} parent=1 // pred_check_branch
      %54 = sbr.rel (0) target = $region45
    $region44: #{forward.1} parent=1 // pred_region
      _
    $region45: #{forward.1} parent=1 // pred_fallthru
      _
    // Predicated region
    $region46: #{forward.1} parent=1 // pred_check
      _
    $region47: #{forward.1} parent=1 // pred_check_branch
      %56 = sbr.rel (0) target = $region49
    $region48: #{forward.1} parent=1 // pred_region
      _
    $region49: #{forward.1} parent=1 // pred_fallthru
      _
    // Predicated region
    $region50: #{forward.1} parent=1 // pred_check
      _
    $region51: #{forward.1} parent=1 // pred_check_branch
      %58 = sbr.rel (0) target = $region53
    $region52: #{forward.1} parent=1 // pred_region
      _
    $region53: #{forward.1} parent=1 // pred_fallthru
      _
    // Predicated region
    $region54: #{forward.1} parent=1 // pred_check
      _
    $region55: #{forward.1} parent=1 // pred_check_branch
      %60 = sbr.rel (0) target = $region57
    $region56: #{forward.1} parent=1 // pred_region
      _
    $region57: #{forward.1} parent=1 // pred_fallthru
      _
    // Predicated region
    $region58: #{forward.1} parent=1 // pred_check
      _
    $region59: #{forward.1} parent=1 // pred_check_branch
      %62 = sbr.rel (0) target = $region61
    $region60: #{forward.1} parent=1 // pred_region
      _
    $region61: #{forward.1} parent=1 // pred_fallthru
      _
    // Predicated region
    $region62: #{forward.1} parent=1 // pred_check
      _
    $region63: #{forward.1} parent=1 // pred_check_branch
      %64 = sbr.rel (0) target = $region65
    $region64: #{forward.1} parent=1 // pred_region
      _
    $region65: #{forward.1} parent=1 // pred_fallthru
      _
    // Predicated region
    $region66: #{forward.1} parent=1 // pred_check
      _
    $region67: #{forward.1} parent=1 // pred_check_branch
      %66 = sbr.rel (0) target = $region69
    $region68: #{forward.1} parent=1 // pred_region
      _
    $region69: #{forward.1} parent=1 // pred_fallthru
      _
    // Predicated region
    $region70: #{forward.1} parent=1 // pred_check
      _
    $region71: #{forward.1} parent=1 // pred_check_branch
      %68 = sbr.rel (0) target = $region73
    $region72: #{forward.1} parent=1 // pred_region
      _
    $region73: #{forward.1} parent=1 // pred_fallthru
      _
    // Predicated region
    $region74: #{forward.1} parent=1 // pred_check
      _
    $region75: #{forward.1} parent=1 // pred_check_branch
      %70 = sbr.rel (0) target = $region77
    $region76: #{forward.1} parent=1 // pred_region
      _
    $region77: #{forward.1} parent=1 // pred_fallthru
      _
    // Predicated region
    $region78: #{forward.1} parent=1 // pred_check
      _
    $region79: #{forward.1} parent=1 // pred_check_branch
      %72 = sbr.rel (0) target = $region81
    $region80: #{forward.1} parent=1 // pred_region
      _
    $region81: #{forward.1} parent=1 // pred_fallthru
      _
    // Predicated region
    $region82: #{forward.1} parent=1 // pred_check
      _
    $region83: #{forward.1} parent=1 // pred_check_branch
      %74 = sbr.rel (0) target = $region85
    $region84: #{forward.1} parent=1 // pred_region
      _
    $region85: #{forward.1} parent=1 // pred_fallthru
      _
    // Predicated region
    $region86: #{forward.1} parent=1 // pred_check
      _
    $region87: #{forward.1} parent=1 // pred_check_branch
      %76 = sbr.rel (0) target = $region89
    $region88: #{forward.1} parent=1 // pred_region
      _
    $region89: #{forward.1} parent=1 // pred_fallthru
      _
    // Predicated region
    $region90: #{forward.1} parent=1 // pred_check
      _
    $region91: #{forward.1} parent=1 // pred_check_branch
      %78 = sbr.rel (0) target = $region93
    $region92: #{forward.1} parent=1 // pred_region
      _
    $region93: #{forward.1} parent=1 // pred_fallthru
      _
    // Predicated region
    $region94: #{forward.1} parent=1 // pred_check
      _
    $region95: #{forward.1} parent=1 // pred_check_branch
      %80 = sbr.rel (0) target = $region97
    $region96: #{forward.1} parent=1 // pred_region
      _
    $region97: #{forward.1} parent=1 // pred_fallthru
      _
    // Predicated region
    $region98: #{forward.1} parent=1 // pred_check
      _
    $region99: #{forward.1} parent=1 // pred_check_branch
      %82 = sbr.rel (0) target = $region101
    $region100: #{forward.1} parent=1 // pred_region
      _
    $region101: #{forward.1} parent=1 // pred_fallthru
      _
    %v84 = vld [vmem:[%s0] sm:$0xff]
    %v85 = vld [vmem:[%s0 + $0x8] sm:$0xff]
    %v86 = vcvt.s32.f32 %v84
    %v87 = vcvt.s32.f32 %v85
    %v88 = vlaneseq
    %v89 = vand.u32 %v88, 127
    %90 = vset.pattern.permute.xlu0 0
    %91 = vperm.xlu0 %90, %v84
    %v92 = vpop.permute.xlu0 %91
    %93 = vset.pattern.permute.xlu0 0
    %94 = vperm.xlu0 %93, %v85
    %v95 = vpop.permute.xlu0 %94
    %vm96 = vcmp.eq.s32.totalorder %v89, %v92
    %vm97 = vcmp.eq.s32.totalorder %v89, %v95
    %v98 = vsel %vm96, 1, 0
    %v99 = vsel %vm97, 1, 0
    %v100 = vcvt.s32.f32 %v98
    %v101 = vcvt.s32.f32 %v99
    %v102 = vld [vmem:[%s2] sm:$0xff]
    %v103 = vld [vmem:[%s2 + $0x8] sm:$0xff]
    %v104 = vld [vmem:[%s2 + $0x10] sm:$0xff]
    %v105 = vld [vmem:[%s2 + $0x18] sm:$0xff]
    %v106 = vld [vmem:[%s2 + $0x20] sm:$0xff]
    %v107 = vld [vmem:[%s2 + $0x28] sm:$0xff]
    %v108 = vld [vmem:[%s2 + $0x30] sm:$0xff]
    %v109 = vld [vmem:[%s2 + $0x38] sm:$0xff]
    %v110 = vld [vmem:[%s2 + $0x40] sm:$0xff]
    %v111 = vld [vmem:[%s2 + $0x48] sm:$0xff]
    %v112 = vld [vmem:[%s2 + $0x50] sm:$0xff]
    %v113 = vld [vmem:[%s2 + $0x58] sm:$0xff]
    %v114 = vld [vmem:[%s2 + $0x60] sm:$0xff]
    %v115 = vld [vmem:[%s2 + $0x68] sm:$0xff]
    %v116 = vld [vmem:[%s2 + $0x70] sm:$0xff]
    %v117 = vld [vmem:[%s2 + $0x78] sm:$0xff]
    %118 = vmatpush.msra.mxu0 %v117
    %119 = vmatpush.msra.mxu0 %v116
    %120 = vmatpush.msra.mxu0 %v115
    %121 = vmatpush.msra.mxu0 %v114
    %122 = vmatpush.msra.mxu0 %v113
    %123 = vmatpush.msra.mxu0 %v112
    %124 = vmatpush.msra.mxu0 %v111
    %125 = vmatpush.msra.mxu0 %v110
    %126 = vmatpush.msra.mxu0 %v109
    %127 = vmatpush.msra.mxu0 %v108
    %128 = vmatpush.msra.mxu0 %v107
    %129 = vmatpush.msra.mxu0 %v106
    %130 = vmatpush.msra.mxu0 %v105
    %131 = vmatpush.msra.mxu0 %v104
    %132 = vmatpush.msra.mxu0 %v103
    %133 = vmatpush.msra.mxu0 %v102
    %134 = vmatmul.f32.gmra.mxu0 %v100
    %v135 = vpop.f32.mrf.mxu0
    %v136 = vadd.f32 0.0, %v135
    %137 = vmatmul.f32.gmra.mxu0 %v101
    %v138 = vpop.f32.mrf.mxu0
    %v139 = vadd.f32 0.0, %v138
    %140 = vdwg.mxu0
    %v141 = vld [vmem:[%s3] sm:$0xff]
    %v142 = vadd.f32 %v136, %v141
    %v143 = vadd.f32 %v139, %v141
    %v144 = vld [vmem:[%s4] sm:$0x1]
    %v145 = vld [vmem:[%s4 + $0x1] sm:$0x1]
    %v146 = vperm.slane %v144, 0
    %v147 = vadd.f32 %v142, %v146
    %v148 = vadd.f32 %v143, %v146
    %v149 = vsub.f32 %v145, %v144
    %151 = vset.pattern.permute.xlu0 1
    %152 = vperm.xlu0 %151, %v86
    %v153 = vpop.permute.xlu0 %152
    %156 = vset.pattern.permute.xlu0 1
    %157 = vperm.xlu0 %156, %v87
    %v158 = vpop.permute.xlu0 %157
    %v160 = vperm.slane %v149, 0
    %v161 = vmul.f32 %v153, %v160
    %v162 = vmul.f32 %v158, %v160
    %v163 = vadd.f32 %v147, %v161
    %v164 = vadd.f32 %v148, %v162
    %v165 = vld [vmem:[%s5] sm:$0x1]
    %v166 = vld [vmem:[%s6] sm:$0x1]
    %vm167 = vcmask 261120
    %v168 = vsel %vm167, %v163, 0.0
    %169 = vadd.xlane.f32.xlu0 %v168
    %v170 = vpop.xlane.xlu0 %169
    %v171 = vsel %vm167, %v164, 0.0
    %172 = vadd.xlane.f32.xlu0 %v171
    %v173 = vpop.xlane.xlu0 %172
    %v174 = vrcp.pop 32.0
    %v175 = vmul.f32 32.0, %v174
    %v176 = vsub.f32 1.0, %v175
    %v177 = vmul.f32 %v174, %v176
    %v178 = vadd.f32 %v174, %v177
    %vm179 = vweird.f32 %v174
    %v180 = vsel %vm179, %v174, %v178
    %v181 = vmul.f32 %v170, %v180
    %v182 = vmul.f32 %v173, %v180
    %v183 = vsub.f32 %v163, %v181
    %v184 = vsub.f32 %v164, %v182
    %v185 = vmul.f32 %v183, %v183
    %v186 = vmul.f32 %v184, %v184
    %v187 = vsel %vm167, %v185, 0.0
    %188 = vadd.xlane.f32.xlu0 %v187
    %v189 = vpop.xlane.xlu0 %188
    %v190 = vsel %vm167, %v186, 0.0
    %191 = vadd.xlane.f32.xlu0 %v190
    %v192 = vpop.xlane.xlu0 %191
    %v193 = vmul.f32 %v189, %v180
    %v194 = vmul.f32 %v192, %v180
    %v195 = vadd.f32 %v193, 1e-12
    %v196 = vadd.f32 %v194, 1e-12
    %v197 = vrsqrt.pop %v195
    %v198 = vmul.f32 %v197, %v195
    %v199 = vmul.f32 %v198, %v197
    %v200 = vmul.f32 0.5, %v199
    %v201 = vsub.f32 1.5, %v200
    %v202 = vmul.f32 %v197, %v201
    %vm203 = vweird.f32 %v195
    %vm204 = vweird.f32 %v197
    %vm205 = vmor %vm203, %vm204
    %v206 = vsel %vm205, %v197, %v202
    %v207 = vrsqrt.pop %v196
    %v208 = vmul.f32 %v207, %v196
    %v209 = vmul.f32 %v208, %v207
    %v210 = vmul.f32 0.5, %v209
    %v211 = vsub.f32 1.5, %v210
    %v212 = vmul.f32 %v207, %v211
    %vm213 = vweird.f32 %v196
    %vm214 = vweird.f32 %v207
    %vm215 = vmor %vm213, %vm214
    %v216 = vsel %vm215, %v207, %v212
    %v217 = vmul.f32 %v183, %v206
    %v218 = vmul.f32 %v184, %v216
    %v220 = vperm.slane %v165, 0
    %v222 = vmul.f32 %v217, %v220
    %v223 = vmul.f32 %v218, %v220
    %v225 = vperm.slane %v166, 0
    %v227 = vadd.f32 %v222, %v225
    %v228 = vadd.f32 %v223, %v225
    %v229 = vld [vmem:[%s1] sm:$0x3]
    %v230 = vsub.f32 1.0, %v229
    %v231 = vmul.f32 %v230, -10000.0
    %v233 = vrot.slane %v231, 1
    %v234 = vperm.slane %v231, 0
    %v235 = vperm.slane %v233, 0
    %v238 = vld [vmem:[%s10] sm:$0x1]
    %v239 = vld [vmem:[%s7] sm:$0xf]
    %v240 = vld [vmem:[%s7 + $0x4] sm:$0xf]
    %v241 = vld [vmem:[%s7 + $0x8] sm:$0xf]
    %v242 = vld [vmem:[%s7 + $0xc] sm:$0xf]
    %v243 = vpack.c.bf16 %v228, %v227
    %v244 = vld [vmem:[%s8] sm:$0x1]
    %v246 = vperm.slane %v244, 0
    %v252 = vunpack.c.l.b16 %v239
    %v253 = vunpack.c.l.b16 %v240
    %v254 = vunpack.c.l.b16 %v241
    %v255 = vunpack.c.l.b16 %v242
    %v256 = vpack.c.b16 %v253, %v252
    %v257 = vpack.c.b16 %v255, %v254
    %v261 = vsel %vm167, %v243, 0
    %263 = vmatpush.bf16.msra.mxu0 0
    %264 = vmatpush.bf16.msra.mxu0 0
    %265 = vmatpush.bf16.msra.mxu0 0
    %266 = vmatpush.bf16.msra.mxu0 0
    %267 = vmatpush.bf16.msra.mxu0 0
    %268 = vmatpush.bf16.msra.mxu0 0
    %269 = vmatpush.bf16.msra.mxu0 %v257
    %270 = vmatpush.bf16.msra.mxu0 %v256
    %271 = vmatmul.bf16.gmra.mxu0 %v261
    %v272 = vpop.f32.mrf.mxu0
    %v273 = vadd.f32 %v246, %v272
    %v274 = vpop.f32.mrf.mxu0
    %v275 = vadd.f32 %v246, %v274
    %276 = vdwg.mxu0
    %s277 = scalar_lea.vmem %s7, 16
    %v278 = vld [vmem:[%s277] sm:$0xf]
    %v279 = vld [vmem:[%s277 + $0x4] sm:$0xf]
    %v280 = vld [vmem:[%s277 + $0x8] sm:$0xf]
    %v281 = vld [vmem:[%s277 + $0xc] sm:$0xf]
    %s282 = scalar_lea.vmem %s8, 1
    %v283 = vld [vmem:[%s282] sm:$0x1]
    %v285 = vperm.slane %v283, 0
    %v291 = vunpack.c.l.b16 %v278
    %v292 = vunpack.c.l.b16 %v279
    %v293 = vunpack.c.l.b16 %v280
    %v294 = vunpack.c.l.b16 %v281
    %v295 = vpack.c.b16 %v292, %v291
    %v296 = vpack.c.b16 %v294, %v293
    %299 = vmatpush.bf16.msra.mxu0 0
    %300 = vmatpush.bf16.msra.mxu0 0
    %301 = vmatpush.bf16.msra.mxu0 0
    %302 = vmatpush.bf16.msra.mxu0 0
    %303 = vmatpush.bf16.msra.mxu0 0
    %304 = vmatpush.bf16.msra.mxu0 0
    %305 = vmatpush.bf16.msra.mxu0 %v296
    %306 = vmatpush.bf16.msra.mxu0 %v295
    %307 = vmatmul.bf16.gmra.mxu0 %v261
    %v308 = vpop.f32.mrf.mxu0
    %v309 = vadd.f32 %v285, %v308
    %v310 = vpop.f32.mrf.mxu0
    %v311 = vadd.f32 %v285, %v310
    %312 = vdwg.mxu0
    %s313 = scalar_lea.vmem %s7, 32
    %v314 = vld [vmem:[%s313] sm:$0xf]
    %v315 = vld [vmem:[%s313 + $0x4] sm:$0xf]
    %v316 = vld [vmem:[%s313 + $0x8] sm:$0xf]
    %v317 = vld [vmem:[%s313 + $0xc] sm:$0xf]
    %s318 = scalar_lea.vmem %s8, 2
    %v319 = vld [vmem:[%s318] sm:$0x1]
    %v321 = vperm.slane %v319, 0
    %v327 = vunpack.c.l.b16 %v314
    %v328 = vunpack.c.l.b16 %v315
    %v329 = vunpack.c.l.b16 %v316
    %v330 = vunpack.c.l.b16 %v317
    %v331 = vpack.c.b16 %v328, %v327
    %v332 = vpack.c.b16 %v330, %v329
    %335 = vmatpush.bf16.msra.mxu0 0
    %336 = vmatpush.bf16.msra.mxu0 0
    %337 = vmatpush.bf16.msra.mxu0 0
    %338 = vmatpush.bf16.msra.mxu0 0
    %339 = vmatpush.bf16.msra.mxu0 0
    %340 = vmatpush.bf16.msra.mxu0 0
    %341 = vmatpush.bf16.msra.mxu0 %v332
    %342 = vmatpush.bf16.msra.mxu0 %v331
    %343 = vmatmul.bf16.gmra.mxu0 %v261
    %v344 = vpop.f32.mrf.mxu0
    %v345 = vadd.f32 %v321, %v344
    %v346 = vpop.f32.mrf.mxu0
    %v347 = vadd.f32 %v321, %v346
    %348 = vdwg.mxu0
    %v349 = vpack.c.bf16 %v273, %v273
    %v350 = vpack.c.bf16 %v275, %v275
    %v351 = vpack.c.bf16 %v309, %v309
    %v352 = vpack.c.bf16 %v311, %v311
    %vm353 = vcmask 130048
    %v355 = vsel %vm353, %v349, 0
    %v358 = vsel %vm353, %v351, 0
    %360 = vmatpush.bf16.xpose.msra.mxu0 0
    %361 = vmatpush.bf16.xpose.msra.mxu0 0
    %362 = vmatpush.bf16.xpose.msra.mxu0 0
    %363 = vmatpush.bf16.xpose.msra.mxu0 0
    %364 = vmatpush.bf16.xpose.msra.mxu0 0
    %365 = vmatpush.bf16.xpose.msra.mxu0 0
    %366 = vmatpush.bf16.xpose.msra.mxu0 0
    %367 = vmatpush.bf16.xpose.msra.mxu0 %v358
    %368 = vmatmul.bf16.gmra.mxu0 %v355
    %v369 = vpop.f32.mrf.mxu0
    %v370 = vadd.f32 0.0, %v369
    %v371 = vpop.f32.mrf.mxu0
    %372 = vdwg.mxu0
    %v374 = vsel %vm353, %v350, 0
    %v377 = vsel %vm353, %v352, 0
    %379 = vmatpush.bf16.xpose.msra.mxu0 0
    %380 = vmatpush.bf16.xpose.msra.mxu0 0
    %381 = vmatpush.bf16.xpose.msra.mxu0 0
    %382 = vmatpush.bf16.xpose.msra.mxu0 0
    %383 = vmatpush.bf16.xpose.msra.mxu0 0
    %384 = vmatpush.bf16.xpose.msra.mxu0 0
    %385 = vmatpush.bf16.xpose.msra.mxu0 0
    %386 = vmatpush.bf16.xpose.msra.mxu0 %v377
    %387 = vmatmul.bf16.gmra.mxu0 %v374
    %v388 = vpop.f32.mrf.mxu0
    %v389 = vadd.f32 0.0, %v388
    %v390 = vpop.f32.mrf.mxu0
    %391 = vdwg.mxu0
    %v392 = vmul.f32 %v370, 0.25
    %v393 = vmul.f32 %v389, 0.25
    %v394 = vadd.f32 %v392, %v234
    %v395 = vadd.f32 %v393, %v235
    %vm396 = vcmask 64512
    %v397 = vsel %vm396, %v394, -inf
    %398 = vmax.xlane.f32.xlu0 %v397
    %v399 = vpop.xlane.xlu0 %398
    %v400 = vsel %vm396, %v395, -inf
    %401 = vmax.xlane.f32.xlu0 %v400
    %v402 = vpop.xlane.xlu0 %401
    %v403 = vsub.f32 %v394, %v399
    %v404 = vsub.f32 %v395, %v402
    %v405 = vmul.f32 %v403, 1.442695
    %v406 = vpow.pop %v405
    %v407 = vmul.f32 %v404, 1.442695
    %v408 = vpow.pop %v407
    %v409 = vsel %vm396, %v406, 0.0
    %410 = vadd.xlane.f32.xlu0 %v409
    %v411 = vpop.xlane.xlu0 %410
    %v412 = vsel %vm396, %v408, 0.0
    %413 = vadd.xlane.f32.xlu0 %v412
    %v414 = vpop.xlane.xlu0 %413
    %v415 = vrcp.pop %v411
    %v416 = vmul.f32 %v411, %v415
    %v417 = vsub.f32 1.0, %v416
    %v418 = vmul.f32 %v415, %v417
    %v419 = vadd.f32 %v415, %v418
    %vm420 = vweird.f32 %v411
    %vm421 = vweird.f32 %v415
    %vm422 = vmor %vm420, %vm421
    %v423 = vsel %vm422, %v415, %v419
    %v424 = vand.u32 2147483647, %v411
    %vm425 = vcmp.eq.f32.partialorder %v424, 8.507059e+37
    %v426 = vand.u32 %v411, 2147483648
    %v427 = vor.u32 1.1754944e-38, %v426
    %v428 = vsel %vm425, %v427, %v423
    %v429 = vmul.f32 %v406, %v428
    %v430 = vrcp.pop %v414
    %v431 = vmul.f32 %v414, %v430
    %v432 = vsub.f32 1.0, %v431
    %v433 = vmul.f32 %v430, %v432
    %v434 = vadd.f32 %v430, %v433
    %vm435 = vweird.f32 %v414
    %vm436 = vweird.f32 %v430
    %vm437 = vmor %vm435, %vm436
    %v438 = vsel %vm437, %v430, %v434
    %v439 = vand.u32 2147483647, %v414
    %vm440 = vcmp.eq.f32.partialorder %v439, 8.507059e+37
    %v441 = vand.u32 %v414, 2147483648
    %v442 = vor.u32 1.1754944e-38, %v441
    %v443 = vsel %vm440, %v442, %v438
    %v444 = vmul.f32 %v408, %v443
    %v445 = vpack.c.bf16 %v429, %v429
    %v446 = vpack.c.bf16 %v444, %v444
    %v447 = vpack.c.bf16 %v345, %v345
    %v448 = vpack.c.bf16 %v347, %v347
    %v450 = vsel %vm396, %v445, 0
    %vm452 = vcmask 1043456
    %v454 = vsel %vm452, %v447, 0
    %456 = vmatpush.bf16.msra.mxu0 0
    %457 = vmatpush.bf16.msra.mxu0 0
    %458 = vmatpush.bf16.msra.mxu0 0
    %459 = vmatpush.bf16.msra.mxu0 0
    %460 = vmatpush.bf16.msra.mxu0 0
    %461 = vmatpush.bf16.msra.mxu0 0
    %462 = vmatpush.bf16.msra.mxu0 0
    %463 = vmatpush.bf16.msra.mxu0 %v454
    %464 = vmatmul.bf16.gmra.mxu0 %v450
    %v465 = vpop.f32.mrf.mxu0
    %v466 = vadd.f32 0.0, %v465
    %v467 = vpop.f32.mrf.mxu0
    %468 = vdwg.mxu0
    %v470 = vsel %vm396, %v446, 0
    %v473 = vsel %vm452, %v448, 0
    %475 = vmatpush.bf16.msra.mxu0 0
    %476 = vmatpush.bf16.msra.mxu0 0
    %477 = vmatpush.bf16.msra.mxu0 0
    %478 = vmatpush.bf16.msra.mxu0 0
    %479 = vmatpush.bf16.msra.mxu0 0
    %480 = vmatpush.bf16.msra.mxu0 0
    %481 = vmatpush.bf16.msra.mxu0 0
    %482 = vmatpush.bf16.msra.mxu0 %v473
    %483 = vmatmul.bf16.gmra.mxu0 %v470
    %v484 = vpop.f32.mrf.mxu0
    %v485 = vadd.f32 0.0, %v484
    %v486 = vpop.f32.mrf.mxu0
    %487 = vdwg.mxu0
    %v488 = vld [vmem:[%s9] sm:$0xf]
    %v489 = vld [vmem:[%s9 + $0x4] sm:$0xf]
    %v490 = vpack.c.bf16 %v485, %v466
    %v493 = vunpack.c.l.b16 %v488
    %v494 = vunpack.c.l.b16 %v489
    %v495 = vpack.c.b16 %v494, %v493
    %v498 = vsel %vm353, %v490, 0
    %500 = vmatpush.bf16.msra.mxu0 0
    %501 = vmatpush.bf16.msra.mxu0 0
    %502 = vmatpush.bf16.msra.mxu0 0
    %503 = vmatpush.bf16.msra.mxu0 0
    %504 = vmatpush.bf16.msra.mxu0 0
    %505 = vmatpush.bf16.msra.mxu0 0
    %506 = vmatpush.bf16.msra.mxu0 0
    %507 = vmatpush.bf16.msra.mxu0 %v495
    %508 = vmatmul.bf16.gmra.mxu0 %v498
    %v509 = vpop.f32.mrf.mxu0
    %v510 = vadd.f32 0.0, %v509
    %v511 = vpop.f32.mrf.mxu0
    %v512 = vadd.f32 0.0, %v511
    %513 = vdwg.mxu0
    %v515 = vperm.slane %v238, 0
    %v517 = vadd.f32 %v515, %v510
    %v518 = vadd.f32 %v515, %v512
    %s519 = scalar_lea.vmem %s7, 48
    %v520 = vld [vmem:[%s519] sm:$0xf]
    %v521 = vld [vmem:[%s519 + $0x4] sm:$0xf]
    %v522 = vld [vmem:[%s519 + $0x8] sm:$0xf]
    %v523 = vld [vmem:[%s519 + $0xc] sm:$0xf]
    %s524 = scalar_lea.vmem %s8, 3
    %v525 = vld [vmem:[%s524] sm:$0x1]
    %v527 = vperm.slane %v525, 0
    %v533 = vunpack.c.l.b16 %v520
    %v534 = vunpack.c.l.b16 %v521
    %v535 = vunpack.c.l.b16 %v522
    %v536 = vunpack.c.l.b16 %v523
    %v537 = vpack.c.b16 %v534, %v533
    %v538 = vpack.c.b16 %v536, %v535
    %541 = vmatpush.bf16.msra.mxu0 0
    %542 = vmatpush.bf16.msra.mxu0 0
    %543 = vmatpush.bf16.msra.mxu0 0
    %544 = vmatpush.bf16.msra.mxu0 0
    %545 = vmatpush.bf16.msra.mxu0 0
    %546 = vmatpush.bf16.msra.mxu0 0
    %547 = vmatpush.bf16.msra.mxu0 %v538
    %548 = vmatpush.bf16.msra.mxu0 %v537
    %549 = vmatmul.bf16.gmra.mxu0 %v261
    %v550 = vpop.f32.mrf.mxu0
    %v551 = vadd.f32 %v527, %v550
    %v552 = vpop.f32.mrf.mxu0
    %v553 = vadd.f32 %v527, %v552
    %554 = vdwg.mxu0
    %s555 = scalar_lea.vmem %s7, 64
    %v556 = vld [vmem:[%s555] sm:$0xf]
    %v557 = vld [vmem:[%s555 + $0x4] sm:$0xf]
    %v558 = vld [vmem:[%s555 + $0x8] sm:$0xf]
    %v559 = vld [vmem:[%s555 + $0xc] sm:$0xf]
    %s560 = scalar_lea.vmem %s8, 4
    %v561 = vld [vmem:[%s560] sm:$0x1]
    %v563 = vperm.slane %v561, 0
    %v569 = vunpack.c.l.b16 %v556
    %v570 = vunpack.c.l.b16 %v557
    %v571 = vunpack.c.l.b16 %v558
    %v572 = vunpack.c.l.b16 %v559
    %v573 = vpack.c.b16 %v570, %v569
    %v574 = vpack.c.b16 %v572, %v571
    %577 = vmatpush.bf16.msra.mxu0 0
    %578 = vmatpush.bf16.msra.mxu0 0
    %579 = vmatpush.bf16.msra.mxu0 0
    %580 = vmatpush.bf16.msra.mxu0 0
    %581 = vmatpush.bf16.msra.mxu0 0
    %582 = vmatpush.bf16.msra.mxu0 0
    %583 = vmatpush.bf16.msra.mxu0 %v574
    %584 = vmatpush.bf16.msra.mxu0 %v573
    %585 = vmatmul.bf16.gmra.mxu0 %v261
    %v586 = vpop.f32.mrf.mxu0
    %v587 = vadd.f32 %v563, %v586
    %v588 = vpop.f32.mrf.mxu0
    %v589 = vadd.f32 %v563, %v588
    %590 = vdwg.mxu0
    %s591 = scalar_lea.vmem %s7, 80
    %v592 = vld [vmem:[%s591] sm:$0xf]
    %v593 = vld [vmem:[%s591 + $0x4] sm:$0xf]
    %v594 = vld [vmem:[%s591 + $0x8] sm:$0xf]
    %v595 = vld [vmem:[%s591 + $0xc] sm:$0xf]
    %s596 = scalar_lea.vmem %s8, 5
    %v597 = vld [vmem:[%s596] sm:$0x1]
    %v599 = vperm.slane %v597, 0
    %v605 = vunpack.c.l.b16 %v592
    %v606 = vunpack.c.l.b16 %v593
    %v607 = vunpack.c.l.b16 %v594
    %v608 = vunpack.c.l.b16 %v595
    %v609 = vpack.c.b16 %v606, %v605
    %v610 = vpack.c.b16 %v608, %v607
    %613 = vmatpush.bf16.msra.mxu0 0
    %614 = vmatpush.bf16.msra.mxu0 0
    %615 = vmatpush.bf16.msra.mxu0 0
    %616 = vmatpush.bf16.msra.mxu0 0
    %617 = vmatpush.bf16.msra.mxu0 0
    %618 = vmatpush.bf16.msra.mxu0 0
    %619 = vmatpush.bf16.msra.mxu0 %v610
    %620 = vmatpush.bf16.msra.mxu0 %v609
    %621 = vmatmul.bf16.gmra.mxu0 %v261
    %v622 = vpop.f32.mrf.mxu0
    %v623 = vadd.f32 %v599, %v622
    %v624 = vpop.f32.mrf.mxu0
    %v625 = vadd.f32 %v599, %v624
    %626 = vdwg.mxu0
    %v627 = vpack.c.bf16 %v551, %v551
    %v628 = vpack.c.bf16 %v553, %v553
    %v629 = vpack.c.bf16 %v587, %v587
    %v630 = vpack.c.bf16 %v589, %v589
    %v632 = vsel %vm353, %v627, 0
    %v635 = vsel %vm353, %v629, 0
    %637 = vmatpush.bf16.xpose.msra.mxu0 0
    %638 = vmatpush.bf16.xpose.msra.mxu0 0
    %639 = vmatpush.bf16.xpose.msra.mxu0 0
    %640 = vmatpush.bf16.xpose.msra.mxu0 0
    %641 = vmatpush.bf16.xpose.msra.mxu0 0
    %642 = vmatpush.bf16.xpose.msra.mxu0 0
    %643 = vmatpush.bf16.xpose.msra.mxu0 0
    %644 = vmatpush.bf16.xpose.msra.mxu0 %v635
    %645 = vmatmul.bf16.gmra.mxu0 %v632
    %v646 = vpop.f32.mrf.mxu0
    %v647 = vadd.f32 0.0, %v646
    %v648 = vpop.f32.mrf.mxu0
    %649 = vdwg.mxu0
    %v651 = vsel %vm353, %v628, 0
    %v654 = vsel %vm353, %v630, 0
    %656 = vmatpush.bf16.xpose.msra.mxu0 0
    %657 = vmatpush.bf16.xpose.msra.mxu0 0
    %658 = vmatpush.bf16.xpose.msra.mxu0 0
    %659 = vmatpush.bf16.xpose.msra.mxu0 0
    %660 = vmatpush.bf16.xpose.msra.mxu0 0
    %661 = vmatpush.bf16.xpose.msra.mxu0 0
    %662 = vmatpush.bf16.xpose.msra.mxu0 0
    %663 = vmatpush.bf16.xpose.msra.mxu0 %v654
    %664 = vmatmul.bf16.gmra.mxu0 %v651
    %v665 = vpop.f32.mrf.mxu0
    %v666 = vadd.f32 0.0, %v665
    %v667 = vpop.f32.mrf.mxu0
    %668 = vdwg.mxu0
    %v669 = vmul.f32 %v647, 0.25
    %v670 = vmul.f32 %v666, 0.25
    %v671 = vadd.f32 %v669, %v234
    %v672 = vadd.f32 %v670, %v235
    %v673 = vsel %vm396, %v671, -inf
    %674 = vmax.xlane.f32.xlu0 %v673
    %v675 = vpop.xlane.xlu0 %674
    %v676 = vsel %vm396, %v672, -inf
    %677 = vmax.xlane.f32.xlu0 %v676
    %v678 = vpop.xlane.xlu0 %677
    %v679 = vsub.f32 %v671, %v675
    %v680 = vsub.f32 %v672, %v678
    %v681 = vmul.f32 %v679, 1.442695
    %v682 = vpow.pop %v681
    %v683 = vmul.f32 %v680, 1.442695
    %v684 = vpow.pop %v683
    %v685 = vsel %vm396, %v682, 0.0
    %686 = vadd.xlane.f32.xlu0 %v685
    %v687 = vpop.xlane.xlu0 %686
    %v688 = vsel %vm396, %v684, 0.0
    %689 = vadd.xlane.f32.xlu0 %v688
    %v690 = vpop.xlane.xlu0 %689
    %v691 = vrcp.pop %v687
    %v692 = vmul.f32 %v687, %v691
    %v693 = vsub.f32 1.0, %v692
    %v694 = vmul.f32 %v691, %v693
    %v695 = vadd.f32 %v691, %v694
    %vm696 = vweird.f32 %v687
    %vm697 = vweird.f32 %v691
    %vm698 = vmor %vm696, %vm697
    %v699 = vsel %vm698, %v691, %v695
    %v700 = vand.u32 2147483647, %v687
    %vm701 = vcmp.eq.f32.partialorder %v700, 8.507059e+37
    %v702 = vand.u32 %v687, 2147483648
    %v703 = vor.u32 1.1754944e-38, %v702
    %v704 = vsel %vm701, %v703, %v699
    %v705 = vmul.f32 %v682, %v704
    %v706 = vrcp.pop %v690
    %v707 = vmul.f32 %v690, %v706
    %v708 = vsub.f32 1.0, %v707
    %v709 = vmul.f32 %v706, %v708
    %v710 = vadd.f32 %v706, %v709
    %vm711 = vweird.f32 %v690
    %vm712 = vweird.f32 %v706
    %vm713 = vmor %vm711, %vm712
    %v714 = vsel %vm713, %v706, %v710
    %v715 = vand.u32 2147483647, %v690
    %vm716 = vcmp.eq.f32.partialorder %v715, 8.507059e+37
    %v717 = vand.u32 %v690, 2147483648
    %v718 = vor.u32 1.1754944e-38, %v717
    %v719 = vsel %vm716, %v718, %v714
    %v720 = vmul.f32 %v684, %v719
    %v721 = vpack.c.bf16 %v705, %v705
    %v722 = vpack.c.bf16 %v720, %v720
    %v723 = vpack.c.bf16 %v623, %v623
    %v724 = vpack.c.bf16 %v625, %v625
    %v726 = vsel %vm396, %v721, 0
    %v729 = vsel %vm452, %v723, 0
    %731 = vmatpush.bf16.msra.mxu0 0
    %732 = vmatpush.bf16.msra.mxu0 0
    %733 = vmatpush.bf16.msra.mxu0 0
    %734 = vmatpush.bf16.msra.mxu0 0
    %735 = vmatpush.bf16.msra.mxu0 0
    %736 = vmatpush.bf16.msra.mxu0 0
    %737 = vmatpush.bf16.msra.mxu0 0
    %738 = vmatpush.bf16.msra.mxu0 %v729
    %739 = vmatmul.bf16.gmra.mxu0 %v726
    %v740 = vpop.f32.mrf.mxu0
    %v741 = vadd.f32 0.0, %v740
    %v742 = vpop.f32.mrf.mxu0
    %743 = vdwg.mxu0
    %v745 = vsel %vm396, %v722, 0
    %v748 = vsel %vm452, %v724, 0
    %750 = vmatpush.bf16.msra.mxu0 0
    %751 = vmatpush.bf16.msra.mxu0 0
    %752 = vmatpush.bf16.msra.mxu0 0
    %753 = vmatpush.bf16.msra.mxu0 0
    %754 = vmatpush.bf16.msra.mxu0 0
    %755 = vmatpush.bf16.msra.mxu0 0
    %756 = vmatpush.bf16.msra.mxu0 0
    %757 = vmatpush.bf16.msra.mxu0 %v748
    %758 = vmatmul.bf16.gmra.mxu0 %v745
    %v759 = vpop.f32.mrf.mxu0
    %v760 = vadd.f32 0.0, %v759
    %v761 = vpop.f32.mrf.mxu0
    %762 = vdwg.mxu0
    %s763 = scalar_lea.vmem %s9, 8
    %v764 = vld [vmem:[%s763] sm:$0xf]
    %v765 = vld [vmem:[%s763 + $0x4] sm:$0xf]
    %v766 = vpack.c.bf16 %v760, %v741
    %v769 = vunpack.c.l.b16 %v764
    %v770 = vunpack.c.l.b16 %v765
    %v771 = vpack.c.b16 %v770, %v769
    %v774 = vsel %vm353, %v766, 0
    %776 = vmatpush.bf16.msra.mxu0 0
    %777 = vmatpush.bf16.msra.mxu0 0
    %778 = vmatpush.bf16.msra.mxu0 0
    %779 = vmatpush.bf16.msra.mxu0 0
    %780 = vmatpush.bf16.msra.mxu0 0
    %781 = vmatpush.bf16.msra.mxu0 0
    %782 = vmatpush.bf16.msra.mxu0 0
    %783 = vmatpush.bf16.msra.mxu0 %v771
    %784 = vmatmul.bf16.gmra.mxu0 %v774
    %v785 = vpop.f32.mrf.mxu0
    %v786 = vadd.f32 0.0, %v785
    %v787 = vpop.f32.mrf.mxu0
    %v788 = vadd.f32 0.0, %v787
    %789 = vdwg.mxu0
    %v790 = vadd.f32 %v517, %v786
    %v791 = vadd.f32 %v518, %v788
    %v792 = vadd.f32 %v227, %v790
    %v793 = vadd.f32 %v228, %v791
    %v794 = vld [vmem:[%s11] sm:$0x1]
    %v795 = vld [vmem:[%s12] sm:$0x1]
    %v796 = vsel %vm167, %v792, 0.0
    %797 = vadd.xlane.f32.xlu0 %v796
    %v798 = vpop.xlane.xlu0 %797
    %v799 = vsel %vm167, %v793, 0.0
    %800 = vadd.xlane.f32.xlu0 %v799
    %v801 = vpop.xlane.xlu0 %800
    %v802 = vmul.f32 %v798, %v180
    %v803 = vmul.f32 %v801, %v180
    %v804 = vsub.f32 %v792, %v802
    %v805 = vsub.f32 %v793, %v803
    %v806 = vmul.f32 %v804, %v804
    %v807 = vmul.f32 %v805, %v805
    %v808 = vsel %vm167, %v806, 0.0
    %809 = vadd.xlane.f32.xlu0 %v808
    %v810 = vpop.xlane.xlu0 %809
    %v811 = vsel %vm167, %v807, 0.0
    %812 = vadd.xlane.f32.xlu0 %v811
    %v813 = vpop.xlane.xlu0 %812
    %v814 = vmul.f32 %v810, %v180
    %v815 = vmul.f32 %v813, %v180
    %v816 = vadd.f32 %v814, 1e-12
    %v817 = vadd.f32 %v815, 1e-12
    %v818 = vrsqrt.pop %v816
    %v819 = vmul.f32 %v818, %v816
    %v820 = vmul.f32 %v819, %v818
    %v821 = vmul.f32 0.5, %v820
    %v822 = vsub.f32 1.5, %v821
    %v823 = vmul.f32 %v818, %v822
    %vm824 = vweird.f32 %v816
    %vm825 = vweird.f32 %v818
    %vm826 = vmor %vm824, %vm825
    %v827 = vsel %vm826, %v818, %v823
    %v828 = vrsqrt.pop %v817
    %v829 = vmul.f32 %v828, %v817
    %v830 = vmul.f32 %v829, %v828
    %v831 = vmul.f32 0.5, %v830
    %v832 = vsub.f32 1.5, %v831
    %v833 = vmul.f32 %v828, %v832
    %vm834 = vweird.f32 %v817
    %vm835 = vweird.f32 %v828
    %vm836 = vmor %vm834, %vm835
    %v837 = vsel %vm836, %v828, %v833
    %v838 = vmul.f32 %v804, %v827
    %v839 = vmul.f32 %v805, %v837
    %v841 = vperm.slane %v794, 0
    %v843 = vmul.f32 %v838, %v841
    %v844 = vmul.f32 %v839, %v841
    %v846 = vperm.slane %v795, 0
    %v848 = vadd.f32 %v843, %v846
    %v849 = vadd.f32 %v844, %v846
    %v850 = vld [vmem:[%s13] sm:$0xf]
    %v851 = vld [vmem:[%s13 + $0x4] sm:$0xf]
    %v852 = vld [vmem:[%s13 + $0x8] sm:$0xf]
    %v853 = vld [vmem:[%s13 + $0xc] sm:$0xf]
    %v854 = vpack.c.bf16 %v849, %v848
    %v855 = vld [vmem:[%s14] sm:$0x1]
    %v857 = vperm.slane %v855, 0
    %v863 = vunpack.c.l.b16 %v850
    %v864 = vunpack.c.l.b16 %v851
    %v865 = vunpack.c.l.b16 %v852
    %v866 = vunpack.c.l.b16 %v853
    %v867 = vpack.c.b16 %v864, %v863
    %v868 = vpack.c.b16 %v866, %v865
    %v872 = vsel %vm167, %v854, 0
    %874 = vmatpush.bf16.msra.mxu0 0
    %875 = vmatpush.bf16.msra.mxu0 0
    %876 = vmatpush.bf16.msra.mxu0 0
    %877 = vmatpush.bf16.msra.mxu0 0
    %878 = vmatpush.bf16.msra.mxu0 0
    %879 = vmatpush.bf16.msra.mxu0 0
    %880 = vmatpush.bf16.msra.mxu0 %v868
    %881 = vmatpush.bf16.msra.mxu0 %v867
    %882 = vmatmul.bf16.gmra.mxu0 %v872
    %v883 = vpop.f32.mrf.mxu0
    %v884 = vadd.f32 %v857, %v883
    %v885 = vpop.f32.mrf.mxu0
    %v886 = vadd.f32 %v857, %v885
    %887 = vdwg.mxu0
    %v888 = vmul.f32 %v884, %v884
    %v889 = vmul.f32 %v886, %v886
    %v890 = vmul.f32 %v884, %v888
    %v891 = vmul.f32 %v886, %v889
    %v892 = vmul.f32 %v890, 0.044715
    %v893 = vmul.f32 %v891, 0.044715
    %v894 = vadd.f32 %v884, %v892
    %v895 = vadd.f32 %v886, %v893
    %v896 = vmul.f32 %v894, 0.7978846
    %v897 = vmul.f32 %v895, 0.7978846
    %v898 = vtanh.pop %v896
    %v899 = vtanh.pop %v897
    %v900 = vadd.f32 %v898, 1.0
    %v901 = vadd.f32 %v899, 1.0
    %v902 = vmul.f32 %v900, 0.5
    %v903 = vmul.f32 %v901, 0.5
    %v904 = vmul.f32 %v884, %v902
    %v905 = vmul.f32 %v886, %v903
    %v906 = vld [vmem:[%s15] sm:$0xf]
    %v907 = vld [vmem:[%s15 + $0x4] sm:$0xf]
    %v908 = vld [vmem:[%s15 + $0x8] sm:$0xf]
    %v909 = vld [vmem:[%s15 + $0xc] sm:$0xf]
    %v910 = vld [vmem:[%s15 + $0x10] sm:$0xf]
    %v911 = vld [vmem:[%s15 + $0x14] sm:$0xf]
    %v912 = vld [vmem:[%s15 + $0x18] sm:$0xf]
    %v913 = vld [vmem:[%s15 + $0x1c] sm:$0xf]
    %v914 = vpack.c.bf16 %v905, %v904
    %v923 = vunpack.c.l.b16 %v906
    %v924 = vunpack.c.l.b16 %v907
    %v925 = vunpack.c.l.b16 %v908
    %v926 = vunpack.c.l.b16 %v909
    %v927 = vunpack.c.l.b16 %v910
    %v928 = vunpack.c.l.b16 %v911
    %v929 = vunpack.c.l.b16 %v912
    %v930 = vunpack.c.l.b16 %v913
    %v931 = vpack.c.b16 %v924, %v923
    %v932 = vpack.c.b16 %v926, %v925
    %v933 = vpack.c.b16 %v928, %v927
    %v934 = vpack.c.b16 %v930, %v929
    %vm939 = vcmask 523264
    %v941 = vsel %vm939, %v914, 0
    %943 = vmatpush.bf16.msra.mxu0 0
    %944 = vmatpush.bf16.msra.mxu0 0
    %945 = vmatpush.bf16.msra.mxu0 0
    %946 = vmatpush.bf16.msra.mxu0 0
    %947 = vmatpush.bf16.msra.mxu0 %v934
    %948 = vmatpush.bf16.msra.mxu0 %v933
    %949 = vmatpush.bf16.msra.mxu0 %v932
    %950 = vmatpush.bf16.msra.mxu0 %v931
    %951 = vmatmul.bf16.gmra.mxu0 %v941
    %v952 = vpop.f32.mrf.mxu0
    %v953 = vadd.f32 0.0, %v952
    %v954 = vpop.f32.mrf.mxu0
    %v955 = vadd.f32 0.0, %v954
    %956 = vdwg.mxu0
    %v957 = vadd.f32 %v848, %v953
    %v958 = vadd.f32 %v849, %v955
    %v959 = vld [vmem:[%s16] sm:$0x1]
    %v961 = vperm.slane %v959, 0
    %v963 = vadd.f32 %v957, %v961
    %v964 = vadd.f32 %v958, %v961
    %v965 = vld [vmem:[%s17] sm:$0x1]
    %v966 = vld [vmem:[%s18] sm:$0x1]
    %v967 = vsel %vm167, %v963, 0.0
    %968 = vadd.xlane.f32.xlu0 %v967
    %v969 = vpop.xlane.xlu0 %968
    %v970 = vsel %vm167, %v964, 0.0
    %971 = vadd.xlane.f32.xlu0 %v970
    %v972 = vpop.xlane.xlu0 %971
    %v973 = vmul.f32 %v969, %v180
    %v974 = vmul.f32 %v972, %v180
    %v975 = vsub.f32 %v963, %v973
    %v976 = vsub.f32 %v964, %v974
    %v977 = vmul.f32 %v975, %v975
    %v978 = vmul.f32 %v976, %v976
    %v979 = vsel %vm167, %v977, 0.0
    %980 = vadd.xlane.f32.xlu0 %v979
    %v981 = vpop.xlane.xlu0 %980
    %v982 = vsel %vm167, %v978, 0.0
    %983 = vadd.xlane.f32.xlu0 %v982
    %v984 = vpop.xlane.xlu0 %983
    %v985 = vmul.f32 %v981, %v180
    %v986 = vmul.f32 %v984, %v180
    %v987 = vadd.f32 %v985, 1e-12
    %v988 = vadd.f32 %v986, 1e-12
    %v989 = vrsqrt.pop %v987
    %v990 = vmul.f32 %v989, %v987
    %v991 = vmul.f32 %v990, %v989
    %v992 = vmul.f32 0.5, %v991
    %v993 = vsub.f32 1.5, %v992
    %v994 = vmul.f32 %v989, %v993
    %vm995 = vweird.f32 %v987
    %vm996 = vweird.f32 %v989
    %vm997 = vmor %vm995, %vm996
    %v998 = vsel %vm997, %v989, %v994
    %v999 = vrsqrt.pop %v988
    %v1000 = vmul.f32 %v999, %v988
    %v1001 = vmul.f32 %v1000, %v999
    %v1002 = vmul.f32 0.5, %v1001
    %v1003 = vsub.f32 1.5, %v1002
    %v1004 = vmul.f32 %v999, %v1003
    %vm1005 = vweird.f32 %v988
    %vm1006 = vweird.f32 %v999
    %vm1007 = vmor %vm1005, %vm1006
    %v1008 = vsel %vm1007, %v999, %v1004
    %v1009 = vmul.f32 %v975, %v998
    %v1010 = vmul.f32 %v976, %v1008
    %v1012 = vperm.slane %v965, 0
    %v1014 = vmul.f32 %v1009, %v1012
    %v1015 = vmul.f32 %v1010, %v1012
    %v1017 = vperm.slane %v966, 0
    %v1019 = vadd.f32 %v1014, %v1017
    %v1020 = vadd.f32 %v1015, %v1017
    %s1021 = scalar_lea.vmem %s10, 1
    %v1022 = vld [vmem:[%s1021] sm:$0x1]
    %s1023 = scalar_lea.vmem %s7, 96
    %v1024 = vld [vmem:[%s1023] sm:$0xf]
    %v1025 = vld [vmem:[%s1023 + $0x4] sm:$0xf]
    %v1026 = vld [vmem:[%s1023 + $0x8] sm:$0xf]
    %v1027 = vld [vmem:[%s1023 + $0xc] sm:$0xf]
    %v1028 = vpack.c.bf16 %v1020, %v1019
    %s1029 = scalar_lea.vmem %s8, 6
    %v1030 = vld [vmem:[%s1029] sm:$0x1]
    %v1032 = vperm.slane %v1030, 0
    %v1038 = vunpack.c.l.b16 %v1024
    %v1039 = vunpack.c.l.b16 %v1025
    %v1040 = vunpack.c.l.b16 %v1026
    %v1041 = vunpack.c.l.b16 %v1027
    %v1042 = vpack.c.b16 %v1039, %v1038
    %v1043 = vpack.c.b16 %v1041, %v1040
    %v1047 = vsel %vm167, %v1028, 0
    %1049 = vmatpush.bf16.msra.mxu0 0
    %1050 = vmatpush.bf16.msra.mxu0 0
    %1051 = vmatpush.bf16.msra.mxu0 0
    %1052 = vmatpush.bf16.msra.mxu0 0
    %1053 = vmatpush.bf16.msra.mxu0 0
    %1054 = vmatpush.bf16.msra.mxu0 0
    %1055 = vmatpush.bf16.msra.mxu0 %v1043
    %1056 = vmatpush.bf16.msra.mxu0 %v1042
    %1057 = vmatmul.bf16.gmra.mxu0 %v1047
    %v1058 = vpop.f32.mrf.mxu0
    %v1059 = vadd.f32 %v1032, %v1058
    %v1060 = vpop.f32.mrf.mxu0
    %v1061 = vadd.f32 %v1032, %v1060
    %1062 = vdwg.mxu0
    %s1063 = scalar_lea.vmem %s7, 112
    %v1064 = vld [vmem:[%s1063] sm:$0xf]
    %v1065 = vld [vmem:[%s1063 + $0x4] sm:$0xf]
    %v1066 = vld [vmem:[%s1063 + $0x8] sm:$0xf]
    %v1067 = vld [vmem:[%s1063 + $0xc] sm:$0xf]
    %s1068 = scalar_lea.vmem %s8, 7
    %v1069 = vld [vmem:[%s1068] sm:$0x1]
    %v1071 = vperm.slane %v1069, 0
    %v1077 = vunpack.c.l.b16 %v1064
    %v1078 = vunpack.c.l.b16 %v1065
    %v1079 = vunpack.c.l.b16 %v1066
    %v1080 = vunpack.c.l.b16 %v1067
    %v1081 = vpack.c.b16 %v1078, %v1077
    %v1082 = vpack.c.b16 %v1080, %v1079
    %1085 = vmatpush.bf16.msra.mxu0 0
    %1086 = vmatpush.bf16.msra.mxu0 0
    %1087 = vmatpush.bf16.msra.mxu0 0
    %1088 = vmatpush.bf16.msra.mxu0 0
    %1089 = vmatpush.bf16.msra.mxu0 0
    %1090 = vmatpush.bf16.msra.mxu0 0
    %1091 = vmatpush.bf16.msra.mxu0 %v1082
    %1092 = vmatpush.bf16.msra.mxu0 %v1081
    %1093 = vmatmul.bf16.gmra.mxu0 %v1047
    %v1094 = vpop.f32.mrf.mxu0
    %v1095 = vadd.f32 %v1071, %v1094
    %v1096 = vpop.f32.mrf.mxu0
    %v1097 = vadd.f32 %v1071, %v1096
    %1098 = vdwg.mxu0
    %s1099 = scalar_lea.vmem %s7, 128
    %v1100 = vld [vmem:[%s1099] sm:$0xf]
    %v1101 = vld [vmem:[%s1099 + $0x4] sm:$0xf]
    %v1102 = vld [vmem:[%s1099 + $0x8] sm:$0xf]
    %v1103 = vld [vmem:[%s1099 + $0xc] sm:$0xf]
    %s1104 = scalar_lea.vmem %s8, 8
    %v1105 = vld [vmem:[%s1104] sm:$0x1]
    %v1107 = vperm.slane %v1105, 0
    %v1113 = vunpack.c.l.b16 %v1100
    %v1114 = vunpack.c.l.b16 %v1101
    %v1115 = vunpack.c.l.b16 %v1102
    %v1116 = vunpack.c.l.b16 %v1103
    %v1117 = vpack.c.b16 %v1114, %v1113
    %v1118 = vpack.c.b16 %v1116, %v1115
    %1121 = vmatpush.bf16.msra.mxu0 0
    %1122 = vmatpush.bf16.msra.mxu0 0
    %1123 = vmatpush.bf16.msra.mxu0 0
    %1124 = vmatpush.bf16.msra.mxu0 0
    %1125 = vmatpush.bf16.msra.mxu0 0
    %1126 = vmatpush.bf16.msra.mxu0 0
    %1127 = vmatpush.bf16.msra.mxu0 %v1118
    %1128 = vmatpush.bf16.msra.mxu0 %v1117
    %1129 = vmatmul.bf16.gmra.mxu0 %v1047
    %v1130 = vpop.f32.mrf.mxu0
    %v1131 = vadd.f32 %v1107, %v1130
    %v1132 = vpop.f32.mrf.mxu0
    %v1133 = vadd.f32 %v1107, %v1132
    %1134 = vdwg.mxu0
    %v1135 = vpack.c.bf16 %v1059, %v1059
    %v1136 = vpack.c.bf16 %v1061, %v1061
    %v1137 = vpack.c.bf16 %v1095, %v1095
    %v1138 = vpack.c.bf16 %v1097, %v1097
    %v1140 = vsel %vm353, %v1135, 0
    %v1143 = vsel %vm353, %v1137, 0
    %1145 = vmatpush.bf16.xpose.msra.mxu0 0
    %1146 = vmatpush.bf16.xpose.msra.mxu0 0
    %1147 = vmatpush.bf16.xpose.msra.mxu0 0
    %1148 = vmatpush.bf16.xpose.msra.mxu0 0
    %1149 = vmatpush.bf16.xpose.msra.mxu0 0
    %1150 = vmatpush.bf16.xpose.msra.mxu0 0
    %1151 = vmatpush.bf16.xpose.msra.mxu0 0
    %1152 = vmatpush.bf16.xpose.msra.mxu0 %v1143
    %1153 = vmatmul.bf16.gmra.mxu0 %v1140
    %v1154 = vpop.f32.mrf.mxu0
    %v1155 = vadd.f32 0.0, %v1154
    %v1156 = vpop.f32.mrf.mxu0
    %1157 = vdwg.mxu0
    %v1159 = vsel %vm353, %v1136, 0
    %v1162 = vsel %vm353, %v1138, 0
    %1164 = vmatpush.bf16.xpose.msra.mxu0 0
    %1165 = vmatpush.bf16.xpose.msra.mxu0 0
    %1166 = vmatpush.bf16.xpose.msra.mxu0 0
    %1167 = vmatpush.bf16.xpose.msra.mxu0 0
    %1168 = vmatpush.bf16.xpose.msra.mxu0 0
    %1169 = vmatpush.bf16.xpose.msra.mxu0 0
    %1170 = vmatpush.bf16.xpose.msra.mxu0 0
    %1171 = vmatpush.bf16.xpose.msra.mxu0 %v1162
    %1172 = vmatmul.bf16.gmra.mxu0 %v1159
    %v1173 = vpop.f32.mrf.mxu0
    %v1174 = vadd.f32 0.0, %v1173
    %v1175 = vpop.f32.mrf.mxu0
    %1176 = vdwg.mxu0
    %v1177 = vmul.f32 %v1155, 0.25
    %v1178 = vmul.f32 %v1174, 0.25
    %v1179 = vadd.f32 %v1177, %v234
    %v1180 = vadd.f32 %v1178, %v235
    %v1181 = vsel %vm396, %v1179, -inf
    %1182 = vmax.xlane.f32.xlu0 %v1181
    %v1183 = vpop.xlane.xlu0 %1182
    %v1184 = vsel %vm396, %v1180, -inf
    %1185 = vmax.xlane.f32.xlu0 %v1184
    %v1186 = vpop.xlane.xlu0 %1185
    %v1187 = vsub.f32 %v1179, %v1183
    %v1188 = vsub.f32 %v1180, %v1186
    %v1189 = vmul.f32 %v1187, 1.442695
    %v1190 = vpow.pop %v1189
    %v1191 = vmul.f32 %v1188, 1.442695
    %v1192 = vpow.pop %v1191
    %v1193 = vsel %vm396, %v1190, 0.0
    %1194 = vadd.xlane.f32.xlu0 %v1193
    %v1195 = vpop.xlane.xlu0 %1194
    %v1196 = vsel %vm396, %v1192, 0.0
    %1197 = vadd.xlane.f32.xlu0 %v1196
    %v1198 = vpop.xlane.xlu0 %1197
    %v1199 = vrcp.pop %v1195
    %v1200 = vmul.f32 %v1195, %v1199
    %v1201 = vsub.f32 1.0, %v1200
    %v1202 = vmul.f32 %v1199, %v1201
    %v1203 = vadd.f32 %v1199, %v1202
    %vm1204 = vweird.f32 %v1195
    %vm1205 = vweird.f32 %v1199
    %vm1206 = vmor %vm1204, %vm1205
    %v1207 = vsel %vm1206, %v1199, %v1203
    %v1208 = vand.u32 2147483647, %v1195
    %vm1209 = vcmp.eq.f32.partialorder %v1208, 8.507059e+37
    %v1210 = vand.u32 %v1195, 2147483648
    %v1211 = vor.u32 1.1754944e-38, %v1210
    %v1212 = vsel %vm1209, %v1211, %v1207
    %v1213 = vmul.f32 %v1190, %v1212
    %v1214 = vrcp.pop %v1198
    %v1215 = vmul.f32 %v1198, %v1214
    %v1216 = vsub.f32 1.0, %v1215
    %v1217 = vmul.f32 %v1214, %v1216
    %v1218 = vadd.f32 %v1214, %v1217
    %vm1219 = vweird.f32 %v1198
    %vm1220 = vweird.f32 %v1214
    %vm1221 = vmor %vm1219, %vm1220
    %v1222 = vsel %vm1221, %v1214, %v1218
    %v1223 = vand.u32 2147483647, %v1198
    %vm1224 = vcmp.eq.f32.partialorder %v1223, 8.507059e+37
    %v1225 = vand.u32 %v1198, 2147483648
    %v1226 = vor.u32 1.1754944e-38, %v1225
    %v1227 = vsel %vm1224, %v1226, %v1222
    %v1228 = vmul.f32 %v1192, %v1227
    %v1229 = vpack.c.bf16 %v1213, %v1213
    %v1230 = vpack.c.bf16 %v1228, %v1228
    %v1231 = vpack.c.bf16 %v1131, %v1131
    %v1232 = vpack.c.bf16 %v1133, %v1133
    %v1234 = vsel %vm396, %v1229, 0
    %v1237 = vsel %vm452, %v1231, 0
    %1239 = vmatpush.bf16.msra.mxu0 0
    %1240 = vmatpush.bf16.msra.mxu0 0
    %1241 = vmatpush.bf16.msra.mxu0 0
    %1242 = vmatpush.bf16.msra.mxu0 0
    %1243 = vmatpush.bf16.msra.mxu0 0
    %1244 = vmatpush.bf16.msra.mxu0 0
    %1245 = vmatpush.bf16.msra.mxu0 0
    %1246 = vmatpush.bf16.msra.mxu0 %v1237
    %1247 = vmatmul.bf16.gmra.mxu0 %v1234
    %v1248 = vpop.f32.mrf.mxu0
    %v1249 = vadd.f32 0.0, %v1248
    %v1250 = vpop.f32.mrf.mxu0
    %1251 = vdwg.mxu0
    %v1253 = vsel %vm396, %v1230, 0
    %v1256 = vsel %vm452, %v1232, 0
    %1258 = vmatpush.bf16.msra.mxu0 0
    %1259 = vmatpush.bf16.msra.mxu0 0
    %1260 = vmatpush.bf16.msra.mxu0 0
    %1261 = vmatpush.bf16.msra.mxu0 0
    %1262 = vmatpush.bf16.msra.mxu0 0
    %1263 = vmatpush.bf16.msra.mxu0 0
    %1264 = vmatpush.bf16.msra.mxu0 0
    %1265 = vmatpush.bf16.msra.mxu0 %v1256
    %1266 = vmatmul.bf16.gmra.mxu0 %v1253
    %v1267 = vpop.f32.mrf.mxu0
    %v1268 = vadd.f32 0.0, %v1267
    %v1269 = vpop.f32.mrf.mxu0
    %1270 = vdwg.mxu0
    %s1271 = scalar_lea.vmem %s9, 16
    %v1272 = vld [vmem:[%s1271] sm:$0xf]
    %v1273 = vld [vmem:[%s1271 + $0x4] sm:$0xf]
    %v1274 = vpack.c.bf16 %v1268, %v1249
    %v1277 = vunpack.c.l.b16 %v1272
    %v1278 = vunpack.c.l.b16 %v1273
    %v1279 = vpack.c.b16 %v1278, %v1277
    %v1282 = vsel %vm353, %v1274, 0
    %1284 = vmatpush.bf16.msra.mxu0 0
    %1285 = vmatpush.bf16.msra.mxu0 0
    %1286 = vmatpush.bf16.msra.mxu0 0
    %1287 = vmatpush.bf16.msra.mxu0 0
    %1288 = vmatpush.bf16.msra.mxu0 0
    %1289 = vmatpush.bf16.msra.mxu0 0
    %1290 = vmatpush.bf16.msra.mxu0 0
    %1291 = vmatpush.bf16.msra.mxu0 %v1279
    %1292 = vmatmul.bf16.gmra.mxu0 %v1282
    %v1293 = vpop.f32.mrf.mxu0
    %v1294 = vadd.f32 0.0, %v1293
    %v1295 = vpop.f32.mrf.mxu0
    %v1296 = vadd.f32 0.0, %v1295
    %1297 = vdwg.mxu0
    %v1299 = vperm.slane %v1022, 0
    %v1301 = vadd.f32 %v1299, %v1294
    %v1302 = vadd.f32 %v1299, %v1296
    %s1303 = scalar_lea.vmem %s7, 144
    %v1304 = vld [vmem:[%s1303] sm:$0xf]
    %v1305 = vld [vmem:[%s1303 + $0x4] sm:$0xf]
    %v1306 = vld [vmem:[%s1303 + $0x8] sm:$0xf]
    %v1307 = vld [vmem:[%s1303 + $0xc] sm:$0xf]
    %s1308 = scalar_lea.vmem %s8, 9
    %v1309 = vld [vmem:[%s1308] sm:$0x1]
    %v1311 = vperm.slane %v1309, 0
    %v1317 = vunpack.c.l.b16 %v1304
    %v1318 = vunpack.c.l.b16 %v1305
    %v1319 = vunpack.c.l.b16 %v1306
    %v1320 = vunpack.c.l.b16 %v1307
    %v1321 = vpack.c.b16 %v1318, %v1317
    %v1322 = vpack.c.b16 %v1320, %v1319
    %1325 = vmatpush.bf16.msra.mxu0 0
    %1326 = vmatpush.bf16.msra.mxu0 0
    %1327 = vmatpush.bf16.msra.mxu0 0
    %1328 = vmatpush.bf16.msra.mxu0 0
    %1329 = vmatpush.bf16.msra.mxu0 0
    %1330 = vmatpush.bf16.msra.mxu0 0
    %1331 = vmatpush.bf16.msra.mxu0 %v1322
    %1332 = vmatpush.bf16.msra.mxu0 %v1321
    %1333 = vmatmul.bf16.gmra.mxu0 %v1047
    %v1334 = vpop.f32.mrf.mxu0
    %v1335 = vadd.f32 %v1311, %v1334
    %v1336 = vpop.f32.mrf.mxu0
    %v1337 = vadd.f32 %v1311, %v1336
    %1338 = vdwg.mxu0
    %s1339 = scalar_lea.vmem %s7, 160
    %v1340 = vld [vmem:[%s1339] sm:$0xf]
    %v1341 = vld [vmem:[%s1339 + $0x4] sm:$0xf]
    %v1342 = vld [vmem:[%s1339 + $0x8] sm:$0xf]
    %v1343 = vld [vmem:[%s1339 + $0xc] sm:$0xf]
    %s1344 = scalar_lea.vmem %s8, 10
    %v1345 = vld [vmem:[%s1344] sm:$0x1]
    %v1347 = vperm.slane %v1345, 0
    %v1353 = vunpack.c.l.b16 %v1340
    %v1354 = vunpack.c.l.b16 %v1341
    %v1355 = vunpack.c.l.b16 %v1342
    %v1356 = vunpack.c.l.b16 %v1343
    %v1357 = vpack.c.b16 %v1354, %v1353
    %v1358 = vpack.c.b16 %v1356, %v1355
    %1361 = vmatpush.bf16.msra.mxu0 0
    %1362 = vmatpush.bf16.msra.mxu0 0
    %1363 = vmatpush.bf16.msra.mxu0 0
    %1364 = vmatpush.bf16.msra.mxu0 0
    %1365 = vmatpush.bf16.msra.mxu0 0
    %1366 = vmatpush.bf16.msra.mxu0 0
    %1367 = vmatpush.bf16.msra.mxu0 %v1358
    %1368 = vmatpush.bf16.msra.mxu0 %v1357
    %1369 = vmatmul.bf16.gmra.mxu0 %v1047
    %v1370 = vpop.f32.mrf.mxu0
    %v1371 = vadd.f32 %v1347, %v1370
    %v1372 = vpop.f32.mrf.mxu0
    %v1373 = vadd.f32 %v1347, %v1372
    %1374 = vdwg.mxu0
    %s1375 = scalar_lea.vmem %s7, 176
    %v1376 = vld [vmem:[%s1375] sm:$0xf]
    %v1377 = vld [vmem:[%s1375 + $0x4] sm:$0xf]
    %v1378 = vld [vmem:[%s1375 + $0x8] sm:$0xf]
    %v1379 = vld [vmem:[%s1375 + $0xc] sm:$0xf]
    %s1380 = scalar_lea.vmem %s8, 11
    %v1381 = vld [vmem:[%s1380] sm:$0x1]
    %v1383 = vperm.slane %v1381, 0
    %v1389 = vunpack.c.l.b16 %v1376
    %v1390 = vunpack.c.l.b16 %v1377
    %v1391 = vunpack.c.l.b16 %v1378
    %v1392 = vunpack.c.l.b16 %v1379
    %v1393 = vpack.c.b16 %v1390, %v1389
    %v1394 = vpack.c.b16 %v1392, %v1391
    %1397 = vmatpush.bf16.msra.mxu0 0
    %1398 = vmatpush.bf16.msra.mxu0 0
    %1399 = vmatpush.bf16.msra.mxu0 0
    %1400 = vmatpush.bf16.msra.mxu0 0
    %1401 = vmatpush.bf16.msra.mxu0 0
    %1402 = vmatpush.bf16.msra.mxu0 0
    %1403 = vmatpush.bf16.msra.mxu0 %v1394
    %1404 = vmatpush.bf16.msra.mxu0 %v1393
    %1405 = vmatmul.bf16.gmra.mxu0 %v1047
    %v1406 = vpop.f32.mrf.mxu0
    %v1407 = vadd.f32 %v1383, %v1406
    %v1408 = vpop.f32.mrf.mxu0
    %v1409 = vadd.f32 %v1383, %v1408
    %1410 = vdwg.mxu0
    %v1411 = vpack.c.bf16 %v1335, %v1335
    %v1412 = vpack.c.bf16 %v1337, %v1337
    %v1413 = vpack.c.bf16 %v1371, %v1371
    %v1414 = vpack.c.bf16 %v1373, %v1373
    %v1416 = vsel %vm353, %v1411, 0
    %v1419 = vsel %vm353, %v1413, 0
    %1421 = vmatpush.bf16.xpose.msra.mxu0 0
    %1422 = vmatpush.bf16.xpose.msra.mxu0 0
    %1423 = vmatpush.bf16.xpose.msra.mxu0 0
    %1424 = vmatpush.bf16.xpose.msra.mxu0 0
    %1425 = vmatpush.bf16.xpose.msra.mxu0 0
    %1426 = vmatpush.bf16.xpose.msra.mxu0 0
    %1427 = vmatpush.bf16.xpose.msra.mxu0 0
    %1428 = vmatpush.bf16.xpose.msra.mxu0 %v1419
    %1429 = vmatmul.bf16.gmra.mxu0 %v1416
    %v1430 = vpop.f32.mrf.mxu0
    %v1431 = vadd.f32 0.0, %v1430
    %v1432 = vpop.f32.mrf.mxu0
    %1433 = vdwg.mxu0
    %v1435 = vsel %vm353, %v1412, 0
    %v1438 = vsel %vm353, %v1414, 0
    %1440 = vmatpush.bf16.xpose.msra.mxu0 0
    %1441 = vmatpush.bf16.xpose.msra.mxu0 0
    %1442 = vmatpush.bf16.xpose.msra.mxu0 0
    %1443 = vmatpush.bf16.xpose.msra.mxu0 0
    %1444 = vmatpush.bf16.xpose.msra.mxu0 0
    %1445 = vmatpush.bf16.xpose.msra.mxu0 0
    %1446 = vmatpush.bf16.xpose.msra.mxu0 0
    %1447 = vmatpush.bf16.xpose.msra.mxu0 %v1438
    %1448 = vmatmul.bf16.gmra.mxu0 %v1435
    %v1449 = vpop.f32.mrf.mxu0
    %v1450 = vadd.f32 0.0, %v1449
    %v1451 = vpop.f32.mrf.mxu0
    %1452 = vdwg.mxu0
    %v1453 = vmul.f32 %v1431, 0.25
    %v1454 = vmul.f32 %v1450, 0.25
    %v1455 = vadd.f32 %v1453, %v234
    %v1456 = vadd.f32 %v1454, %v235
    %v1457 = vsel %vm396, %v1455, -inf
    %1458 = vmax.xlane.f32.xlu0 %v1457
    %v1459 = vpop.xlane.xlu0 %1458
    %v1460 = vsel %vm396, %v1456, -inf
    %1461 = vmax.xlane.f32.xlu0 %v1460
    %v1462 = vpop.xlane.xlu0 %1461
    %v1463 = vsub.f32 %v1455, %v1459
    %v1464 = vsub.f32 %v1456, %v1462
    %v1465 = vmul.f32 %v1463, 1.442695
    %v1466 = vpow.pop %v1465
    %v1467 = vmul.f32 %v1464, 1.442695
    %v1468 = vpow.pop %v1467
    %v1469 = vsel %vm396, %v1466, 0.0
    %1470 = vadd.xlane.f32.xlu0 %v1469
    %v1471 = vpop.xlane.xlu0 %1470
    %v1472 = vsel %vm396, %v1468, 0.0
    %1473 = vadd.xlane.f32.xlu0 %v1472
    %v1474 = vpop.xlane.xlu0 %1473
    %v1475 = vrcp.pop %v1471
    %v1476 = vmul.f32 %v1471, %v1475
    %v1477 = vsub.f32 1.0, %v1476
    %v1478 = vmul.f32 %v1475, %v1477
    %v1479 = vadd.f32 %v1475, %v1478
    %vm1480 = vweird.f32 %v1471
    %vm1481 = vweird.f32 %v1475
    %vm1482 = vmor %vm1480, %vm1481
    %v1483 = vsel %vm1482, %v1475, %v1479
    %v1484 = vand.u32 2147483647, %v1471
    %vm1485 = vcmp.eq.f32.partialorder %v1484, 8.507059e+37
    %v1486 = vand.u32 %v1471, 2147483648
    %v1487 = vor.u32 1.1754944e-38, %v1486
    %v1488 = vsel %vm1485, %v1487, %v1483
    %v1489 = vmul.f32 %v1466, %v1488
    %v1490 = vrcp.pop %v1474
    %v1491 = vmul.f32 %v1474, %v1490
    %v1492 = vsub.f32 1.0, %v1491
    %v1493 = vmul.f32 %v1490, %v1492
    %v1494 = vadd.f32 %v1490, %v1493
    %vm1495 = vweird.f32 %v1474
    %vm1496 = vweird.f32 %v1490
    %vm1497 = vmor %vm1495, %vm1496
    %v1498 = vsel %vm1497, %v1490, %v1494
    %v1499 = vand.u32 2147483647, %v1474
    %vm1500 = vcmp.eq.f32.partialorder %v1499, 8.507059e+37
    %v1501 = vand.u32 %v1474, 2147483648
    %v1502 = vor.u32 1.1754944e-38, %v1501
    %v1503 = vsel %vm1500, %v1502, %v1498
    %v1504 = vmul.f32 %v1468, %v1503
    %v1505 = vpack.c.bf16 %v1489, %v1489
    %v1506 = vpack.c.bf16 %v1504, %v1504
    %v1507 = vpack.c.bf16 %v1407, %v1407
    %v1508 = vpack.c.bf16 %v1409, %v1409
    %v1510 = vsel %vm396, %v1505, 0
    %v1513 = vsel %vm452, %v1507, 0
    %1515 = vmatpush.bf16.msra.mxu0 0
    %1516 = vmatpush.bf16.msra.mxu0 0
    %1517 = vmatpush.bf16.msra.mxu0 0
    %1518 = vmatpush.bf16.msra.mxu0 0
    %1519 = vmatpush.bf16.msra.mxu0 0
    %1520 = vmatpush.bf16.msra.mxu0 0
    %1521 = vmatpush.bf16.msra.mxu0 0
    %1522 = vmatpush.bf16.msra.mxu0 %v1513
    %1523 = vmatmul.bf16.gmra.mxu0 %v1510
    %v1524 = vpop.f32.mrf.mxu0
    %v1525 = vadd.f32 0.0, %v1524
    %v1526 = vpop.f32.mrf.mxu0
    %1527 = vdwg.mxu0
    %v1529 = vsel %vm396, %v1506, 0
    %v1532 = vsel %vm452, %v1508, 0
    %1534 = vmatpush.bf16.msra.mxu0 0
    %1535 = vmatpush.bf16.msra.mxu0 0
    %1536 = vmatpush.bf16.msra.mxu0 0
    %1537 = vmatpush.bf16.msra.mxu0 0
    %1538 = vmatpush.bf16.msra.mxu0 0
    %1539 = vmatpush.bf16.msra.mxu0 0
    %1540 = vmatpush.bf16.msra.mxu0 0
    %1541 = vmatpush.bf16.msra.mxu0 %v1532
    %1542 = vmatmul.bf16.gmra.mxu0 %v1529
    %v1543 = vpop.f32.mrf.mxu0
    %v1544 = vadd.f32 0.0, %v1543
    %v1545 = vpop.f32.mrf.mxu0
    %1546 = vdwg.mxu0
    %s1547 = scalar_lea.vmem %s9, 24
    %v1548 = vld [vmem:[%s1547] sm:$0xf]
    %v1549 = vld [vmem:[%s1547 + $0x4] sm:$0xf]
    %v1550 = vpack.c.bf16 %v1544, %v1525
    %v1553 = vunpack.c.l.b16 %v1548
    %v1554 = vunpack.c.l.b16 %v1549
    %v1555 = vpack.c.b16 %v1554, %v1553
    %v1558 = vsel %vm353, %v1550, 0
    %1560 = vmatpush.bf16.msra.mxu0 0
    %1561 = vmatpush.bf16.msra.mxu0 0
    %1562 = vmatpush.bf16.msra.mxu0 0
    %1563 = vmatpush.bf16.msra.mxu0 0
    %1564 = vmatpush.bf16.msra.mxu0 0
    %1565 = vmatpush.bf16.msra.mxu0 0
    %1566 = vmatpush.bf16.msra.mxu0 0
    %1567 = vmatpush.bf16.msra.mxu0 %v1555
    %1568 = vmatmul.bf16.gmra.mxu0 %v1558
    %v1569 = vpop.f32.mrf.mxu0
    %v1570 = vadd.f32 0.0, %v1569
    %v1571 = vpop.f32.mrf.mxu0
    %v1572 = vadd.f32 0.0, %v1571
    %1573 = vdwg.mxu0
    %v1574 = vadd.f32 %v1301, %v1570
    %v1575 = vadd.f32 %v1302, %v1572
    %v1576 = vadd.f32 %v1019, %v1574
    %v1577 = vadd.f32 %v1020, %v1575
    %s1578 = scalar_lea.vmem %s11, 1
    %v1579 = vld [vmem:[%s1578] sm:$0x1]
    %s1580 = scalar_lea.vmem %s12, 1
    %v1581 = vld [vmem:[%s1580] sm:$0x1]
    %v1582 = vsel %vm167, %v1576, 0.0
    %1583 = vadd.xlane.f32.xlu0 %v1582
    %v1584 = vpop.xlane.xlu0 %1583
    %v1585 = vsel %vm167, %v1577, 0.0
    %1586 = vadd.xlane.f32.xlu0 %v1585
    %v1587 = vpop.xlane.xlu0 %1586
    %v1588 = vmul.f32 %v1584, %v180
    %v1589 = vmul.f32 %v1587, %v180
    %v1590 = vsub.f32 %v1576, %v1588
    %v1591 = vsub.f32 %v1577, %v1589
    %v1592 = vmul.f32 %v1590, %v1590
    %v1593 = vmul.f32 %v1591, %v1591
    %v1594 = vsel %vm167, %v1592, 0.0
    %1595 = vadd.xlane.f32.xlu0 %v1594
    %v1596 = vpop.xlane.xlu0 %1595
    %v1597 = vsel %vm167, %v1593, 0.0
    %1598 = vadd.xlane.f32.xlu0 %v1597
    %v1599 = vpop.xlane.xlu0 %1598
    %v1600 = vmul.f32 %v1596, %v180
    %v1601 = vmul.f32 %v1599, %v180
    %v1602 = vadd.f32 %v1600, 1e-12
    %v1603 = vadd.f32 %v1601, 1e-12
    %v1604 = vrsqrt.pop %v1602
    %v1605 = vmul.f32 %v1604, %v1602
    %v1606 = vmul.f32 %v1605, %v1604
    %v1607 = vmul.f32 0.5, %v1606
    %v1608 = vsub.f32 1.5, %v1607
    %v1609 = vmul.f32 %v1604, %v1608
    %vm1610 = vweird.f32 %v1602
    %vm1611 = vweird.f32 %v1604
    %vm1612 = vmor %vm1610, %vm1611
    %v1613 = vsel %vm1612, %v1604, %v1609
    %v1614 = vrsqrt.pop %v1603
    %v1615 = vmul.f32 %v1614, %v1603
    %v1616 = vmul.f32 %v1615, %v1614
    %v1617 = vmul.f32 0.5, %v1616
    %v1618 = vsub.f32 1.5, %v1617
    %v1619 = vmul.f32 %v1614, %v1618
    %vm1620 = vweird.f32 %v1603
    %vm1621 = vweird.f32 %v1614
    %vm1622 = vmor %vm1620, %vm1621
    %v1623 = vsel %vm1622, %v1614, %v1619
    %v1624 = vmul.f32 %v1590, %v1613
    %v1625 = vmul.f32 %v1591, %v1623
    %v1627 = vperm.slane %v1579, 0
    %v1629 = vmul.f32 %v1624, %v1627
    %v1630 = vmul.f32 %v1625, %v1627
    %v1632 = vperm.slane %v1581, 0
    %v1634 = vadd.f32 %v1629, %v1632
    %v1635 = vadd.f32 %v1630, %v1632
    %s1636 = scalar_lea.vmem %s13, 16
    %v1637 = vld [vmem:[%s1636] sm:$0xf]
    %v1638 = vld [vmem:[%s1636 + $0x4] sm:$0xf]
    %v1639 = vld [vmem:[%s1636 + $0x8] sm:$0xf]
    %v1640 = vld [vmem:[%s1636 + $0xc] sm:$0xf]
    %v1641 = vpack.c.bf16 %v1635, %v1634
    %s1642 = scalar_lea.vmem %s14, 1
    %v1643 = vld [vmem:[%s1642] sm:$0x1]
    %v1645 = vperm.slane %v1643, 0
    %v1651 = vunpack.c.l.b16 %v1637
    %v1652 = vunpack.c.l.b16 %v1638
    %v1653 = vunpack.c.l.b16 %v1639
    %v1654 = vunpack.c.l.b16 %v1640
    %v1655 = vpack.c.b16 %v1652, %v1651
    %v1656 = vpack.c.b16 %v1654, %v1653
    %v1660 = vsel %vm167, %v1641, 0
    %1662 = vmatpush.bf16.msra.mxu0 0
    %1663 = vmatpush.bf16.msra.mxu0 0
    %1664 = vmatpush.bf16.msra.mxu0 0
    %1665 = vmatpush.bf16.msra.mxu0 0
    %1666 = vmatpush.bf16.msra.mxu0 0
    %1667 = vmatpush.bf16.msra.mxu0 0
    %1668 = vmatpush.bf16.msra.mxu0 %v1656
    %1669 = vmatpush.bf16.msra.mxu0 %v1655
    %1670 = vmatmul.bf16.gmra.mxu0 %v1660
    %v1671 = vpop.f32.mrf.mxu0
    %v1672 = vadd.f32 %v1645, %v1671
    %v1673 = vpop.f32.mrf.mxu0
    %v1674 = vadd.f32 %v1645, %v1673
    %1675 = vdwg.mxu0
    %v1676 = vmul.f32 %v1672, %v1672
    %v1677 = vmul.f32 %v1674, %v1674
    %v1678 = vmul.f32 %v1672, %v1676
    %v1679 = vmul.f32 %v1674, %v1677
    %v1680 = vmul.f32 %v1678, 0.044715
    %v1681 = vmul.f32 %v1679, 0.044715
    %v1682 = vadd.f32 %v1672, %v1680
    %v1683 = vadd.f32 %v1674, %v1681
    %v1684 = vmul.f32 %v1682, 0.7978846
    %v1685 = vmul.f32 %v1683, 0.7978846
    %v1686 = vtanh.pop %v1684
    %v1687 = vtanh.pop %v1685
    %v1688 = vadd.f32 %v1686, 1.0
    %v1689 = vadd.f32 %v1687, 1.0
    %v1690 = vmul.f32 %v1688, 0.5
    %v1691 = vmul.f32 %v1689, 0.5
    %v1692 = vmul.f32 %v1672, %v1690
    %v1693 = vmul.f32 %v1674, %v1691
    %s1694 = scalar_lea.vmem %s15, 32
    %v1695 = vld [vmem:[%s1694] sm:$0xf]
    %v1696 = vld [vmem:[%s1694 + $0x4] sm:$0xf]
    %v1697 = vld [vmem:[%s1694 + $0x8] sm:$0xf]
    %v1698 = vld [vmem:[%s1694 + $0xc] sm:$0xf]
    %v1699 = vld [vmem:[%s1694 + $0x10] sm:$0xf]
    %v1700 = vld [vmem:[%s1694 + $0x14] sm:$0xf]
    %v1701 = vld [vmem:[%s1694 + $0x18] sm:$0xf]
    %v1702 = vld [vmem:[%s1694 + $0x1c] sm:$0xf]
    %v1703 = vpack.c.bf16 %v1693, %v1692
    %v1712 = vunpack.c.l.b16 %v1695
    %v1713 = vunpack.c.l.b16 %v1696
    %v1714 = vunpack.c.l.b16 %v1697
    %v1715 = vunpack.c.l.b16 %v1698
    %v1716 = vunpack.c.l.b16 %v1699
    %v1717 = vunpack.c.l.b16 %v1700
    %v1718 = vunpack.c.l.b16 %v1701
    %v1719 = vunpack.c.l.b16 %v1702
    %v1720 = vpack.c.b16 %v1713, %v1712
    %v1721 = vpack.c.b16 %v1715, %v1714
    %v1722 = vpack.c.b16 %v1717, %v1716
    %v1723 = vpack.c.b16 %v1719, %v1718
    %v1729 = vsel %vm939, %v1703, 0
    %1731 = vmatpush.bf16.msra.mxu0 0
    %1732 = vmatpush.bf16.msra.mxu0 0
    %1733 = vmatpush.bf16.msra.mxu0 0
    %1734 = vmatpush.bf16.msra.mxu0 0
    %1735 = vmatpush.bf16.msra.mxu0 %v1723
    %1736 = vmatpush.bf16.msra.mxu0 %v1722
    %1737 = vmatpush.bf16.msra.mxu0 %v1721
    %1738 = vmatpush.bf16.msra.mxu0 %v1720
    %1739 = vmatmul.bf16.gmra.mxu0 %v1729
    %v1740 = vpop.f32.mrf.mxu0
    %v1741 = vadd.f32 0.0, %v1740
    %v1742 = vpop.f32.mrf.mxu0
    %v1743 = vadd.f32 0.0, %v1742
    %1744 = vdwg.mxu0
    %v1745 = vadd.f32 %v1634, %v1741
    %v1746 = vadd.f32 %v1635, %v1743
    %s1747 = scalar_lea.vmem %s16, 1
    %v1748 = vld [vmem:[%s1747] sm:$0x1]
    %v1750 = vperm.slane %v1748, 0
    %v1752 = vadd.f32 %v1745, %v1750
    %v1753 = vadd.f32 %v1746, %v1750
    %s1754 = scalar_lea.vmem %s17, 1
    %v1755 = vld [vmem:[%s1754] sm:$0x1]
    %s1756 = scalar_lea.vmem %s18, 1
    %v1757 = vld [vmem:[%s1756] sm:$0x1]
    %v1758 = vsel %vm167, %v1752, 0.0
    %1759 = vadd.xlane.f32.xlu0 %v1758
    %v1760 = vpop.xlane.xlu0 %1759
    %v1761 = vsel %vm167, %v1753, 0.0
    %1762 = vadd.xlane.f32.xlu0 %v1761
    %v1763 = vpop.xlane.xlu0 %1762
    %v1764 = vmul.f32 %v1760, %v180
    %v1765 = vmul.f32 %v1763, %v180
    %v1766 = vsub.f32 %v1752, %v1764
    %v1767 = vsub.f32 %v1753, %v1765
    %v1768 = vmul.f32 %v1766, %v1766
    %v1769 = vmul.f32 %v1767, %v1767
    %v1770 = vsel %vm167, %v1768, 0.0
    %1771 = vadd.xlane.f32.xlu0 %v1770
    %v1772 = vpop.xlane.xlu0 %1771
    %v1773 = vsel %vm167, %v1769, 0.0
    %1774 = vadd.xlane.f32.xlu0 %v1773
    %v1775 = vpop.xlane.xlu0 %1774
    %v1776 = vmul.f32 %v1772, %v180
    %v1777 = vmul.f32 %v1775, %v180
    %v1778 = vadd.f32 %v1776, 1e-12
    %v1779 = vadd.f32 %v1777, 1e-12
    %v1780 = vrsqrt.pop %v1778
    %v1781 = vmul.f32 %v1780, %v1778
    %v1782 = vmul.f32 %v1781, %v1780
    %v1783 = vmul.f32 0.5, %v1782
    %v1784 = vsub.f32 1.5, %v1783
    %v1785 = vmul.f32 %v1780, %v1784
    %vm1786 = vweird.f32 %v1778
    %vm1787 = vweird.f32 %v1780
    %vm1788 = vmor %vm1786, %vm1787
    %v1789 = vsel %vm1788, %v1780, %v1785
    %v1790 = vrsqrt.pop %v1779
    %v1791 = vmul.f32 %v1790, %v1779
    %v1792 = vmul.f32 %v1791, %v1790
    %v1793 = vmul.f32 0.5, %v1792
    %v1794 = vsub.f32 1.5, %v1793
    %v1795 = vmul.f32 %v1790, %v1794
    %vm1796 = vweird.f32 %v1779
    %vm1797 = vweird.f32 %v1790
    %vm1798 = vmor %vm1796, %vm1797
    %v1799 = vsel %vm1798, %v1790, %v1795
    %v1800 = vmul.f32 %v1766, %v1789
    %v1801 = vmul.f32 %v1767, %v1799
    %v1803 = vperm.slane %v1755, 0
    %v1805 = vmul.f32 %v1800, %v1803
    %v1806 = vmul.f32 %v1801, %v1803
    %v1808 = vperm.slane %v1757, 0
    %v1810 = vadd.f32 %v1805, %v1808
    %v1811 = vadd.f32 %v1806, %v1808
    %v1812 = vld [vmem:[%s19] sm:$0xf]
    %v1813 = vld [vmem:[%s19 + $0x4] sm:$0xf]
    %v1814 = vld [vmem:[%s19 + $0x8] sm:$0xf]
    %v1815 = vld [vmem:[%s19 + $0xc] sm:$0xf]
    %v1816 = vpack.c.bf16 %v1811, %v1810
    %v1817 = vld [vmem:[%s20] sm:$0x1]
    %v1819 = vperm.slane %v1817, 0
    %v1825 = vunpack.c.l.b16 %v1812
    %v1826 = vunpack.c.l.b16 %v1813
    %v1827 = vunpack.c.l.b16 %v1814
    %v1828 = vunpack.c.l.b16 %v1815
    %v1829 = vpack.c.b16 %v1826, %v1825
    %v1830 = vpack.c.b16 %v1828, %v1827
    %v1834 = vsel %vm167, %v1816, 0
    %1836 = vmatpush.bf16.msra.mxu0 0
    %1837 = vmatpush.bf16.msra.mxu0 0
    %1838 = vmatpush.bf16.msra.mxu0 0
    %1839 = vmatpush.bf16.msra.mxu0 0
    %1840 = vmatpush.bf16.msra.mxu0 0
    %1841 = vmatpush.bf16.msra.mxu0 0
    %1842 = vmatpush.bf16.msra.mxu0 %v1830
    %1843 = vmatpush.bf16.msra.mxu0 %v1829
    %1844 = vmatmul.bf16.gmra.mxu0 %v1834
    %v1845 = vpop.f32.mrf.mxu0
    %v1846 = vadd.f32 %v1819, %v1845
    %v1847 = vpop.f32.mrf.mxu0
    %v1848 = vadd.f32 %v1819, %v1847
    %1849 = vdwg.mxu0
    %1850 = vst [vmem:[%s26] sm:$0xff] %v1846
    %1851 = vst [vmem:[%s26 + $0x8] sm:$0xff] %v1848
    %1852 = vset.pattern.permute.xlu0 2
    %1853 = vperm.xlu0 %1852, %v84
    %v1854 = vpop.permute.xlu0 %1853
    %1855 = vset.pattern.permute.xlu0 2
    %1856 = vperm.xlu0 %1855, %v85
    %v1857 = vpop.permute.xlu0 %1856
    %vm1858 = vcmp.eq.s32.totalorder %v89, %v1854
    %vm1859 = vcmp.eq.s32.totalorder %v89, %v1857
    %v1860 = vsel %vm1858, 1, 0
    %v1861 = vsel %vm1859, 1, 0
    %v1862 = vcvt.s32.f32 %v1860
    %v1863 = vcvt.s32.f32 %v1861
    %1864 = vset.pattern.permute.xlu0 3
    %1865 = vperm.xlu0 %1864, %v84
    %v1866 = vpop.permute.xlu0 %1865
    %1867 = vset.pattern.permute.xlu0 3
    %1868 = vperm.xlu0 %1867, %v85
    %v1869 = vpop.permute.xlu0 %1868
    %vm1870 = vcmp.eq.s32.totalorder %v89, %v1866
    %vm1871 = vcmp.eq.s32.totalorder %v89, %v1869
    %v1872 = vsel %vm1870, 1, 0
    %v1873 = vsel %vm1871, 1, 0
    %v1874 = vcvt.s32.f32 %v1872
    %v1875 = vcvt.s32.f32 %v1873
    %v1876 = vsub.f32 1.0, %v86
    %v1877 = vsub.f32 1.0, %v87
    %1878 = vrot.lane.b32.xlu0 %v86, 2
    %v1879 = vpop.permute.xlu0 %1878
    %1880 = vrot.lane.b32.xlu0 %v87, 2
    %v1881 = vpop.permute.xlu0 %1880
    %v1884 = vmul.f32 %v1876, %v1879
    %v1885 = vmul.f32 %v1877, %v1881
    %v1886 = vadd.f32 %v86, %v1884
    %v1887 = vadd.f32 %v87, %v1885
    %v1888 = vld [vmem:[%s23] sm:$0xff]
    %v1889 = vld [vmem:[%s23 + $0x8] sm:$0xff]
    %v1890 = vld [vmem:[%s23 + $0x10] sm:$0xff]
    %v1891 = vld [vmem:[%s23 + $0x18] sm:$0xff]
    %v1892 = vld [vmem:[%s23 + $0x20] sm:$0xff]
    %v1893 = vld [vmem:[%s23 + $0x28] sm:$0xff]
    %v1894 = vld [vmem:[%s23 + $0x30] sm:$0xff]
    %v1895 = vld [vmem:[%s23 + $0x38] sm:$0xff]
    %v1896 = vld [vmem:[%s23 + $0x40] sm:$0xff]
    %v1897 = vld [vmem:[%s23 + $0x48] sm:$0xff]
    %v1898 = vld [vmem:[%s23 + $0x50] sm:$0xff]
    %v1899 = vld [vmem:[%s23 + $0x58] sm:$0xff]
    %v1900 = vld [vmem:[%s23 + $0x60] sm:$0xff]
    %v1901 = vld [vmem:[%s23 + $0x68] sm:$0xff]
    %v1902 = vld [vmem:[%s23 + $0x70] sm:$0xff]
    %v1903 = vld [vmem:[%s23 + $0x78] sm:$0xff]
    %1904 = vmatpush.msra.mxu0 %v1903
    %1905 = vmatpush.msra.mxu0 %v1902
    %1906 = vmatpush.msra.mxu0 %v1901
    %1907 = vmatpush.msra.mxu0 %v1900
    %1908 = vmatpush.msra.mxu0 %v1899
    %1909 = vmatpush.msra.mxu0 %v1898
    %1910 = vmatpush.msra.mxu0 %v1897
    %1911 = vmatpush.msra.mxu0 %v1896
    %1912 = vmatpush.msra.mxu0 %v1895
    %1913 = vmatpush.msra.mxu0 %v1894
    %1914 = vmatpush.msra.mxu0 %v1893
    %1915 = vmatpush.msra.mxu0 %v1892
    %1916 = vmatpush.msra.mxu0 %v1891
    %1917 = vmatpush.msra.mxu0 %v1890
    %1918 = vmatpush.msra.mxu0 %v1889
    %1919 = vmatpush.msra.mxu0 %v1888
    %1920 = vmatmul.f32.gmra.mxu0 %v1874
    %v1921 = vpop.f32.mrf.mxu0
    %v1922 = vadd.f32 0.0, %v1921
    %1923 = vmatmul.f32.gmra.mxu0 %v1875
    %v1924 = vpop.f32.mrf.mxu0
    %v1925 = vadd.f32 0.0, %v1924
    %1926 = vdwg.mxu0
    %v1927 = vmul.f32 %v1862, %v1846
    %v1928 = vmul.f32 %v1863, %v1848
    %1930 = vset.pattern.permute.xlu0 6
    %1931 = vperm.xlu0 %1930, %v1886
    %v1932 = vpop.permute.xlu0 %1931
    %1935 = vset.pattern.permute.xlu0 6
    %1936 = vperm.xlu0 %1935, %v1887
    %v1937 = vpop.permute.xlu0 %1936
    %v1939 = vmul.f32 %v1927, %v1932
    %v1940 = vmul.f32 %v1928, %v1937
    %1941 = vadd.xlane.f32.xlu0 %v1939
    %v1942 = vpop.xlane.xlu0 %1941
    %1943 = vadd.xlane.f32.xlu0 %v1940
    %v1944 = vpop.xlane.xlu0 %1943
    %v1945 = vadd.f32 %v1942, %v1944
    %v1946 = vrot.slane %v1945, 4
    %v1947 = vadd.f32 %v1945, %v1946
    %v1948 = vrot.slane %v1947, 2
    %v1949 = vadd.f32 %v1947, %v1948
    %v1950 = vrot.slane %v1949, 1
    %v1951 = vadd.f32 %v1949, %v1950
    %v1952 = vmul.f32 %v1862, %v1922
    %v1953 = vmul.f32 %v1863, %v1925
    %1955 = vset.pattern.permute.xlu0 6
    %1956 = vperm.xlu0 %1955, %v1884
    %v1957 = vpop.permute.xlu0 %1956
    %1960 = vset.pattern.permute.xlu0 6
    %1961 = vperm.xlu0 %1960, %v1885
    %v1962 = vpop.permute.xlu0 %1961
    %v1964 = vmul.f32 %v1952, %v1957
    %v1965 = vmul.f32 %v1953, %v1962
    %1966 = vadd.xlane.f32.xlu0 %v1964
    %v1967 = vpop.xlane.xlu0 %1966
    %1968 = vadd.xlane.f32.xlu0 %v1965
    %v1969 = vpop.xlane.xlu0 %1968
    %v1970 = vadd.f32 %v1967, %v1969
    %v1971 = vrot.slane %v1970, 4
    %v1972 = vadd.f32 %v1970, %v1971
    %v1973 = vrot.slane %v1972, 2
    %v1974 = vadd.f32 %v1972, %v1973
    %v1975 = vrot.slane %v1974, 1
    %v1976 = vadd.f32 %v1974, %v1975
    %v1977 = vadd.f32 %v1951, %v1976
    %1978 = vset.pattern.permute.xlu0 6
    %1979 = vperm.xlu0 %1978, %v86
    %v1980 = vpop.permute.xlu0 %1979
    %1982 = vset.pattern.permute.xlu0 6
    %1983 = vperm.xlu0 %1982, %v87
    %v1984 = vpop.permute.xlu0 %1983
    %v1986 = vmul.f32 %v1862, %v1980
    %v1987 = vmul.f32 %v1863, %v1984
    %v1988 = vld [vmem:[%s21] sm:$0x1]
    %v1990 = vperm.slane %v1988, 0
    %v1992 = vmul.f32 %v1986, %v1990
    %v1993 = vmul.f32 %v1987, %v1990
    %1994 = vadd.xlane.f32.xlu0 %v1992
    %v1995 = vpop.xlane.xlu0 %1994
    %1996 = vadd.xlane.f32.xlu0 %v1993
    %v1997 = vpop.xlane.xlu0 %1996
    %v1998 = vadd.f32 %v1995, %v1997
    %v1999 = vrot.slane %v1998, 4
    %v2000 = vadd.f32 %v1998, %v1999
    %v2001 = vrot.slane %v2000, 2
    %v2002 = vadd.f32 %v2000, %v2001
    %v2003 = vrot.slane %v2002, 1
    %v2004 = vadd.f32 %v2002, %v2003
    %v2005 = vadd.f32 %v1977, %v2004
    %2006 = vset.pattern.permute.xlu0 5
    %2007 = vperm.xlu0 %2006, %v86
    %v2008 = vpop.permute.xlu0 %2007
    %2010 = vset.pattern.permute.xlu0 5
    %2011 = vperm.xlu0 %2010, %v87
    %v2012 = vpop.permute.xlu0 %2011
    %v2014 = vmul.f32 %v1862, %v2008
    %v2015 = vmul.f32 %v1863, %v2012
    %v2016 = vld [vmem:[%s22] sm:$0x1]
    %v2018 = vperm.slane %v2016, 0
    %v2020 = vmul.f32 %v2014, %v2018
    %v2021 = vmul.f32 %v2015, %v2018
    %2022 = vadd.xlane.f32.xlu0 %v2020
    %v2023 = vpop.xlane.xlu0 %2022
    %2024 = vadd.xlane.f32.xlu0 %v2021
    %v2025 = vpop.xlane.xlu0 %2024
    %v2026 = vadd.f32 %v2023, %v2025
    %v2027 = vrot.slane %v2026, 4
    %v2028 = vadd.f32 %v2026, %v2027
    %v2029 = vrot.slane %v2028, 2
    %v2030 = vadd.f32 %v2028, %v2029
    %v2031 = vrot.slane %v2030, 1
    %v2032 = vadd.f32 %v2030, %v2031
    %v2033 = vadd.f32 %v2005, %v2032
    %v2034 = vld [vmem:[%s24] sm:$0xff]
    %v2035 = vld [vmem:[%s24 + $0x8] sm:$0xff]
    %v2036 = vld [vmem:[%s24 + $0x10] sm:$0xff]
    %v2037 = vld [vmem:[%s24 + $0x18] sm:$0xff]
    %v2038 = vld [vmem:[%s24 + $0x20] sm:$0xff]
    %v2039 = vld [vmem:[%s24 + $0x28] sm:$0xff]
    %v2040 = vld [vmem:[%s24 + $0x30] sm:$0xff]
    %v2041 = vld [vmem:[%s24 + $0x38] sm:$0xff]
    %v2042 = vld [vmem:[%s24 + $0x40] sm:$0xff]
    %v2043 = vld [vmem:[%s24 + $0x48] sm:$0xff]
    %v2044 = vld [vmem:[%s24 + $0x50] sm:$0xff]
    %v2045 = vld [vmem:[%s24 + $0x58] sm:$0xff]
    %v2046 = vld [vmem:[%s24 + $0x60] sm:$0xff]
    %v2047 = vld [vmem:[%s24 + $0x68] sm:$0xff]
    %v2048 = vld [vmem:[%s24 + $0x70] sm:$0xff]
    %v2049 = vld [vmem:[%s24 + $0x78] sm:$0xff]
    %v2052 = vrot.slane %v1848, 7
    %vm2053 = vcmask 1041409
    %v2054 = vsel %vm2053, %v2052, %v1846
    %v2056 = vadd.f32 %v1990, %v2054
    %vm2057 = vcmask 1041408
    %v2058 = vsel %vm2057, %v2056, -inf
    %2059 = vmax.xlane.f32.xlu0 %v2058
    %v2060 = vpop.xlane.xlu0 %2059
    %v2061 = vsub.f32 %v2056, %v2060
    %v2062 = vmul.f32 %v2061, 1.442695
    %v2063 = vpow.pop %v2062
    %2064 = vmatpush.msra.mxu0 %v2049
    %2065 = vmatpush.msra.mxu0 %v2048
    %2066 = vmatpush.msra.mxu0 %v2047
    %2067 = vmatpush.msra.mxu0 %v2046
    %2068 = vmatpush.msra.mxu0 %v2045
    %2069 = vmatpush.msra.mxu0 %v2044
    %2070 = vmatpush.msra.mxu0 %v2043
    %2071 = vmatpush.msra.mxu0 %v2042
    %2072 = vmatpush.msra.mxu0 %v2041
    %2073 = vmatpush.msra.mxu0 %v2040
    %2074 = vmatpush.msra.mxu0 %v2039
    %2075 = vmatpush.msra.mxu0 %v2038
    %2076 = vmatpush.msra.mxu0 %v2037
    %2077 = vmatpush.msra.mxu0 %v2036
    %2078 = vmatpush.msra.mxu0 %v2035
    %2079 = vmatpush.msra.mxu0 %v2034
    %2080 = vmatmul.f32.gmra.mxu0 %v2063
    %v2081 = vpop.f32.mrf.mxu0
    %v2082 = vadd.f32 0.0, %v2081
    %2083 = vdwg.mxu0
    %v2084 = vmax.f32 %v2082, 1e-30
    %v2085 = vlog2.pop %v2084
    %v2086 = vmul.f32 %v2085, 0.6931472
    %v2087 = vadd.f32 %v2060, %v2086
    %v2088 = vrot.slane %v1846, 1
    %v2089 = vsel %vm2053, %v1848, %v2088
    %v2091 = vadd.f32 %v2087, %v2089
    %vm2092 = vcmp.gt.f32.partialorder %v229, 0.5
    %v2093 = vsel %vm2092, 1, 0
    %2094 = vset.pattern.permute.xlu0 1
    %2095 = vperm.xlu0 %2094, %v2093
    %v2096 = vpop.permute.xlu0 %2095
    %vm2097 = vcmp.eq.s32.totalorder %v2096, 1
    %v2098 = vsel %vm2097, %v2091, %v2056
    %v2099 = vsel %vm2057, %v2098, -inf
    %2100 = vmax.xlane.f32.xlu0 %v2099
    %v2101 = vpop.xlane.xlu0 %2100
    %v2102 = vsub.f32 %v2098, %v2101
    %v2103 = vmul.f32 %v2102, 1.442695
    %v2104 = vpow.pop %v2103
    %2105 = vmatpush.msra.mxu0 %v2049
    %2106 = vmatpush.msra.mxu0 %v2048
    %2107 = vmatpush.msra.mxu0 %v2047
    %2108 = vmatpush.msra.mxu0 %v2046
    %2109 = vmatpush.msra.mxu0 %v2045
    %2110 = vmatpush.msra.mxu0 %v2044
    %2111 = vmatpush.msra.mxu0 %v2043
    %2112 = vmatpush.msra.mxu0 %v2042
    %2113 = vmatpush.msra.mxu0 %v2041
    %2114 = vmatpush.msra.mxu0 %v2040
    %2115 = vmatpush.msra.mxu0 %v2039
    %2116 = vmatpush.msra.mxu0 %v2038
    %2117 = vmatpush.msra.mxu0 %v2037
    %2118 = vmatpush.msra.mxu0 %v2036
    %2119 = vmatpush.msra.mxu0 %v2035
    %2120 = vmatpush.msra.mxu0 %v2034
    %2121 = vmatmul.f32.gmra.mxu0 %v2104
    %v2122 = vpop.f32.mrf.mxu0
    %v2123 = vadd.f32 0.0, %v2122
    %2124 = vdwg.mxu0
    %v2125 = vmax.f32 %v2123, 1e-30
    %v2126 = vlog2.pop %v2125
    %v2127 = vmul.f32 %v2126, 0.6931472
    %v2128 = vadd.f32 %v2101, %v2127
    %v2129 = vrot.slane %v1846, 2
    %v2130 = vrot.slane %v1848, 1
    %v2131 = vsel %vm2053, %v2130, %v2129
    %v2133 = vadd.f32 %v2128, %v2131
    %2134 = vset.pattern.permute.xlu0 2
    %2135 = vperm.xlu0 %2134, %v2093
    %v2136 = vpop.permute.xlu0 %2135
    %vm2137 = vcmp.eq.s32.totalorder %v2136, 1
    %v2138 = vsel %vm2137, %v2133, %v2098
    %v2139 = vsel %vm2057, %v2138, -inf
    %2140 = vmax.xlane.f32.xlu0 %v2139
    %v2141 = vpop.xlane.xlu0 %2140
    %v2142 = vsub.f32 %v2138, %v2141
    %v2143 = vmul.f32 %v2142, 1.442695
    %v2144 = vpow.pop %v2143
    %2145 = vmatpush.msra.mxu0 %v2049
    %2146 = vmatpush.msra.mxu0 %v2048
    %2147 = vmatpush.msra.mxu0 %v2047
    %2148 = vmatpush.msra.mxu0 %v2046
    %2149 = vmatpush.msra.mxu0 %v2045
    %2150 = vmatpush.msra.mxu0 %v2044
    %2151 = vmatpush.msra.mxu0 %v2043
    %2152 = vmatpush.msra.mxu0 %v2042
    %2153 = vmatpush.msra.mxu0 %v2041
    %2154 = vmatpush.msra.mxu0 %v2040
    %2155 = vmatpush.msra.mxu0 %v2039
    %2156 = vmatpush.msra.mxu0 %v2038
    %2157 = vmatpush.msra.mxu0 %v2037
    %2158 = vmatpush.msra.mxu0 %v2036
    %2159 = vmatpush.msra.mxu0 %v2035
    %2160 = vmatpush.msra.mxu0 %v2034
    %2161 = vmatmul.f32.gmra.mxu0 %v2144
    %v2162 = vpop.f32.mrf.mxu0
    %v2163 = vadd.f32 0.0, %v2162
    %2164 = vdwg.mxu0
    %v2165 = vmax.f32 %v2163, 1e-30
    %v2166 = vlog2.pop %v2165
    %v2167 = vmul.f32 %v2166, 0.6931472
    %v2168 = vadd.f32 %v2141, %v2167
    %v2169 = vrot.slane %v1846, 3
    %v2170 = vrot.slane %v1848, 2
    %v2171 = vsel %vm2053, %v2170, %v2169
    %v2173 = vadd.f32 %v2168, %v2171
    %2174 = vset.pattern.permute.xlu0 3
    %2175 = vperm.xlu0 %2174, %v2093
    %v2176 = vpop.permute.xlu0 %2175
    %vm2177 = vcmp.eq.s32.totalorder %v2176, 1
    %v2178 = vsel %vm2177, %v2173, %v2138
    %v2179 = vsel %vm2057, %v2178, -inf
    %2180 = vmax.xlane.f32.xlu0 %v2179
    %v2181 = vpop.xlane.xlu0 %2180
    %v2182 = vsub.f32 %v2178, %v2181
    %v2183 = vmul.f32 %v2182, 1.442695
    %v2184 = vpow.pop %v2183
    %2185 = vmatpush.msra.mxu0 %v2049
    %2186 = vmatpush.msra.mxu0 %v2048
    %2187 = vmatpush.msra.mxu0 %v2047
    %2188 = vmatpush.msra.mxu0 %v2046
    %2189 = vmatpush.msra.mxu0 %v2045
    %2190 = vmatpush.msra.mxu0 %v2044
    %2191 = vmatpush.msra.mxu0 %v2043
    %2192 = vmatpush.msra.mxu0 %v2042
    %2193 = vmatpush.msra.mxu0 %v2041
    %2194 = vmatpush.msra.mxu0 %v2040
    %2195 = vmatpush.msra.mxu0 %v2039
    %2196 = vmatpush.msra.mxu0 %v2038
    %2197 = vmatpush.msra.mxu0 %v2037
    %2198 = vmatpush.msra.mxu0 %v2036
    %2199 = vmatpush.msra.mxu0 %v2035
    %2200 = vmatpush.msra.mxu0 %v2034
    %2201 = vmatmul.f32.gmra.mxu0 %v2184
    %v2202 = vpop.f32.mrf.mxu0
    %v2203 = vadd.f32 0.0, %v2202
    %2204 = vdwg.mxu0
    %v2205 = vmax.f32 %v2203, 1e-30
    %v2206 = vlog2.pop %v2205
    %v2207 = vmul.f32 %v2206, 0.6931472
    %v2208 = vadd.f32 %v2181, %v2207
    %v2209 = vrot.slane %v1846, 4
    %v2210 = vrot.slane %v1848, 3
    %v2211 = vsel %vm2053, %v2210, %v2209
    %v2213 = vadd.f32 %v2208, %v2211
    %2214 = vset.pattern.permute.xlu0 4
    %2215 = vperm.xlu0 %2214, %v2093
    %v2216 = vpop.permute.xlu0 %2215
    %vm2217 = vcmp.eq.s32.totalorder %v2216, 1
    %v2218 = vsel %vm2217, %v2213, %v2178
    %v2219 = vsel %vm2057, %v2218, -inf
    %2220 = vmax.xlane.f32.xlu0 %v2219
    %v2221 = vpop.xlane.xlu0 %2220
    %v2222 = vsub.f32 %v2218, %v2221
    %v2223 = vmul.f32 %v2222, 1.442695
    %v2224 = vpow.pop %v2223
    %2225 = vmatpush.msra.mxu0 %v2049
    %2226 = vmatpush.msra.mxu0 %v2048
    %2227 = vmatpush.msra.mxu0 %v2047
    %2228 = vmatpush.msra.mxu0 %v2046
    %2229 = vmatpush.msra.mxu0 %v2045
    %2230 = vmatpush.msra.mxu0 %v2044
    %2231 = vmatpush.msra.mxu0 %v2043
    %2232 = vmatpush.msra.mxu0 %v2042
    %2233 = vmatpush.msra.mxu0 %v2041
    %2234 = vmatpush.msra.mxu0 %v2040
    %2235 = vmatpush.msra.mxu0 %v2039
    %2236 = vmatpush.msra.mxu0 %v2038
    %2237 = vmatpush.msra.mxu0 %v2037
    %2238 = vmatpush.msra.mxu0 %v2036
    %2239 = vmatpush.msra.mxu0 %v2035
    %2240 = vmatpush.msra.mxu0 %v2034
    %2241 = vmatmul.f32.gmra.mxu0 %v2224
    %v2242 = vpop.f32.mrf.mxu0
    %v2243 = vadd.f32 0.0, %v2242
    %2244 = vdwg.mxu0
    %v2245 = vmax.f32 %v2243, 1e-30
    %v2246 = vlog2.pop %v2245
    %v2247 = vmul.f32 %v2246, 0.6931472
    %v2248 = vadd.f32 %v2221, %v2247
    %v2249 = vrot.slane %v1846, 5
    %v2250 = vrot.slane %v1848, 4
    %v2251 = vsel %vm2053, %v2250, %v2249
    %v2253 = vadd.f32 %v2248, %v2251
    %2254 = vset.pattern.permute.xlu0 5
    %2255 = vperm.xlu0 %2254, %v2093
    %v2256 = vpop.permute.xlu0 %2255
    %vm2257 = vcmp.eq.s32.totalorder %v2256, 1
    %v2258 = vsel %vm2257, %v2253, %v2218
    %v2259 = vsel %vm2057, %v2258, -inf
    %2260 = vmax.xlane.f32.xlu0 %v2259
    %v2261 = vpop.xlane.xlu0 %2260
    %v2262 = vsub.f32 %v2258, %v2261
    %v2263 = vmul.f32 %v2262, 1.442695
    %v2264 = vpow.pop %v2263
    %2265 = vmatpush.msra.mxu0 %v2049
    %2266 = vmatpush.msra.mxu0 %v2048
    %2267 = vmatpush.msra.mxu0 %v2047
    %2268 = vmatpush.msra.mxu0 %v2046
    %2269 = vmatpush.msra.mxu0 %v2045
    %2270 = vmatpush.msra.mxu0 %v2044
    %2271 = vmatpush.msra.mxu0 %v2043
    %2272 = vmatpush.msra.mxu0 %v2042
    %2273 = vmatpush.msra.mxu0 %v2041
    %2274 = vmatpush.msra.mxu0 %v2040
    %2275 = vmatpush.msra.mxu0 %v2039
    %2276 = vmatpush.msra.mxu0 %v2038
    %2277 = vmatpush.msra.mxu0 %v2037
    %2278 = vmatpush.msra.mxu0 %v2036
    %2279 = vmatpush.msra.mxu0 %v2035
    %2280 = vmatpush.msra.mxu0 %v2034
    %2281 = vmatmul.f32.gmra.mxu0 %v2264
    %v2282 = vpop.f32.mrf.mxu0
    %v2283 = vadd.f32 0.0, %v2282
    %2284 = vdwg.mxu0
    %v2285 = vmax.f32 %v2283, 1e-30
    %v2286 = vlog2.pop %v2285
    %v2287 = vmul.f32 %v2286, 0.6931472
    %v2288 = vadd.f32 %v2261, %v2287
    %v2289 = vrot.slane %v1846, 6
    %v2290 = vrot.slane %v1848, 5
    %v2291 = vsel %vm2053, %v2290, %v2289
    %v2293 = vadd.f32 %v2288, %v2291
    %2294 = vset.pattern.permute.xlu0 6
    %2295 = vperm.xlu0 %2294, %v2093
    %v2296 = vpop.permute.xlu0 %2295
    %vm2297 = vcmp.eq.s32.totalorder %v2296, 1
    %v2298 = vsel %vm2297, %v2293, %v2258
    %v2299 = vsel %vm2057, %v2298, -inf
    %2300 = vmax.xlane.f32.xlu0 %v2299
    %v2301 = vpop.xlane.xlu0 %2300
    %v2302 = vsub.f32 %v2298, %v2301
    %v2303 = vmul.f32 %v2302, 1.442695
    %v2304 = vpow.pop %v2303
    %2305 = vmatpush.msra.mxu0 %v2049
    %2306 = vmatpush.msra.mxu0 %v2048
    %2307 = vmatpush.msra.mxu0 %v2047
    %2308 = vmatpush.msra.mxu0 %v2046
    %2309 = vmatpush.msra.mxu0 %v2045
    %2310 = vmatpush.msra.mxu0 %v2044
    %2311 = vmatpush.msra.mxu0 %v2043
    %2312 = vmatpush.msra.mxu0 %v2042
    %2313 = vmatpush.msra.mxu0 %v2041
    %2314 = vmatpush.msra.mxu0 %v2040
    %2315 = vmatpush.msra.mxu0 %v2039
    %2316 = vmatpush.msra.mxu0 %v2038
    %2317 = vmatpush.msra.mxu0 %v2037
    %2318 = vmatpush.msra.mxu0 %v2036
    %2319 = vmatpush.msra.mxu0 %v2035
    %2320 = vmatpush.msra.mxu0 %v2034
    %2321 = vmatmul.f32.gmra.mxu0 %v2304
    %v2322 = vpop.f32.mrf.mxu0
    %v2323 = vadd.f32 0.0, %v2322
    %2324 = vdwg.mxu0
    %v2325 = vmax.f32 %v2323, 1e-30
    %v2326 = vlog2.pop %v2325
    %v2327 = vmul.f32 %v2326, 0.6931472
    %v2328 = vadd.f32 %v2301, %v2327
    %v2329 = vrot.slane %v1846, 7
    %v2330 = vrot.slane %v1848, 6
    %v2331 = vsel %vm2053, %v2330, %v2329
    %v2333 = vadd.f32 %v2328, %v2331
    %2334 = vset.pattern.permute.xlu0 7
    %2335 = vperm.xlu0 %2334, %v2093
    %v2336 = vpop.permute.xlu0 %2335
    %vm2337 = vcmp.eq.s32.totalorder %v2336, 1
    %v2338 = vsel %vm2337, %v2333, %v2298
    %v2339 = vadd.f32 %v2338, %v2018
    %v2340 = vsel %vm2057, %v2339, -inf
    %2341 = vmax.xlane.f32.xlu0 %v2340
    %v2342 = vpop.xlane.xlu0 %2341
    %v2343 = vsub.f32 %v2339, %v2342
    %v2344 = vmul.f32 %v2343, 1.442695
    %v2345 = vpow.pop %v2344
    %v2346 = vsel %vm2057, %v2345, 0.0
    %2347 = vadd.xlane.f32.xlu0 %v2346
    %v2348 = vpop.xlane.xlu0 %2347
    %v2349 = vlog2.pop %v2348
    %v2350 = vmul.f32 %v2349, 0.6931472
    %v2351 = vadd.f32 %v2342, %v2350
    %v2352 = vsel %vm2057, %v2351, 0.0
    %v2353 = vrot.slane %v2352, 4
    %v2354 = vadd.f32 %v2352, %v2353
    %v2355 = vrot.slane %v2354, 2
    %v2356 = vadd.f32 %v2354, %v2355
    %v2357 = vrot.slane %v2356, 1
    %v2358 = vadd.f32 %v2356, %v2357
    %v2359 = vsub.f32 %v2358, %v2033
    %vm2360 = vcmask 0
    %2361 = vst.msk [vmem:[#allocation2] sm:$0x1] %vm2360, %v2359
    // Predicated region
    $region102: #{forward.1} parent=1 // pred_check
      _
    $region103: #{forward.1} parent=1 // pred_check_branch
      %2363 = sbr.rel (0) target = $region105
    $region104: #{forward.1} parent=1 // pred_region
      %2365 = vsyncadd [#allocation3], 0
      %s2367 = sshll.u32 [#allocation2], 4
      %s2368 = int_to_ptr.vmem [resolvable:$true] %s2367
      %s2369 = sshll.u32 %s25, 4
      %s2370 = int_to_ptr.hbm [resolvable:$true] %s2369
      %2372 = dma.vmem_to_hbm [thread:$0]  %s2368, 16, %s2370, [#allocation3]
    $region105: #{forward.1} parent=1 // pred_fallthru
      _
    // Predicated region
    $region106: #{forward.1} parent=1 // pred_check
      _
    $region107: #{forward.1} parent=1 // pred_check_branch
      %2374 = sbr.rel (0) target = $region109
    $region108: #{forward.1} parent=1 // pred_region
      _
    $region109: #{forward.1} parent=1 // pred_fallthru
      _
    // Predicated region
    $region110: #{forward.1} parent=1 // pred_check
      _
    $region111: #{forward.1} parent=1 // pred_check_branch
      %2376 = sbr.rel (0) target = $region113
    $region112: #{forward.1} parent=1 // pred_region
      %2378 = dma.done [#allocation3], 16
    $region113: #{forward.1} parent=1 // pred_fallthru
      _
    // Predicated region
    $region114: #{forward.1} parent=1 // pred_check
      _
    $region115: #{forward.1} parent=1 // pred_check_branch
      %2380 = sbr.rel (0) target = $region117
    $region116: #{forward.1} parent=1 // pred_region
      _
    $region117: #{forward.1} parent=1 // pred_fallthru
      _
    %2381 = vsyncpa [#allocation3], 1

</llo_original>
